<compile_context>
chip_gen: v7x
topology: tpu7x:2x2x1
jax: 0.10.0
libtpu: 0.0.40
codegen_flags: <defaults>
</compile_context>

<pallas_src>
import functools

import jax
import jax.numpy as jnp
from jax import lax
from jax.experimental import pallas as pl
from jax.experimental.pallas import tpu as pltpu


def _vmem_limit_bytes():
    # Generation-aware VMEM budget: ~25% headroom for Mosaic internal scratch.
    # v7x: 64 MiB/TC -> 48 MiB; v5e/v6e: 128 MiB -> 96 MiB.
    cap = 128 * 1024 * 1024
    try:
        c = getattr(pltpu.get_tpu_info(), "vmem_capacity_bytes", None)
        if c:
            cap = int(c)
    except Exception:
        pass
    return int(min(cap * 3 // 4, 100 * 1024 * 1024))


def _cparams(sem):
    return pltpu.CompilerParams(dimension_semantics=sem,
                                vmem_limit_bytes=_vmem_limit_bytes())


def _full_spec(shp):
    nd = len(shp)
    return pl.BlockSpec(tuple(shp), lambda *_: (0,) * nd)


def _batch_spec(shp):
    nd = len(shp)
    return pl.BlockSpec((1,) + tuple(shp), lambda b, *_: (b,) + (0,) * nd)


def _pick_tile(n, max_tile):
    """Largest divisor of n that is a multiple of 128 and <= max_tile."""
    best = None
    t = 128
    while t <= min(n, max_tile):
        if n % t == 0:
            best = t
        t += 128
    # TODO(synk): for awkward N (not a multiple of 128) pad the lane axis with
    # a masked tail instead of falling back to a single full-N tile.
    return best if best is not None else n


# tap order t = (kh*3 + kw), i.e. (dh, dw) = (kh-1, kw-1)
_TAPS = tuple((dh, dw) for dh in (-1, 0, 1) for dw in (-1, 0, 1))


# ---------------------------------------------------------------------------
# Kernel A1: fused conv projections (1x1 + in-kernel 3x3) + low-rank factors
# ---------------------------------------------------------------------------
def _proj_kernel(x_ref, mask_ref,
                 w1_ref, b1_ref, wv1_ref, bv1_ref,
                 w2_ref, b2_ref, wv2_ref, bv2_ref,
                 q1_ref, t1_ref, q2_ref, t2_ref,
                 v1_ref, v2_ref, vs1_ref, vs2_ref, *, cr, c, width, n):
    f32 = jnp.float32
    x = x_ref[0]                                          # (C, N)

    # ---- branch 1: query/key/key1/key2 1x1 convs fused + value conv ---------
    p1 = jnp.dot(w1_ref[...], x, preferred_element_type=f32) + b1_ref[...]
    v1 = jnp.dot(wv1_ref[...], x, preferred_element_type=f32) + bv1_ref[...]

    # ---- branch 2: 3x3/pad=1 convs as 9 shifted + edge-masked matmuls -------
    # (no im2col materialization; rolls ride the XLU, masks the VPU)
    p2 = jnp.zeros((4 * cr, n), f32)
    v2 = jnp.zeros((c, n), f32)
    for t, (dh, dw) in enumerate(_TAPS):
        delta = dh * width + dw
        if delta == 0:
            xs = x                                        # center tap: no mask
        else:
            xs = pltpu.roll(x, shift=(-delta) % n, axis=1) * mask_ref[t]
        p2 = p2 + jnp.dot(w2_ref[t], xs, preferred_element_type=f32)
        v2 = v2 + jnp.dot(wv2_ref[t], xs, preferred_element_type=f32)
    p2 = p2 + b2_ref[...]
    v2 = v2 + bv2_ref[...]

    v1_ref[0] = v1
    v2_ref[0] = v2
    # hoisted V row-sums (used every tile by kernel B's folded BN1d shift)
    vs1_ref[0] = jnp.sum(v1, axis=1, keepdims=True)
    vs2_ref[0] = jnp.sum(v2, axis=1, keepdims=True)

    lanes = (((1,), (1,)), ((), ()))                      # contract lane axes

    def factors(p, q_ref, t_ref):
        q, k, k1, k2 = (p[0 * cr:1 * cr], p[1 * cr:2 * cr],
                        p[2 * cr:3 * cr], p[3 * cr:4 * cr])
        # E = (Q^T K)(K1^T K2) == Q^T ((K K1^T) K2): tiny (Cr,Cr) product first,
        # then T = (K K1^T) K2 in (Cr,N).  Only Q and T ever leave the kernel.
        m = lax.dot_general(k, k1, lanes, preferred_element_type=f32)   # (Cr,Cr)
        q_ref[0] = q
        t_ref[0] = jnp.dot(m, k2, preferred_element_type=f32)           # (Cr,N)

    factors(p1, q1_ref, t1_ref)
    factors(p2, q2_ref, t2_ref)


# ---------------------------------------------------------------------------
# Kernel A2: E^T tile on the fly -> lane-dense BN1d per-row sum / sumsq only
# ---------------------------------------------------------------------------
def _energy_stats_kernel(q1_ref, t1_ref, q2_ref, t2_ref,
                         s1_ref, ss1_ref, s2_ref, ss2_ref):
    chan = (((0,), (0,)), ((), ()))                       # contract the Cr axes

    def one(q_ref, t_ref, s_ref, ss_ref):
        # E^T tile: et[m, n] = sum_cr T[cr, m] * Q[cr, n]   -> (N, TQ)
        et = lax.dot_general(t_ref[0], q_ref[0], chan,
                             preferred_element_type=jnp.float32)
        et = jnp.floor(et / 120.0)        # torch // on float tensors (floor)
        # per-row(n) partials, naturally lane-dense (1, TQ)
        s_ref[0] = jnp.sum(et, axis=0, keepdims=True)
        ss_ref[0] = jnp.sum(et * et, axis=0, keepdims=True)

    one(q1_ref, t1_ref, s1_ref, ss1_ref)
    one(q2_ref, t2_ref, s2_ref, ss2_ref)


# ---------------------------------------------------------------------------
# Kernel B: recompute E tile, BN1d folded through V @ E^T, mul, leaky_relu,
#           lane-dense per-tile BN2d partials (fully parallel grid)
# ---------------------------------------------------------------------------
def _attn_apply_kernel(q1_ref, t1_ref, q2_ref, t2_ref, v1_ref, v2_ref,
                       vs1_ref, vs2_ref, sc1_ref, sh1_ref, sc2_ref, sh2_ref,
                       y_ref, cs_ref, css_ref, *, gamma):
    f32 = jnp.float32
    chan = (((0,), (0,)), ((), ()))
    lanes = (((1,), (1,)), ((), ()))

    def branch(q_ref, t_ref, v_ref, vs_ref, sc_ref, sh_ref):
        # recompute the E row-tile from the low-rank factors (never in HBM)
        e = lax.dot_general(q_ref[0], t_ref[0], chan,
                            preferred_element_type=f32)          # (TN, N)
        e = jnp.floor(e / 120.0)
        r = lax.dot_general(v_ref[0], e, lanes,
                            preferred_element_type=f32)          # (C, TN)
        # BN1d affine folded through the matmul: V @ (sc*E + sh)^T
        return gamma * (sc_ref[...] * r + vs_ref[0] * sh_ref[...])

    o1 = branch(q1_ref, t1_ref, v1_ref, vs1_ref, sc1_ref, sh1_ref)
    o2 = branch(q2_ref, t2_ref, v2_ref, vs2_ref, sc2_ref, sh2_ref)
    y = o2 * o1                                    # torch.mul(out2, out)
    y = jnp.where(y >= 0, y, 0.01 * y)             # F.leaky_relu, slope 0.01
    y_ref[0] = y

    # lane-dense per-(tile, channel) BN2d partials via 1-row matmuls, so the
    # nt grid axis stays "parallel" (no cross-iteration accumulator).
    ones_row = jnp.ones((1, y.shape[1]), f32)
    cs_ref[0, 0] = lax.dot_general(ones_row, y, lanes,
                                   preferred_element_type=f32)       # (1, C)
    css_ref[0, 0] = lax.dot_general(ones_row, y * y, lanes,
                                    preferred_element_type=f32)      # (1, C)


# ---------------------------------------------------------------------------
# Kernel C: final BatchNorm2d affine (per-channel scale/shift), in place
# ---------------------------------------------------------------------------
def _bn2d_kernel(y_ref, sc_ref, sh_ref, o_ref):
    o_ref[0] = y_ref[0] * sc_ref[...] + sh_ref[...]


# ---------------------------------------------------------------------------
# Wrapper
# ---------------------------------------------------------------------------
def spat_attn(x, params):
    B, C, H, W = x.shape
    N = H * W
    Cr = params["w1"].shape[0] // 4
    eps = 1e-5

    TQ = _pick_tile(N, 512)       # attention row-tile (512-wide per v6e data)
    TN = TQ
    TC = _pick_tile(N, 2048)      # pure-bandwidth final affine: biggest tile
    NQ, NT, NC = N // TQ, N // TN, N // TC

    x_flat = x.reshape(B, C, N).astype(jnp.float32)

    # Edge-validity masks for the 9 taps of the 3x3 / padding=1 convolutions.
    rows = jnp.arange(H)[:, None]
    cols = jnp.arange(W)[None, :]
    mask = jnp.stack(
        [((rows + dh >= 0) & (rows + dh < H) &
          (cols + dw >= 0) & (cols + dw < W)).reshape(1, N)
         for dh, dw in _TAPS], axis=0).astype(jnp.float32)          # (9, 1, N)

    # ---- pass A1: projections + low-rank energy factors ----------------------
    # TODO(synk): for very large C*N on v7x, add a lane-tile grid axis to A1
    # (with a (W+1)-lane halo for the 3x3 taps) to bound VMEM under 64 MiB.
    q1, t1, q2, t2, v1, v2, vs1, vs2 = pl.pallas_call(
        functools.partial(_proj_kernel, cr=Cr, c=C, width=W, n=N),
        grid=(B,),
        in_specs=[
            _batch_spec((C, N)), _full_spec((9, 1, N)),
            _full_spec((4 * Cr, C)), _full_spec((4 * Cr, 1)),
            _full_spec((C, C)), _full_spec((C, 1)),
            _full_spec((9, 4 * Cr, C)), _full_spec((4 * Cr, 1)),
            _full_spec((9, C, C)), _full_spec((C, 1)),
        ],
        out_specs=[_batch_spec((Cr, N))] * 4 + [_batch_spec((C, N))] * 2
                  + [_batch_spec((C, 1))] * 2,
        out_shape=(
            jax.ShapeDtypeStruct((B, Cr, N), jnp.float32),
            jax.ShapeDtypeStruct((B, Cr, N), jnp.float32),
            jax.ShapeDtypeStruct((B, Cr, N), jnp.float32),
            jax.ShapeDtypeStruct((B, Cr, N), jnp.float32),
            jax.ShapeDtypeStruct((B, C, N), jnp.float32),
            jax.ShapeDtypeStruct((B, C, N), jnp.float32),
            jax.ShapeDtypeStruct((B, C, 1), jnp.float32),
            jax.ShapeDtypeStruct((B, C, 1), jnp.float32),
        ),
        compiler_params=_cparams(("parallel",)),
    )(x_flat, mask,
      params["w1"], params["b1"], params["wv1"], params["bv1"],
      params["w2"], params["b2"], params["wv2"], params["bv2"])

    # ---- pass A2: BN1d batch-stat partials (the (B,N,N) E never hits HBM) ----
    qtile = pl.BlockSpec((1, Cr, TQ), lambda b, i: (b, 0, i))
    stile = pl.BlockSpec((1, 1, TQ), lambda b, i: (b, 0, i))
    s1, ss1, s2, ss2 = pl.pallas_call(
        _energy_stats_kernel,
        grid=(B, NQ),
        in_specs=[qtile, _batch_spec((Cr, N)), qtile, _batch_spec((Cr, N))],
        out_specs=[stile] * 4,
        out_shape=tuple(jax.ShapeDtypeStruct((B, 1, N), jnp.float32)
                        for _ in range(4)),
        compiler_params=_cparams(("parallel", "parallel")),
    )(q1, t1, q2, t2)

    # ---- BatchNorm1d (training-mode batch stats) fold -------------------------
    def bn1d_fold(s, ss, w, bias):
        cnt = float(B * N)
        mean = jnp.sum(s, axis=(0, 1)) / cnt
        var = jnp.maximum(jnp.sum(ss, axis=(0, 1)) / cnt - mean * mean, 0.0)
        inv = w / jnp.sqrt(var + eps)
        return inv[None, :], (bias - mean * inv)[None, :]           # (1, N) each

    sc1, sh1 = bn1d_fold(s1, ss1, params["bn1_w"], params["bn1_b"])
    sc2, sh2 = bn1d_fold(s2, ss2, params["bn1_w"], params["bn1_b"])

    # ---- pass B: recompute E per tile + folded BN1d + mul + leaky_relu -------
    qspec = pl.BlockSpec((1, Cr, TN), lambda b, i: (b, 0, i))
    ntile = pl.BlockSpec((1, TN), lambda b, i: (0, i))
    ptile = pl.BlockSpec((1, 1, 1, C), lambda b, i: (b, i, 0, 0))
    y, cs, css = pl.pallas_call(
        functools.partial(_attn_apply_kernel, gamma=float(params["gamma"])),
        grid=(B, NT),
        in_specs=[
            qspec, _batch_spec((Cr, N)),
            qspec, _batch_spec((Cr, N)),
            _batch_spec((C, N)), _batch_spec((C, N)),
            _batch_spec((C, 1)), _batch_spec((C, 1)),
            ntile, ntile, ntile, ntile,
        ],
        out_specs=[pl.BlockSpec((1, C, TN), lambda b, i: (b, 0, i)),
                   ptile, ptile],
        out_shape=(
            jax.ShapeDtypeStruct((B, C, N), jnp.float32),
            jax.ShapeDtypeStruct((B, NT, 1, C), jnp.float32),
            jax.ShapeDtypeStruct((B, NT, 1, C), jnp.float32),
        ),
        compiler_params=_cparams(("parallel", "parallel")),
    )(q1, t1, q2, t2, v1, v2, vs1, vs2, sc1, sh1, sc2, sh2)

    # ---- BatchNorm2d (training-mode batch stats) fold -------------------------
    cnt = float(B * N)
    mean_c = jnp.sum(cs, axis=(0, 1, 2)) / cnt
    var_c = jnp.maximum(jnp.sum(css, axis=(0, 1, 2)) / cnt - mean_c * mean_c, 0.0)
    inv_c = params["bn2_w"] / jnp.sqrt(var_c + eps)
    sc_bn2 = inv_c[:, None]
    sh_bn2 = (params["bn2_b"] - mean_c * inv_c)[:, None]

    # ---- pass C: final per-channel affine, applied in place over y -----------
    out = pl.pallas_call(
        _bn2d_kernel,
        grid=(B, NC),
        in_specs=[pl.BlockSpec((1, C, TC), lambda b, i: (b, 0, i)),
                  _full_spec((C, 1)), _full_spec((C, 1))],
        out_specs=pl.BlockSpec((1, C, TC), lambda b, i: (b, 0, i)),
        out_shape=jax.ShapeDtypeStruct((B, C, N), jnp.float32),
        input_output_aliases={0: 0},
        compiler_params=_cparams(("parallel", "parallel")),
    )(y, sc_bn2, sh_bn2)

    return out.reshape(B, C, H, W)


# ---------------------------------------------------------------------------
# Deterministic parameter init (shapes per SpatAttn_.__init__)
# ---------------------------------------------------------------------------
def init_params(key, in_dim, ratio, H, W):
    C, Cr, N = in_dim, in_dim // ratio, H * W
    ks = jax.random.split(key, 8)

    def u(k, shape, fan_in):
        bound = 1.0 / (fan_in ** 0.5)
        return jax.random.uniform(k, shape, jnp.float32, -bound, bound)

    return dict(
        # branch 1: query/key/key1/key2 1x1 convs stacked -> (4*Cr, C)
        w1=u(ks[0], (4 * Cr, C), C), b1=u(ks[1], (4 * Cr, 1), C),
        wv1=u(ks[2], (C, C), C), bv1=u(ks[3], (C, 1), C),
        # branch 2: 3x3 convs, tap-major layout (9, out, in); w2[t] corresponds
        # to torch_weight[:, :, kh, kw] with t = kh*3 + kw.
        w2=u(ks[4], (9, 4 * Cr, C), 9 * C), b2=u(ks[5], (4 * Cr, 1), 9 * C),
        wv2=u(ks[6], (9, C, C), 9 * C), bv2=u(ks[7], (C, 1), 9 * C),
        # BatchNorm affine params (PyTorch init: weight=1, bias=0)
        bn1_w=jnp.ones((N,), jnp.float32), bn1_b=jnp.zeros((N,), jnp.float32),
        bn2_w=jnp.ones((C,), jnp.float32), bn2_b=jnp.zeros((C,), jnp.float32),
        # torch init is zeros(1) which makes the output trivially 0; use 0.5
        gamma=0.5,
    )


if __name__ == "__main__":
    B, C, H, W = 2, 4, 16, 16
    ratio = 2
    key = jax.random.PRNGKey(0)
    kx, kp = jax.random.split(key)
    x = jax.random.normal(kx, (B, C, H, W), jnp.float32)
    params = init_params(kp, C, ratio, H, W)

    out = spat_attn(x, params)
    out = jax.block_until_ready(out)

    assert out.shape == (B, C, H, W), out.shape
    assert bool(jnp.isfinite(out).all())
    print("KERNEL_OK")
</pallas_src>

<mosaic_0001>
module attributes {stable_mosaic.version = 11 : i64} {
  func.func @_proj_kernel(%arg0: i32, %arg1: memref<1x4x256xf32, #tpu.memory_space<vmem>>, %arg2: memref<9x1x256xf32, #tpu.memory_space<vmem>>, %arg3: memref<8x4xf32, #tpu.memory_space<vmem>>, %arg4: memref<8x1xf32, #tpu.memory_space<vmem>>, %arg5: memref<4x4xf32, #tpu.memory_space<vmem>>, %arg6: memref<4x1xf32, #tpu.memory_space<vmem>>, %arg7: memref<9x8x4xf32, #tpu.memory_space<vmem>>, %arg8: memref<8x1xf32, #tpu.memory_space<vmem>>, %arg9: memref<9x4x4xf32, #tpu.memory_space<vmem>>, %arg10: memref<4x1xf32, #tpu.memory_space<vmem>>, %arg11: memref<1x2x256xf32, #tpu.memory_space<vmem>>, %arg12: memref<1x2x256xf32, #tpu.memory_space<vmem>>, %arg13: memref<1x2x256xf32, #tpu.memory_space<vmem>>, %arg14: memref<1x2x256xf32, #tpu.memory_space<vmem>>, %arg15: memref<1x4x256xf32, #tpu.memory_space<vmem>>, %arg16: memref<1x4x256xf32, #tpu.memory_space<vmem>>, %arg17: memref<1x4x1xf32, #tpu.memory_space<vmem>>, %arg18: memref<1x4x1xf32, #tpu.memory_space<vmem>>) attributes {dimension_semantics = [#tpu.dimension_semantics<parallel>], iteration_bounds = array<i64: 2>, scalar_prefetch = 0 : i64, scratch_operands = 0 : i64, tpu.core_type = #tpu.core_type<tc>, window_params = [{transform_indices = @transform_0, window_bounds = array<i64: 1, 4, 256>}, {pipeline_mode = #tpu.pipeline_mode<synchronous>, transform_indices = @transform_1, window_bounds = array<i64: 9, 1, 256>}, {pipeline_mode = #tpu.pipeline_mode<synchronous>, transform_indices = @transform_2, window_bounds = array<i64: 8, 4>}, {pipeline_mode = #tpu.pipeline_mode<synchronous>, transform_indices = @transform_3, window_bounds = array<i64: 8, 1>}, {pipeline_mode = #tpu.pipeline_mode<synchronous>, transform_indices = @transform_4, window_bounds = array<i64: 4, 4>}, {pipeline_mode = #tpu.pipeline_mode<synchronous>, transform_indices = @transform_5, window_bounds = array<i64: 4, 1>}, {pipeline_mode = #tpu.pipeline_mode<synchronous>, transform_indices = @transform_6, window_bounds = array<i64: 9, 8, 4>}, {pipeline_mode = #tpu.pipeline_mode<synchronous>, transform_indices = @transform_7, window_bounds = array<i64: 8, 1>}, {pipeline_mode = #tpu.pipeline_mode<synchronous>, transform_indices = @transform_8, window_bounds = array<i64: 9, 4, 4>}, {pipeline_mode = #tpu.pipeline_mode<synchronous>, transform_indices = @transform_9, window_bounds = array<i64: 4, 1>}, {transform_indices = @transform_10, window_bounds = array<i64: 1, 2, 256>}, {transform_indices = @transform_11, window_bounds = array<i64: 1, 2, 256>}, {transform_indices = @transform_12, window_bounds = array<i64: 1, 2, 256>}, {transform_indices = @transform_13, window_bounds = array<i64: 1, 2, 256>}, {transform_indices = @transform_14, window_bounds = array<i64: 1, 4, 256>}, {transform_indices = @transform_15, window_bounds = array<i64: 1, 4, 256>}, {transform_indices = @transform_16, window_bounds = array<i64: 1, 4, 1>}, {transform_indices = @transform_17, window_bounds = array<i64: 1, 4, 1>}]} {
    %c0 = arith.constant 0 : index
    %c0_0 = arith.constant 0 : index
    %c0_1 = arith.constant 0 : index
    %0 = vector.load %arg1[%c0, %c0_0, %c0_1] : memref<1x4x256xf32, #tpu.memory_space<vmem>>, vector<1x4x256xf32>
    %1 = vector.shape_cast %0 : vector<1x4x256xf32> to vector<4x256xf32>
    %c0_2 = arith.constant 0 : index
    %c0_3 = arith.constant 0 : index
    %2 = vector.load %arg3[%c0_2, %c0_3] : memref<8x4xf32, #tpu.memory_space<vmem>>, vector<8x4xf32>
    %cst = arith.constant dense<0.000000e+00> : vector<8x256xf32>
    %3 = tpu.matmul %2, %1, %cst {dimension_numbers = #tpu.dot_dimension_numbers<[1], [0], [0], [1], [0, 0, 1, 1], [], []>} : vector<8x4xf32>, vector<4x256xf32>, vector<8x256xf32> -> vector<8x256xf32>
    %c0_4 = arith.constant 0 : index
    %c0_5 = arith.constant 0 : index
    %4 = vector.load %arg4[%c0_4, %c0_5] : memref<8x1xf32, #tpu.memory_space<vmem>>, vector<8x1xf32>
    %5 = vector.broadcast %4 : vector<8x1xf32> to vector<8x256xf32>
    %6 = arith.addf %3, %5 : vector<8x256xf32>
    %c0_6 = arith.constant 0 : index
    %c0_7 = arith.constant 0 : index
    %7 = vector.load %arg5[%c0_6, %c0_7] : memref<4x4xf32, #tpu.memory_space<vmem>>, vector<4x4xf32>
    %cst_8 = arith.constant dense<0.000000e+00> : vector<4x256xf32>
    %8 = tpu.matmul %7, %1, %cst_8 {dimension_numbers = #tpu.dot_dimension_numbers<[1], [0], [0], [1], [0, 0, 1, 1], [], []>} : vector<4x4xf32>, vector<4x256xf32>, vector<4x256xf32> -> vector<4x256xf32>
    %c0_9 = arith.constant 0 : index
    %c0_10 = arith.constant 0 : index
    %9 = vector.load %arg6[%c0_9, %c0_10] : memref<4x1xf32, #tpu.memory_space<vmem>>, vector<4x1xf32>
    %10 = vector.broadcast %9 : vector<4x1xf32> to vector<4x256xf32>
    %11 = arith.addf %8, %10 : vector<4x256xf32>
    %cst_11 = arith.constant 0.000000e+00 : f32
    %12 = vector.broadcast %cst_11 : f32 to vector<8x256xf32>
    %cst_12 = arith.constant 0.000000e+00 : f32
    %13 = vector.broadcast %cst_12 : f32 to vector<4x256xf32>
    %c17_i32 = arith.constant 17 : i32
    %14 = tpu.dynamic_rotate %1 by %c17_i32 dim 1 : vector<4x256xf32>, i32 -> vector<4x256xf32>
    %c0_13 = arith.constant 0 : index
    %c0_14 = arith.constant 0 : index
    %c0_15 = arith.constant 0 : index
    %15 = vector.load %arg2[%c0_13, %c0_14, %c0_15] : memref<9x1x256xf32, #tpu.memory_space<vmem>>, vector<1x1x256xf32>
    %16 = vector.shape_cast %15 : vector<1x1x256xf32> to vector<1x256xf32>
    %17 = vector.broadcast %16 : vector<1x256xf32> to vector<4x256xf32>
    %18 = arith.mulf %14, %17 : vector<4x256xf32>
    %c0_16 = arith.constant 0 : index
    %c0_17 = arith.constant 0 : index
    %c0_18 = arith.constant 0 : index
    %19 = vector.load %arg7[%c0_16, %c0_17, %c0_18] : memref<9x8x4xf32, #tpu.memory_space<vmem>>, vector<1x8x4xf32>
    %20 = vector.shape_cast %19 : vector<1x8x4xf32> to vector<8x4xf32>
    %cst_19 = arith.constant dense<0.000000e+00> : vector<8x256xf32>
    %21 = tpu.matmul %20, %18, %cst_19 {dimension_numbers = #tpu.dot_dimension_numbers<[1], [0], [0], [1], [0, 0, 1, 1], [], []>} : vector<8x4xf32>, vector<4x256xf32>, vector<8x256xf32> -> vector<8x256xf32>
    %22 = arith.addf %12, %21 : vector<8x256xf32>
    %c0_20 = arith.constant 0 : index
    %c0_21 = arith.constant 0 : index
    %c0_22 = arith.constant 0 : index
    %23 = vector.load %arg9[%c0_20, %c0_21, %c0_22] : memref<9x4x4xf32, #tpu.memory_space<vmem>>, vector<1x4x4xf32>
    %24 = vector.shape_cast %23 : vector<1x4x4xf32> to vector<4x4xf32>
    %cst_23 = arith.constant dense<0.000000e+00> : vector<4x256xf32>
    %25 = tpu.matmul %24, %18, %cst_23 {dimension_numbers = #tpu.dot_dimension_numbers<[1], [0], [0], [1], [0, 0, 1, 1], [], []>} : vector<4x4xf32>, vector<4x256xf32>, vector<4x256xf32> -> vector<4x256xf32>
    %26 = arith.addf %13, %25 : vector<4x256xf32>
    %c16_i32 = arith.constant 16 : i32
    %27 = tpu.dynamic_rotate %1 by %c16_i32 dim 1 : vector<4x256xf32>, i32 -> vector<4x256xf32>
    %c1 = arith.constant 1 : index
    %c0_24 = arith.constant 0 : index
    %c0_25 = arith.constant 0 : index
    %28 = vector.load %arg2[%c1, %c0_24, %c0_25] : memref<9x1x256xf32, #tpu.memory_space<vmem>>, vector<1x1x256xf32>
    %29 = vector.shape_cast %28 : vector<1x1x256xf32> to vector<1x256xf32>
    %30 = vector.broadcast %29 : vector<1x256xf32> to vector<4x256xf32>
    %31 = arith.mulf %27, %30 : vector<4x256xf32>
    %c1_26 = arith.constant 1 : index
    %c0_27 = arith.constant 0 : index
    %c0_28 = arith.constant 0 : index
    %32 = vector.load %arg7[%c1_26, %c0_27, %c0_28] : memref<9x8x4xf32, #tpu.memory_space<vmem>>, vector<1x8x4xf32>
    %33 = vector.shape_cast %32 : vector<1x8x4xf32> to vector<8x4xf32>
    %cst_29 = arith.constant dense<0.000000e+00> : vector<8x256xf32>
    %34 = tpu.matmul %33, %31, %cst_29 {dimension_numbers = #tpu.dot_dimension_numbers<[1], [0], [0], [1], [0, 0, 1, 1], [], []>} : vector<8x4xf32>, vector<4x256xf32>, vector<8x256xf32> -> vector<8x256xf32>
    %35 = arith.addf %22, %34 : vector<8x256xf32>
    %c1_30 = arith.constant 1 : index
    %c0_31 = arith.constant 0 : index
    %c0_32 = arith.constant 0 : index
    %36 = vector.load %arg9[%c1_30, %c0_31, %c0_32] : memref<9x4x4xf32, #tpu.memory_space<vmem>>, vector<1x4x4xf32>
    %37 = vector.shape_cast %36 : vector<1x4x4xf32> to vector<4x4xf32>
    %cst_33 = arith.constant dense<0.000000e+00> : vector<4x256xf32>
    %38 = tpu.matmul %37, %31, %cst_33 {dimension_numbers = #tpu.dot_dimension_numbers<[1], [0], [0], [1], [0, 0, 1, 1], [], []>} : vector<4x4xf32>, vector<4x256xf32>, vector<4x256xf32> -> vector<4x256xf32>
    %39 = arith.addf %26, %38 : vector<4x256xf32>
    %c15_i32 = arith.constant 15 : i32
    %40 = tpu.dynamic_rotate %1 by %c15_i32 dim 1 : vector<4x256xf32>, i32 -> vector<4x256xf32>
    %c2 = arith.constant 2 : index
    %c0_34 = arith.constant 0 : index
    %c0_35 = arith.constant 0 : index
    %41 = vector.load %arg2[%c2, %c0_34, %c0_35] : memref<9x1x256xf32, #tpu.memory_space<vmem>>, vector<1x1x256xf32>
    %42 = vector.shape_cast %41 : vector<1x1x256xf32> to vector<1x256xf32>
    %43 = vector.broadcast %42 : vector<1x256xf32> to vector<4x256xf32>
    %44 = arith.mulf %40, %43 : vector<4x256xf32>
    %c2_36 = arith.constant 2 : index
    %c0_37 = arith.constant 0 : index
    %c0_38 = arith.constant 0 : index
    %45 = vector.load %arg7[%c2_36, %c0_37, %c0_38] : memref<9x8x4xf32, #tpu.memory_space<vmem>>, vector<1x8x4xf32>
    %46 = vector.shape_cast %45 : vector<1x8x4xf32> to vector<8x4xf32>
    %cst_39 = arith.constant dense<0.000000e+00> : vector<8x256xf32>
    %47 = tpu.matmul %46, %44, %cst_39 {dimension_numbers = #tpu.dot_dimension_numbers<[1], [0], [0], [1], [0, 0, 1, 1], [], []>} : vector<8x4xf32>, vector<4x256xf32>, vector<8x256xf32> -> vector<8x256xf32>
    %48 = arith.addf %35, %47 : vector<8x256xf32>
    %c2_40 = arith.constant 2 : index
    %c0_41 = arith.constant 0 : index
    %c0_42 = arith.constant 0 : index
    %49 = vector.load %arg9[%c2_40, %c0_41, %c0_42] : memref<9x4x4xf32, #tpu.memory_space<vmem>>, vector<1x4x4xf32>
    %50 = vector.shape_cast %49 : vector<1x4x4xf32> to vector<4x4xf32>
    %cst_43 = arith.constant dense<0.000000e+00> : vector<4x256xf32>
    %51 = tpu.matmul %50, %44, %cst_43 {dimension_numbers = #tpu.dot_dimension_numbers<[1], [0], [0], [1], [0, 0, 1, 1], [], []>} : vector<4x4xf32>, vector<4x256xf32>, vector<4x256xf32> -> vector<4x256xf32>
    %52 = arith.addf %39, %51 : vector<4x256xf32>
    %c1_i32 = arith.constant 1 : i32
    %53 = tpu.dynamic_rotate %1 by %c1_i32 dim 1 : vector<4x256xf32>, i32 -> vector<4x256xf32>
    %c3 = arith.constant 3 : index
    %c0_44 = arith.constant 0 : index
    %c0_45 = arith.constant 0 : index
    %54 = vector.load %arg2[%c3, %c0_44, %c0_45] : memref<9x1x256xf32, #tpu.memory_space<vmem>>, vector<1x1x256xf32>
    %55 = vector.shape_cast %54 : vector<1x1x256xf32> to vector<1x256xf32>
    %56 = vector.broadcast %55 : vector<1x256xf32> to vector<4x256xf32>
    %57 = arith.mulf %53, %56 : vector<4x256xf32>
    %c3_46 = arith.constant 3 : index
    %c0_47 = arith.constant 0 : index
    %c0_48 = arith.constant 0 : index
    %58 = vector.load %arg7[%c3_46, %c0_47, %c0_48] : memref<9x8x4xf32, #tpu.memory_space<vmem>>, vector<1x8x4xf32>
    %59 = vector.shape_cast %58 : vector<1x8x4xf32> to vector<8x4xf32>
    %cst_49 = arith.constant dense<0.000000e+00> : vector<8x256xf32>
    %60 = tpu.matmul %59, %57, %cst_49 {dimension_numbers = #tpu.dot_dimension_numbers<[1], [0], [0], [1], [0, 0, 1, 1], [], []>} : vector<8x4xf32>, vector<4x256xf32>, vector<8x256xf32> -> vector<8x256xf32>
    %61 = arith.addf %48, %60 : vector<8x256xf32>
    %c3_50 = arith.constant 3 : index
    %c0_51 = arith.constant 0 : index
    %c0_52 = arith.constant 0 : index
    %62 = vector.load %arg9[%c3_50, %c0_51, %c0_52] : memref<9x4x4xf32, #tpu.memory_space<vmem>>, vector<1x4x4xf32>
    %63 = vector.shape_cast %62 : vector<1x4x4xf32> to vector<4x4xf32>
    %cst_53 = arith.constant dense<0.000000e+00> : vector<4x256xf32>
    %64 = tpu.matmul %63, %57, %cst_53 {dimension_numbers = #tpu.dot_dimension_numbers<[1], [0], [0], [1], [0, 0, 1, 1], [], []>} : vector<4x4xf32>, vector<4x256xf32>, vector<4x256xf32> -> vector<4x256xf32>
    %65 = arith.addf %52, %64 : vector<4x256xf32>
    %c4 = arith.constant 4 : index
    %c0_54 = arith.constant 0 : index
    %c0_55 = arith.constant 0 : index
    %66 = vector.load %arg7[%c4, %c0_54, %c0_55] : memref<9x8x4xf32, #tpu.memory_space<vmem>>, vector<1x8x4xf32>
    %67 = vector.shape_cast %66 : vector<1x8x4xf32> to vector<8x4xf32>
    %cst_56 = arith.constant dense<0.000000e+00> : vector<8x256xf32>
    %68 = tpu.matmul %67, %1, %cst_56 {dimension_numbers = #tpu.dot_dimension_numbers<[1], [0], [0], [1], [0, 0, 1, 1], [], []>} : vector<8x4xf32>, vector<4x256xf32>, vector<8x256xf32> -> vector<8x256xf32>
    %69 = arith.addf %61, %68 : vector<8x256xf32>
    %c4_57 = arith.constant 4 : index
    %c0_58 = arith.constant 0 : index
    %c0_59 = arith.constant 0 : index
    %70 = vector.load %arg9[%c4_57, %c0_58, %c0_59] : memref<9x4x4xf32, #tpu.memory_space<vmem>>, vector<1x4x4xf32>
    %71 = vector.shape_cast %70 : vector<1x4x4xf32> to vector<4x4xf32>
    %cst_60 = arith.constant dense<0.000000e+00> : vector<4x256xf32>
    %72 = tpu.matmul %71, %1, %cst_60 {dimension_numbers = #tpu.dot_dimension_numbers<[1], [0], [0], [1], [0, 0, 1, 1], [], []>} : vector<4x4xf32>, vector<4x256xf32>, vector<4x256xf32> -> vector<4x256xf32>
    %73 = arith.addf %65, %72 : vector<4x256xf32>
    %c255_i32 = arith.constant 255 : i32
    %74 = tpu.dynamic_rotate %1 by %c255_i32 dim 1 : vector<4x256xf32>, i32 -> vector<4x256xf32>
    %c5 = arith.constant 5 : index
    %c0_61 = arith.constant 0 : index
    %c0_62 = arith.constant 0 : index
    %75 = vector.load %arg2[%c5, %c0_61, %c0_62] : memref<9x1x256xf32, #tpu.memory_space<vmem>>, vector<1x1x256xf32>
    %76 = vector.shape_cast %75 : vector<1x1x256xf32> to vector<1x256xf32>
    %77 = vector.broadcast %76 : vector<1x256xf32> to vector<4x256xf32>
    %78 = arith.mulf %74, %77 : vector<4x256xf32>
    %c5_63 = arith.constant 5 : index
    %c0_64 = arith.constant 0 : index
    %c0_65 = arith.constant 0 : index
    %79 = vector.load %arg7[%c5_63, %c0_64, %c0_65] : memref<9x8x4xf32, #tpu.memory_space<vmem>>, vector<1x8x4xf32>
    %80 = vector.shape_cast %79 : vector<1x8x4xf32> to vector<8x4xf32>
    %cst_66 = arith.constant dense<0.000000e+00> : vector<8x256xf32>
    %81 = tpu.matmul %80, %78, %cst_66 {dimension_numbers = #tpu.dot_dimension_numbers<[1], [0], [0], [1], [0, 0, 1, 1], [], []>} : vector<8x4xf32>, vector<4x256xf32>, vector<8x256xf32> -> vector<8x256xf32>
    %82 = arith.addf %69, %81 : vector<8x256xf32>
    %c5_67 = arith.constant 5 : index
    %c0_68 = arith.constant 0 : index
    %c0_69 = arith.constant 0 : index
    %83 = vector.load %arg9[%c5_67, %c0_68, %c0_69] : memref<9x4x4xf32, #tpu.memory_space<vmem>>, vector<1x4x4xf32>
    %84 = vector.shape_cast %83 : vector<1x4x4xf32> to vector<4x4xf32>
    %cst_70 = arith.constant dense<0.000000e+00> : vector<4x256xf32>
    %85 = tpu.matmul %84, %78, %cst_70 {dimension_numbers = #tpu.dot_dimension_numbers<[1], [0], [0], [1], [0, 0, 1, 1], [], []>} : vector<4x4xf32>, vector<4x256xf32>, vector<4x256xf32> -> vector<4x256xf32>
    %86 = arith.addf %73, %85 : vector<4x256xf32>
    %c241_i32 = arith.constant 241 : i32
    %87 = tpu.dynamic_rotate %1 by %c241_i32 dim 1 : vector<4x256xf32>, i32 -> vector<4x256xf32>
    %c6 = arith.constant 6 : index
    %c0_71 = arith.constant 0 : index
    %c0_72 = arith.constant 0 : index
    %88 = vector.load %arg2[%c6, %c0_71, %c0_72] : memref<9x1x256xf32, #tpu.memory_space<vmem>>, vector<1x1x256xf32>
    %89 = vector.shape_cast %88 : vector<1x1x256xf32> to vector<1x256xf32>
    %90 = vector.broadcast %89 : vector<1x256xf32> to vector<4x256xf32>
    %91 = arith.mulf %87, %90 : vector<4x256xf32>
    %c6_73 = arith.constant 6 : index
    %c0_74 = arith.constant 0 : index
    %c0_75 = arith.constant 0 : index
    %92 = vector.load %arg7[%c6_73, %c0_74, %c0_75] : memref<9x8x4xf32, #tpu.memory_space<vmem>>, vector<1x8x4xf32>
    %93 = vector.shape_cast %92 : vector<1x8x4xf32> to vector<8x4xf32>
    %cst_76 = arith.constant dense<0.000000e+00> : vector<8x256xf32>
    %94 = tpu.matmul %93, %91, %cst_76 {dimension_numbers = #tpu.dot_dimension_numbers<[1], [0], [0], [1], [0, 0, 1, 1], [], []>} : vector<8x4xf32>, vector<4x256xf32>, vector<8x256xf32> -> vector<8x256xf32>
    %95 = arith.addf %82, %94 : vector<8x256xf32>
    %c6_77 = arith.constant 6 : index
    %c0_78 = arith.constant 0 : index
    %c0_79 = arith.constant 0 : index
    %96 = vector.load %arg9[%c6_77, %c0_78, %c0_79] : memref<9x4x4xf32, #tpu.memory_space<vmem>>, vector<1x4x4xf32>
    %97 = vector.shape_cast %96 : vector<1x4x4xf32> to vector<4x4xf32>
    %cst_80 = arith.constant dense<0.000000e+00> : vector<4x256xf32>
    %98 = tpu.matmul %97, %91, %cst_80 {dimension_numbers = #tpu.dot_dimension_numbers<[1], [0], [0], [1], [0, 0, 1, 1], [], []>} : vector<4x4xf32>, vector<4x256xf32>, vector<4x256xf32> -> vector<4x256xf32>
    %99 = arith.addf %86, %98 : vector<4x256xf32>
    %c240_i32 = arith.constant 240 : i32
    %100 = tpu.dynamic_rotate %1 by %c240_i32 dim 1 : vector<4x256xf32>, i32 -> vector<4x256xf32>
    %c7 = arith.constant 7 : index
    %c0_81 = arith.constant 0 : index
    %c0_82 = arith.constant 0 : index
    %101 = vector.load %arg2[%c7, %c0_81, %c0_82] : memref<9x1x256xf32, #tpu.memory_space<vmem>>, vector<1x1x256xf32>
    %102 = vector.shape_cast %101 : vector<1x1x256xf32> to vector<1x256xf32>
    %103 = vector.broadcast %102 : vector<1x256xf32> to vector<4x256xf32>
    %104 = arith.mulf %100, %103 : vector<4x256xf32>
    %c7_83 = arith.constant 7 : index
    %c0_84 = arith.constant 0 : index
    %c0_85 = arith.constant 0 : index
    %105 = vector.load %arg7[%c7_83, %c0_84, %c0_85] : memref<9x8x4xf32, #tpu.memory_space<vmem>>, vector<1x8x4xf32>
    %106 = vector.shape_cast %105 : vector<1x8x4xf32> to vector<8x4xf32>
    %cst_86 = arith.constant dense<0.000000e+00> : vector<8x256xf32>
    %107 = tpu.matmul %106, %104, %cst_86 {dimension_numbers = #tpu.dot_dimension_numbers<[1], [0], [0], [1], [0, 0, 1, 1], [], []>} : vector<8x4xf32>, vector<4x256xf32>, vector<8x256xf32> -> vector<8x256xf32>
    %108 = arith.addf %95, %107 : vector<8x256xf32>
    %c7_87 = arith.constant 7 : index
    %c0_88 = arith.constant 0 : index
    %c0_89 = arith.constant 0 : index
    %109 = vector.load %arg9[%c7_87, %c0_88, %c0_89] : memref<9x4x4xf32, #tpu.memory_space<vmem>>, vector<1x4x4xf32>
    %110 = vector.shape_cast %109 : vector<1x4x4xf32> to vector<4x4xf32>
    %cst_90 = arith.constant dense<0.000000e+00> : vector<4x256xf32>
    %111 = tpu.matmul %110, %104, %cst_90 {dimension_numbers = #tpu.dot_dimension_numbers<[1], [0], [0], [1], [0, 0, 1, 1], [], []>} : vector<4x4xf32>, vector<4x256xf32>, vector<4x256xf32> -> vector<4x256xf32>
    %112 = arith.addf %99, %111 : vector<4x256xf32>
    %c239_i32 = arith.constant 239 : i32
    %113 = tpu.dynamic_rotate %1 by %c239_i32 dim 1 : vector<4x256xf32>, i32 -> vector<4x256xf32>
    %c8 = arith.constant 8 : index
    %c0_91 = arith.constant 0 : index
    %c0_92 = arith.constant 0 : index
    %114 = vector.load %arg2[%c8, %c0_91, %c0_92] : memref<9x1x256xf32, #tpu.memory_space<vmem>>, vector<1x1x256xf32>
    %115 = vector.shape_cast %114 : vector<1x1x256xf32> to vector<1x256xf32>
    %116 = vector.broadcast %115 : vector<1x256xf32> to vector<4x256xf32>
    %117 = arith.mulf %113, %116 : vector<4x256xf32>
    %c8_93 = arith.constant 8 : index
    %c0_94 = arith.constant 0 : index
    %c0_95 = arith.constant 0 : index
    %118 = vector.load %arg7[%c8_93, %c0_94, %c0_95] : memref<9x8x4xf32, #tpu.memory_space<vmem>>, vector<1x8x4xf32>
    %119 = vector.shape_cast %118 : vector<1x8x4xf32> to vector<8x4xf32>
    %cst_96 = arith.constant dense<0.000000e+00> : vector<8x256xf32>
    %120 = tpu.matmul %119, %117, %cst_96 {dimension_numbers = #tpu.dot_dimension_numbers<[1], [0], [0], [1], [0, 0, 1, 1], [], []>} : vector<8x4xf32>, vector<4x256xf32>, vector<8x256xf32> -> vector<8x256xf32>
    %121 = arith.addf %108, %120 : vector<8x256xf32>
    %c8_97 = arith.constant 8 : index
    %c0_98 = arith.constant 0 : index
    %c0_99 = arith.constant 0 : index
    %122 = vector.load %arg9[%c8_97, %c0_98, %c0_99] : memref<9x4x4xf32, #tpu.memory_space<vmem>>, vector<1x4x4xf32>
    %123 = vector.shape_cast %122 : vector<1x4x4xf32> to vector<4x4xf32>
    %cst_100 = arith.constant dense<0.000000e+00> : vector<4x256xf32>
    %124 = tpu.matmul %123, %117, %cst_100 {dimension_numbers = #tpu.dot_dimension_numbers<[1], [0], [0], [1], [0, 0, 1, 1], [], []>} : vector<4x4xf32>, vector<4x256xf32>, vector<4x256xf32> -> vector<4x256xf32>
    %125 = arith.addf %112, %124 : vector<4x256xf32>
    %c0_101 = arith.constant 0 : index
    %c0_102 = arith.constant 0 : index
    %126 = vector.load %arg8[%c0_101, %c0_102] : memref<8x1xf32, #tpu.memory_space<vmem>>, vector<8x1xf32>
    %127 = vector.broadcast %126 : vector<8x1xf32> to vector<8x256xf32>
    %128 = arith.addf %121, %127 : vector<8x256xf32>
    %c0_103 = arith.constant 0 : index
    %c0_104 = arith.constant 0 : index
    %129 = vector.load %arg10[%c0_103, %c0_104] : memref<4x1xf32, #tpu.memory_space<vmem>>, vector<4x1xf32>
    %130 = vector.broadcast %129 : vector<4x1xf32> to vector<4x256xf32>
    %131 = arith.addf %125, %130 : vector<4x256xf32>
    %c0_105 = arith.constant 0 : index
    %c0_106 = arith.constant 0 : index
    %c0_107 = arith.constant 0 : index
    %132 = vector.load %arg15[%c0_105, %c0_106, %c0_107] : memref<1x4x256xf32, #tpu.memory_space<vmem>>, vector<1x4x256xf32>
    %133 = vector.shape_cast %132 : vector<1x4x256xf32> to vector<4x256xf32>
    %134 = vector.shape_cast %11 : vector<4x256xf32> to vector<1x4x256xf32>
    tpu.vector_store %arg15[%c0_105, %c0_106, %c0_107], %134 {strides = array<i32>} : memref<1x4x256xf32, #tpu.memory_space<vmem>>, vector<1x4x256xf32>,
    %c0_108 = arith.constant 0 : index
    %c0_109 = arith.constant 0 : index
    %c0_110 = arith.constant 0 : index
    %135 = vector.load %arg16[%c0_108, %c0_109, %c0_110] : memref<1x4x256xf32, #tpu.memory_space<vmem>>, vector<1x4x256xf32>
    %136 = vector.shape_cast %135 : vector<1x4x256xf32> to vector<4x256xf32>
    %137 = vector.shape_cast %131 : vector<4x256xf32> to vector<1x4x256xf32>
    tpu.vector_store %arg16[%c0_108, %c0_109, %c0_110], %137 {strides = array<i32>} : memref<1x4x256xf32, #tpu.memory_space<vmem>>, vector<1x4x256xf32>,
    %cst_111 = arith.constant dense<0.000000e+00> : vector<4xf32>
    %138 = vector.multi_reduction <add>, %11, %cst_111 [1] : vector<4x256xf32> to vector<4xf32>
    %139 = vector.shape_cast %138 : vector<4xf32> to vector<4x1xf32>
    %c0_112 = arith.constant 0 : index
    %c0_113 = arith.constant 0 : index
    %c0_114 = arith.constant 0 : index
    %140 = vector.load %arg17[%c0_112, %c0_113, %c0_114] : memref<1x4x1xf32, #tpu.memory_space<vmem>>, vector<1x4x1xf32>
    %141 = vector.shape_cast %140 : vector<1x4x1xf32> to vector<4x1xf32>
    %142 = vector.shape_cast %139 : vector<4x1xf32> to vector<1x4x1xf32>
    tpu.vector_store %arg17[%c0_112, %c0_113, %c0_114], %142 {strides = array<i32>} : memref<1x4x1xf32, #tpu.memory_space<vmem>>, vector<1x4x1xf32>,
    %cst_115 = arith.constant dense<0.000000e+00> : vector<4xf32>
    %143 = vector.multi_reduction <add>, %131, %cst_115 [1] : vector<4x256xf32> to vector<4xf32>
    %144 = vector.shape_cast %143 : vector<4xf32> to vector<4x1xf32>
    %c0_116 = arith.constant 0 : index
    %c0_117 = arith.constant 0 : index
    %c0_118 = arith.constant 0 : index
    %145 = vector.load %arg18[%c0_116, %c0_117, %c0_118] : memref<1x4x1xf32, #tpu.memory_space<vmem>>, vector<1x4x1xf32>
    %146 = vector.shape_cast %145 : vector<1x4x1xf32> to vector<4x1xf32>
    %147 = vector.shape_cast %144 : vector<4x1xf32> to vector<1x4x1xf32>
    tpu.vector_store %arg18[%c0_116, %c0_117, %c0_118], %147 {strides = array<i32>} : memref<1x4x1xf32, #tpu.memory_space<vmem>>, vector<1x4x1xf32>,
    %148 = vector.extract_strided_slice %6 {offsets = [0, 0], sizes = [2, 256], strides = [1, 1]} : vector<8x256xf32> to vector<2x256xf32>
    %149 = vector.extract_strided_slice %6 {offsets = [2, 0], sizes = [2, 256], strides = [1, 1]} : vector<8x256xf32> to vector<2x256xf32>
    %150 = vector.extract_strided_slice %6 {offsets = [4, 0], sizes = [2, 256], strides = [1, 1]} : vector<8x256xf32> to vector<2x256xf32>
    %151 = vector.extract_strided_slice %6 {offsets = [6, 0], sizes = [2, 256], strides = [1, 1]} : vector<8x256xf32> to vector<2x256xf32>
    %cst_119 = arith.constant dense<0.000000e+00> : vector<2x2xf32>
    %152 = tpu.matmul %149, %150, %cst_119 {dimension_numbers = #tpu.dot_dimension_numbers<[1], [1], [0], [0], [0, 0, 1, 0], [], []>} : vector<2x256xf32>, vector<2x256xf32>, vector<2x2xf32> -> vector<2x2xf32>
    %c0_120 = arith.constant 0 : index
    %c0_121 = arith.constant 0 : index
    %c0_122 = arith.constant 0 : index
    %153 = vector.load %arg11[%c0_120, %c0_121, %c0_122] : memref<1x2x256xf32, #tpu.memory_space<vmem>>, vector<1x2x256xf32>
    %154 = vector.shape_cast %153 : vector<1x2x256xf32> to vector<2x256xf32>
    %155 = vector.shape_cast %148 : vector<2x256xf32> to vector<1x2x256xf32>
    tpu.vector_store %arg11[%c0_120, %c0_121, %c0_122], %155 {strides = array<i32>} : memref<1x2x256xf32, #tpu.memory_space<vmem>>, vector<1x2x256xf32>,
    %cst_123 = arith.constant dense<0.000000e+00> : vector<2x256xf32>
    %156 = tpu.matmul %152, %151, %cst_123 {dimension_numbers = #tpu.dot_dimension_numbers<[1], [0], [0], [1], [0, 0, 1, 1], [], []>} : vector<2x2xf32>, vector<2x256xf32>, vector<2x256xf32> -> vector<2x256xf32>
    %c0_124 = arith.constant 0 : index
    %c0_125 = arith.constant 0 : index
    %c0_126 = arith.constant 0 : index
    %157 = vector.load %arg12[%c0_124, %c0_125, %c0_126] : memref<1x2x256xf32, #tpu.memory_space<vmem>>, vector<1x2x256xf32>
    %158 = vector.shape_cast %157 : vector<1x2x256xf32> to vector<2x256xf32>
    %159 = vector.shape_cast %156 : vector<2x256xf32> to vector<1x2x256xf32>
    tpu.vector_store %arg12[%c0_124, %c0_125, %c0_126], %159 {strides = array<i32>} : memref<1x2x256xf32, #tpu.memory_space<vmem>>, vector<1x2x256xf32>,
    %160 = vector.extract_strided_slice %128 {offsets = [0, 0], sizes = [2, 256], strides = [1, 1]} : vector<8x256xf32> to vector<2x256xf32>
    %161 = vector.extract_strided_slice %128 {offsets = [2, 0], sizes = [2, 256], strides = [1, 1]} : vector<8x256xf32> to vector<2x256xf32>
    %162 = vector.extract_strided_slice %128 {offsets = [4, 0], sizes = [2, 256], strides = [1, 1]} : vector<8x256xf32> to vector<2x256xf32>
    %163 = vector.extract_strided_slice %128 {offsets = [6, 0], sizes = [2, 256], strides = [1, 1]} : vector<8x256xf32> to vector<2x256xf32>
    %cst_127 = arith.constant dense<0.000000e+00> : vector<2x2xf32>
    %164 = tpu.matmul %161, %162, %cst_127 {dimension_numbers = #tpu.dot_dimension_numbers<[1], [1], [0], [0], [0, 0, 1, 0], [], []>} : vector<2x256xf32>, vector<2x256xf32>, vector<2x2xf32> -> vector<2x2xf32>
    %c0_128 = arith.constant 0 : index
    %c0_129 = arith.constant 0 : index
    %c0_130 = arith.constant 0 : index
    %165 = vector.load %arg13[%c0_128, %c0_129, %c0_130] : memref<1x2x256xf32, #tpu.memory_space<vmem>>, vector<1x2x256xf32>
    %166 = vector.shape_cast %165 : vector<1x2x256xf32> to vector<2x256xf32>
    %167 = vector.shape_cast %160 : vector<2x256xf32> to vector<1x2x256xf32>
    tpu.vector_store %arg13[%c0_128, %c0_129, %c0_130], %167 {strides = array<i32>} : memref<1x2x256xf32, #tpu.memory_space<vmem>>, vector<1x2x256xf32>,
    %cst_131 = arith.constant dense<0.000000e+00> : vector<2x256xf32>
    %168 = tpu.matmul %164, %163, %cst_131 {dimension_numbers = #tpu.dot_dimension_numbers<[1], [0], [0], [1], [0, 0, 1, 1], [], []>} : vector<2x2xf32>, vector<2x256xf32>, vector<2x256xf32> -> vector<2x256xf32>
    %c0_132 = arith.constant 0 : index
    %c0_133 = arith.constant 0 : index
    %c0_134 = arith.constant 0 : index
    %169 = vector.load %arg14[%c0_132, %c0_133, %c0_134] : memref<1x2x256xf32, #tpu.memory_space<vmem>>, vector<1x2x256xf32>
    %170 = vector.shape_cast %169 : vector<1x2x256xf32> to vector<2x256xf32>
    %171 = vector.shape_cast %168 : vector<2x256xf32> to vector<1x2x256xf32>
    tpu.vector_store %arg14[%c0_132, %c0_133, %c0_134], %171 {strides = array<i32>} : memref<1x2x256xf32, #tpu.memory_space<vmem>>, vector<1x2x256xf32>,
    return
  }
  func.func @transform_0(%arg0: i32) -> (i32, i32, i32) {
    %c0_i32 = arith.constant 0 : i32
    %c0_i32_0 = arith.constant 0 : i32
    %c0_i32_1 = arith.constant 0 : i32
    return %arg0, %c0_i32, %c0_i32_0 : i32, i32, i32
  }
  func.func @transform_1(%arg0: i32) -> (i32, i32, i32) {
    %c0_i32 = arith.constant 0 : i32
    %c0_i32_0 = arith.constant 0 : i32
    %c0_i32_1 = arith.constant 0 : i32
    %c0_i32_2 = arith.constant 0 : i32
    return %c0_i32, %c0_i32_0, %c0_i32_1 : i32, i32, i32
  }
  func.func @transform_2(%arg0: i32) -> (i32, i32) {
    %c0_i32 = arith.constant 0 : i32
    %c0_i32_0 = arith.constant 0 : i32
    %c0_i32_1 = arith.constant 0 : i32
    return %c0_i32, %c0_i32_0 : i32, i32
  }
  func.func @transform_3(%arg0: i32) -> (i32, i32) {
    %c0_i32 = arith.constant 0 : i32
    %c0_i32_0 = arith.constant 0 : i32
    %c0_i32_1 = arith.constant 0 : i32
    return %c0_i32, %c0_i32_0 : i32, i32
  }
  func.func @transform_4(%arg0: i32) -> (i32, i32) {
    %c0_i32 = arith.constant 0 : i32
    %c0_i32_0 = arith.constant 0 : i32
    %c0_i32_1 = arith.constant 0 : i32
    return %c0_i32, %c0_i32_0 : i32, i32
  }
  func.func @transform_5(%arg0: i32) -> (i32, i32) {
    %c0_i32 = arith.constant 0 : i32
    %c0_i32_0 = arith.constant 0 : i32
    %c0_i32_1 = arith.constant 0 : i32
    return %c0_i32, %c0_i32_0 : i32, i32
  }
  func.func @transform_6(%arg0: i32) -> (i32, i32, i32) {
    %c0_i32 = arith.constant 0 : i32
    %c0_i32_0 = arith.constant 0 : i32
    %c0_i32_1 = arith.constant 0 : i32
    %c0_i32_2 = arith.constant 0 : i32
    return %c0_i32, %c0_i32_0, %c0_i32_1 : i32, i32, i32
  }
  func.func @transform_7(%arg0: i32) -> (i32, i32) {
    %c0_i32 = arith.constant 0 : i32
    %c0_i32_0 = arith.constant 0 : i32
    %c0_i32_1 = arith.constant 0 : i32
    return %c0_i32, %c0_i32_0 : i32, i32
  }
  func.func @transform_8(%arg0: i32) -> (i32, i32, i32) {
    %c0_i32 = arith.constant 0 : i32
    %c0_i32_0 = arith.constant 0 : i32
    %c0_i32_1 = arith.constant 0 : i32
    %c0_i32_2 = arith.constant 0 : i32
    return %c0_i32, %c0_i32_0, %c0_i32_1 : i32, i32, i32
  }
  func.func @transform_9(%arg0: i32) -> (i32, i32) {
    %c0_i32 = arith.constant 0 : i32
    %c0_i32_0 = arith.constant 0 : i32
    %c0_i32_1 = arith.constant 0 : i32
    return %c0_i32, %c0_i32_0 : i32, i32
  }
  func.func @transform_10(%arg0: i32) -> (i32, i32, i32) {
    %c0_i32 = arith.constant 0 : i32
    %c0_i32_0 = arith.constant 0 : i32
    %c0_i32_1 = arith.constant 0 : i32
    return %arg0, %c0_i32, %c0_i32_0 : i32, i32, i32
  }
  func.func @transform_11(%arg0: i32) -> (i32, i32, i32) {
    %c0_i32 = arith.constant 0 : i32
    %c0_i32_0 = arith.constant 0 : i32
    %c0_i32_1 = arith.constant 0 : i32
    return %arg0, %c0_i32, %c0_i32_0 : i32, i32, i32
  }
  func.func @transform_12(%arg0: i32) -> (i32, i32, i32) {
    %c0_i32 = arith.constant 0 : i32
    %c0_i32_0 = arith.constant 0 : i32
    %c0_i32_1 = arith.constant 0 : i32
    return %arg0, %c0_i32, %c0_i32_0 : i32, i32, i32
  }
  func.func @transform_13(%arg0: i32) -> (i32, i32, i32) {
    %c0_i32 = arith.constant 0 : i32
    %c0_i32_0 = arith.constant 0 : i32
    %c0_i32_1 = arith.constant 0 : i32
    return %arg0, %c0_i32, %c0_i32_0 : i32, i32, i32
  }
  func.func @transform_14(%arg0: i32) -> (i32, i32, i32) {
    %c0_i32 = arith.constant 0 : i32
    %c0_i32_0 = arith.constant 0 : i32
    %c0_i32_1 = arith.constant 0 : i32
    return %arg0, %c0_i32, %c0_i32_0 : i32, i32, i32
  }
  func.func @transform_15(%arg0: i32) -> (i32, i32, i32) {
    %c0_i32 = arith.constant 0 : i32
    %c0_i32_0 = arith.constant 0 : i32
    %c0_i32_1 = arith.constant 0 : i32
    return %arg0, %c0_i32, %c0_i32_0 : i32, i32, i32
  }
  func.func @transform_16(%arg0: i32) -> (i32, i32, i32) {
    %c0_i32 = arith.constant 0 : i32
    %c0_i32_0 = arith.constant 0 : i32
    %c0_i32_1 = arith.constant 0 : i32
    return %arg0, %c0_i32, %c0_i32_0 : i32, i32, i32
  }
  func.func @transform_17(%arg0: i32) -> (i32, i32, i32) {
    %c0_i32 = arith.constant 0 : i32
    %c0_i32_0 = arith.constant 0 : i32
    %c0_i32_1 = arith.constant 0 : i32
    return %arg0, %c0_i32, %c0_i32_0 : i32, i32, i32
  }
}

</mosaic_0001>

<llo_original>
// kernel: tpu_custom_call.1
$region0: #{tpu_custom_call.1}
  #allocation0 [shape = 'u32[]', space=smem, size = 0x4, offset = 0x4, fixed_abs, tag = 'smem constant byte address 0x4 - core index']
  #allocation1 [shape = 'u32[144,128]{1,0:T(1,128)}', space=vmem, size = 0x12000, scoped, tag = 'internal scratch']
  %s0 = inlined_call_operand.hbm [shape: f32[2,4,256], index: 0, kind: input, shape index: {}]
  %s1 = inlined_call_operand.hbm [shape: f32[9,1,256], index: 1, kind: input, shape index: {}]
  %s2 = inlined_call_operand.hbm [shape: f32[8,4], index: 2, kind: input, shape index: {}]
  %s3 = inlined_call_operand.hbm [shape: f32[8,1], index: 3, kind: input, shape index: {}]
  %s4 = inlined_call_operand.hbm [shape: f32[4,4], index: 4, kind: input, shape index: {}]
  %s5 = inlined_call_operand.hbm [shape: f32[4,1], index: 5, kind: input, shape index: {}]
  %s6 = inlined_call_operand.hbm [shape: f32[9,8,4], index: 6, kind: input, shape index: {}]
  %s7 = inlined_call_operand.hbm [shape: f32[8,1], index: 7, kind: input, shape index: {}]
  %s8 = inlined_call_operand.hbm [shape: f32[9,4,4], index: 8, kind: input, shape index: {}]
  %s9 = inlined_call_operand.hbm [shape: f32[4,1], index: 9, kind: input, shape index: {}]
  %s10 = inlined_call_operand.hbm [shape: f32[2,2,256], index: 10, kind: output, shape index: {0}]
  %s11 = inlined_call_operand.hbm [shape: f32[2,2,256], index: 11, kind: output, shape index: {1}]
  %s12 = inlined_call_operand.hbm [shape: f32[2,2,256], index: 12, kind: output, shape index: {2}]
  %s13 = inlined_call_operand.hbm [shape: f32[2,2,256], index: 13, kind: output, shape index: {3}]
  %s14 = inlined_call_operand.hbm [shape: f32[2,4,256], index: 14, kind: output, shape index: {4}]
  %s15 = inlined_call_operand.hbm [shape: f32[2,4,256], index: 15, kind: output, shape index: {5}]
  %s16 = inlined_call_operand.hbm [shape: f32[2,4,1], index: 16, kind: output, shape index: {6}]
  %s17 = inlined_call_operand.hbm [shape: f32[2,4,1], index: 17, kind: output, shape index: {7}]
  %18 = xla_tuple %s10, %s11, %s12, %s13, %s14, %s15, %s16, %s17
  %s19 = sld [smem:[#allocation0]]
  $region169: #{tpu_custom_call.1} parent=0
    _
  %s21 = ssub.s32 1, %s19
  %s22 = scalar_select 0, %s21, %s19
  $region1: #{tpu_custom_call.1} parent=0
    #allocation2 [shape = 'u8[8192]{0}', space=vmem, size = 0x2000, scoped, tag = 'input window, operand 0']
    #allocation3 [shape = 's32[2]{0}', space=sflag, size = 0x8, scoped, tag = 'scoped memory for tpu_custom_call.1']
    #allocation4 [shape = 's32[2]{0}', space=sflag, size = 0x8, scoped, tag = 'scoped memory for tpu_custom_call.1']
    #allocation5 [shape = 'u8[9216]{0}', space=vmem, size = 0x2400, scoped, tag = 'input window, operand 1, single buffered']
    #allocation6 [shape = 's32[1]{0}', space=sflag, size = 0x4, scoped, tag = 'scoped memory for tpu_custom_call.1']
    #allocation7 [shape = 'u8[4096]{0}', space=vmem, size = 0x1000, scoped, tag = 'input window, operand 2, single buffered']
    #allocation8 [shape = 'u8[4096]{0}', space=vmem, size = 0x1000, scoped, tag = 'input window, operand 3, single buffered']
    #allocation9 [shape = 's32[1]{0}', space=sflag, size = 0x4, scoped, tag = 'scoped memory for tpu_custom_call.1']
    #allocation10 [shape = 'u8[2048]{0}', space=vmem, size = 0x800, scoped, tag = 'input window, operand 4, single buffered']
    #allocation11 [shape = 'u8[2048]{0}', space=vmem, size = 0x800, scoped, tag = 'input window, operand 5, single buffered']
    #allocation12 [shape = 's32[1]{0}', space=sflag, size = 0x4, scoped, tag = 'scoped memory for tpu_custom_call.1']
    #allocation13 [shape = 'u8[36864]{0}', space=vmem, size = 0x9000, scoped, tag = 'input window, operand 6, single buffered']
    #allocation14 [shape = 'u8[4096]{0}', space=vmem, size = 0x1000, scoped, tag = 'input window, operand 7, single buffered']
    #allocation15 [shape = 's32[1]{0}', space=sflag, size = 0x4, scoped, tag = 'scoped memory for tpu_custom_call.1']
    #allocation16 [shape = 'u8[18432]{0}', space=vmem, size = 0x4800, scoped, tag = 'input window, operand 8, single buffered']
    #allocation17 [shape = 'u8[2048]{0}', space=vmem, size = 0x800, scoped, tag = 'input window, operand 9, single buffered']
    #allocation18 [shape = 's32[1]{0}', space=sflag, size = 0x4, scoped, tag = 'scoped memory for tpu_custom_call.1']
    #allocation19 [shape = 'u8[4096]{0}', space=vmem, size = 0x1000, scoped, tag = 'output window, operand 0']
    #allocation20 [shape = 'u8[4096]{0}', space=vmem, size = 0x1000, scoped, tag = 'output window, operand 1']
    #allocation21 [shape = 's32[2]{0}', space=sflag, size = 0x8, scoped, tag = 'scoped memory for tpu_custom_call.1']
    #allocation22 [shape = 'u8[4096]{0}', space=vmem, size = 0x1000, scoped, tag = 'output window, operand 2']
    #allocation23 [shape = 'u8[4096]{0}', space=vmem, size = 0x1000, scoped, tag = 'output window, operand 3']
    #allocation24 [shape = 's32[2]{0}', space=sflag, size = 0x8, scoped, tag = 'scoped memory for tpu_custom_call.1']
    #allocation25 [shape = 'u8[8192]{0}', space=vmem, size = 0x2000, scoped, tag = 'output window, operand 4']
    #allocation26 [shape = 'u8[8192]{0}', space=vmem, size = 0x2000, scoped, tag = 'output window, operand 5']
    #allocation27 [shape = 's32[2]{0}', space=sflag, size = 0x8, scoped, tag = 'scoped memory for tpu_custom_call.1']
    #allocation28 [shape = 'u8[4096]{0}', space=vmem, size = 0x1000, scoped, tag = 'output window, operand 6']
    #allocation29 [shape = 'u8[4096]{0}', space=vmem, size = 0x1000, scoped, tag = 'output window, operand 7']
    #allocation30 [shape = 's32[2]{0}', space=sflag, size = 0x8, scoped, tag = 'scoped memory for tpu_custom_call.1']
    %23 = vsyncpa [#allocation3], 0
    %s24 = scalar_lea.sflag [#allocation3], 1
    %25 = vsyncpa %s24, 0
    %26 = vsyncpa [#allocation6], 0
    %27 = vsyncpa [#allocation9], 0
    %28 = vsyncpa [#allocation12], 0
    %29 = vsyncpa [#allocation15], 0
    %30 = vsyncpa [#allocation18], 0
    %31 = vsyncpa [#allocation4], 0
    %s32 = scalar_lea.sflag [#allocation4], 1
    %33 = vsyncpa %s32, 0
    %34 = vsyncpa [#allocation21], 0
    %s35 = scalar_lea.sflag [#allocation21], 1
    %36 = vsyncpa %s35, 0
    %37 = vsyncpa [#allocation24], 0
    %s38 = scalar_lea.sflag [#allocation24], 1
    %39 = vsyncpa %s38, 0
    %40 = vsyncpa [#allocation27], 0
    %s41 = scalar_lea.sflag [#allocation27], 1
    %42 = vsyncpa %s41, 0
    %43 = vsyncpa [#allocation30], 0
    %s44 = scalar_lea.sflag [#allocation30], 1
    %45 = vsyncpa %s44, 0
    loop: start=0, step=1, limit=4
    $region2: #{tpu_custom_call.1} parent=1 // loop_pre_header
      _
    $region3: #{tpu_custom_call.1} parent=1 // loop_header
      %s47 = sphi 0, %s51
      %p48 = scmp.ge.s32.totalorder %s47, 4
      %s57 = sphi 0, %s59
      %s60 = sphi 0, %s57
      %s61 = sphi 0, %s60
      %s77 = sphi 0, %s61
      %s81 = sphi 0, %s81
      %s83 = sphi 0, %s81
      %s84 = sphi 0, %s83
      %s98 = sphi 0, %s84
      %s102 = sphi 0, %s102
      %s104 = sphi 0, %s102
      %s105 = sphi 0, %s104
      %s119 = sphi 0, %s105
      %s123 = sphi 0, %s123
      %s125 = sphi 0, %s123
      %s126 = sphi 0, %s125
      %s140 = sphi 0, %s126
      %s144 = sphi 0, %s144
      %s146 = sphi 0, %s144
      %s147 = sphi 0, %s146
      %s161 = sphi 0, %s147
      %s165 = sphi 0, %s165
      %s167 = sphi 0, %s165
      %s168 = sphi 0, %s167
      %s182 = sphi 0, %s168
      %s186 = sphi 0, %s186
      %s188 = sphi 0, %s186
      %s189 = sphi 0, %s188
      %s203 = sphi 0, %s189
      %s207 = sphi 0, %s207
      %s209 = sphi 0, %s207
      %s210 = sphi 0, %s209
      %s224 = sphi 0, %s210
      %s228 = sphi 0, %s228
      %s230 = sphi 0, %s228
      %s231 = sphi 0, %s230
      %s245 = sphi 0, %s231
      %s249 = sphi 0, %s249
      %s251 = sphi 0, %s249
      %s252 = sphi 0, %s251
      %s266 = sphi 0, %s252
      %s272 = sphi 0, %s274
      %s275 = sphi 0, %s272
      %s276 = sphi 0, %s275
      %s292 = sphi 0, %s276
      %s298 = sphi 0, %s300
      %s301 = sphi 0, %s298
      %s302 = sphi 0, %s301
      %s318 = sphi 0, %s302
      %s324 = sphi 0, %s326
      %s327 = sphi 0, %s324
      %s328 = sphi 0, %s327
      %s344 = sphi 0, %s328
      %s350 = sphi 0, %s352
      %s353 = sphi 0, %s350
      %s354 = sphi 0, %s353
      %s370 = sphi 0, %s354
      %s376 = sphi 0, %s378
      %s379 = sphi 0, %s376
      %s380 = sphi 0, %s379
      %s396 = sphi 0, %s380
      %s402 = sphi 0, %s404
      %s405 = sphi 0, %s402
      %s406 = sphi 0, %s405
      %s422 = sphi 0, %s406
      %s428 = sphi 0, %s430
      %s431 = sphi 0, %s428
      %s432 = sphi 0, %s431
      %s448 = sphi 0, %s432
      %s454 = sphi 0, %s456
      %s457 = sphi 0, %s454
      %s458 = sphi 0, %s457
      %s474 = sphi 0, %s458
    $region4: #{tpu_custom_call.1} parent=1 // loop_header_branch
      %50 = sbr.rel (%p48) target = $region8
    $region5: #{tpu_custom_call.1} parent=1 // loop_body
      %s52 = ssub.s32 %s47, 1
      %s53 = ssub.s32 %s47, 2
      %s54 = sadd.s32 %s47, 1
      %s55 = ssub.s32 %s47, %s54
      %p56 = scmp.eq.s32.totalorder %s55, 0
      %s58 = sadd.s32 %s57, 1
      %s59 = scalar_select %p56, %s57, %s58
      %p62 = pneg %p56
      %p63 = scmp.eq.s32.totalorder %s47, 1
      %p64 = por %p62, %p63
      %p65 = scmp.ne.s32.totalorder %s57, %s60
      %p66 = scmp.eq.s32.totalorder %s47, 0
      %p67 = por %p65, %p66
      %p68 = scmp.ne.s32.totalorder %s57, %s60
      %p69 = scmp.eq.s32.totalorder %s52, 1
      %p70 = por %p68, %p69
      %p71 = scmp.ne.s32.totalorder %s60, %s61
      %p72 = scmp.eq.s32.totalorder %s52, 0
      %p73 = por %p71, %p72
      %p74 = scmp.ne.s32.totalorder %s60, %s61
      %p75 = scmp.eq.s32.totalorder %s53, 1
      %p76 = por %p74, %p75
      %p78 = scmp.ne.s32.totalorder %s61, %s77
      %p79 = scmp.eq.s32.totalorder %s53, 0
      %p80 = por %p78, %p79
      %s82 = sadd.s32 %s81, 1
      %p85 = scmp.eq.s32.totalorder %s47, 1
      %p86 = scmp.ne.s32.totalorder %s81, %s83
      %p87 = scmp.eq.s32.totalorder %s47, 0
      %p88 = por %p86, %p87
      %p89 = scmp.ne.s32.totalorder %s81, %s83
      %p90 = scmp.eq.s32.totalorder %s52, 1
      %p91 = por %p89, %p90
      %p92 = scmp.ne.s32.totalorder %s83, %s84
      %p93 = scmp.eq.s32.totalorder %s52, 0
      %p94 = por %p92, %p93
      %p95 = scmp.ne.s32.totalorder %s83, %s84
      %p96 = scmp.eq.s32.totalorder %s53, 1
      %p97 = por %p95, %p96
      %p99 = scmp.ne.s32.totalorder %s84, %s98
      %p100 = scmp.eq.s32.totalorder %s53, 0
      %p101 = por %p99, %p100
      %s103 = sadd.s32 %s102, 1
      %p106 = scmp.eq.s32.totalorder %s47, 1
      %p107 = scmp.ne.s32.totalorder %s102, %s104
      %p108 = scmp.eq.s32.totalorder %s47, 0
      %p109 = por %p107, %p108
      %p110 = scmp.ne.s32.totalorder %s102, %s104
      %p111 = scmp.eq.s32.totalorder %s52, 1
      %p112 = por %p110, %p111
      %p113 = scmp.ne.s32.totalorder %s104, %s105
      %p114 = scmp.eq.s32.totalorder %s52, 0
      %p115 = por %p113, %p114
      %p116 = scmp.ne.s32.totalorder %s104, %s105
      %p117 = scmp.eq.s32.totalorder %s53, 1
      %p118 = por %p116, %p117
      %p120 = scmp.ne.s32.totalorder %s105, %s119
      %p121 = scmp.eq.s32.totalorder %s53, 0
      %p122 = por %p120, %p121
      %s124 = sadd.s32 %s123, 1
      %p127 = scmp.eq.s32.totalorder %s47, 1
      %p128 = scmp.ne.s32.totalorder %s123, %s125
      %p129 = scmp.eq.s32.totalorder %s47, 0
      %p130 = por %p128, %p129
      %p131 = scmp.ne.s32.totalorder %s123, %s125
      %p132 = scmp.eq.s32.totalorder %s52, 1
      %p133 = por %p131, %p132
      %p134 = scmp.ne.s32.totalorder %s125, %s126
      %p135 = scmp.eq.s32.totalorder %s52, 0
      %p136 = por %p134, %p135
      %p137 = scmp.ne.s32.totalorder %s125, %s126
      %p138 = scmp.eq.s32.totalorder %s53, 1
      %p139 = por %p137, %p138
      %p141 = scmp.ne.s32.totalorder %s126, %s140
      %p142 = scmp.eq.s32.totalorder %s53, 0
      %p143 = por %p141, %p142
      %s145 = sadd.s32 %s144, 1
      %p148 = scmp.eq.s32.totalorder %s47, 1
      %p149 = scmp.ne.s32.totalorder %s144, %s146
      %p150 = scmp.eq.s32.totalorder %s47, 0
      %p151 = por %p149, %p150
      %p152 = scmp.ne.s32.totalorder %s144, %s146
      %p153 = scmp.eq.s32.totalorder %s52, 1
      %p154 = por %p152, %p153
      %p155 = scmp.ne.s32.totalorder %s146, %s147
      %p156 = scmp.eq.s32.totalorder %s52, 0
      %p157 = por %p155, %p156
      %p158 = scmp.ne.s32.totalorder %s146, %s147
      %p159 = scmp.eq.s32.totalorder %s53, 1
      %p160 = por %p158, %p159
      %p162 = scmp.ne.s32.totalorder %s147, %s161
      %p163 = scmp.eq.s32.totalorder %s53, 0
      %p164 = por %p162, %p163
      %s166 = sadd.s32 %s165, 1
      %p169 = scmp.eq.s32.totalorder %s47, 1
      %p170 = scmp.ne.s32.totalorder %s165, %s167
      %p171 = scmp.eq.s32.totalorder %s47, 0
      %p172 = por %p170, %p171
      %p173 = scmp.ne.s32.totalorder %s165, %s167
      %p174 = scmp.eq.s32.totalorder %s52, 1
      %p175 = por %p173, %p174
      %p176 = scmp.ne.s32.totalorder %s167, %s168
      %p177 = scmp.eq.s32.totalorder %s52, 0
      %p178 = por %p176, %p177
      %p179 = scmp.ne.s32.totalorder %s167, %s168
      %p180 = scmp.eq.s32.totalorder %s53, 1
      %p181 = por %p179, %p180
      %p183 = scmp.ne.s32.totalorder %s168, %s182
      %p184 = scmp.eq.s32.totalorder %s53, 0
      %p185 = por %p183, %p184
      %s187 = sadd.s32 %s186, 1
      %p190 = scmp.eq.s32.totalorder %s47, 1
      %p191 = scmp.ne.s32.totalorder %s186, %s188
      %p192 = scmp.eq.s32.totalorder %s47, 0
      %p193 = por %p191, %p192
      %p194 = scmp.ne.s32.totalorder %s186, %s188
      %p195 = scmp.eq.s32.totalorder %s52, 1
      %p196 = por %p194, %p195
      %p197 = scmp.ne.s32.totalorder %s188, %s189
      %p198 = scmp.eq.s32.totalorder %s52, 0
      %p199 = por %p197, %p198
      %p200 = scmp.ne.s32.totalorder %s188, %s189
      %p201 = scmp.eq.s32.totalorder %s53, 1
      %p202 = por %p200, %p201
      %p204 = scmp.ne.s32.totalorder %s189, %s203
      %p205 = scmp.eq.s32.totalorder %s53, 0
      %p206 = por %p204, %p205
      %s208 = sadd.s32 %s207, 1
      %p211 = scmp.eq.s32.totalorder %s47, 1
      %p212 = scmp.ne.s32.totalorder %s207, %s209
      %p213 = scmp.eq.s32.totalorder %s47, 0
      %p214 = por %p212, %p213
      %p215 = scmp.ne.s32.totalorder %s207, %s209
      %p216 = scmp.eq.s32.totalorder %s52, 1
      %p217 = por %p215, %p216
      %p218 = scmp.ne.s32.totalorder %s209, %s210
      %p219 = scmp.eq.s32.totalorder %s52, 0
      %p220 = por %p218, %p219
      %p221 = scmp.ne.s32.totalorder %s209, %s210
      %p222 = scmp.eq.s32.totalorder %s53, 1
      %p223 = por %p221, %p222
      %p225 = scmp.ne.s32.totalorder %s210, %s224
      %p226 = scmp.eq.s32.totalorder %s53, 0
      %p227 = por %p225, %p226
      %s229 = sadd.s32 %s228, 1
      %p232 = scmp.eq.s32.totalorder %s47, 1
      %p233 = scmp.ne.s32.totalorder %s228, %s230
      %p234 = scmp.eq.s32.totalorder %s47, 0
      %p235 = por %p233, %p234
      %p236 = scmp.ne.s32.totalorder %s228, %s230
      %p237 = scmp.eq.s32.totalorder %s52, 1
      %p238 = por %p236, %p237
      %p239 = scmp.ne.s32.totalorder %s230, %s231
      %p240 = scmp.eq.s32.totalorder %s52, 0
      %p241 = por %p239, %p240
      %p242 = scmp.ne.s32.totalorder %s230, %s231
      %p243 = scmp.eq.s32.totalorder %s53, 1
      %p244 = por %p242, %p243
      %p246 = scmp.ne.s32.totalorder %s231, %s245
      %p247 = scmp.eq.s32.totalorder %s53, 0
      %p248 = por %p246, %p247
      %s250 = sadd.s32 %s249, 1
      %p253 = scmp.eq.s32.totalorder %s47, 1
      %p254 = scmp.ne.s32.totalorder %s249, %s251
      %p255 = scmp.eq.s32.totalorder %s47, 0
      %p256 = por %p254, %p255
      %p257 = scmp.ne.s32.totalorder %s249, %s251
      %p258 = scmp.eq.s32.totalorder %s52, 1
      %p259 = por %p257, %p258
      %p260 = scmp.ne.s32.totalorder %s251, %s252
      %p261 = scmp.eq.s32.totalorder %s52, 0
      %p262 = por %p260, %p261
      %p263 = scmp.ne.s32.totalorder %s251, %s252
      %p264 = scmp.eq.s32.totalorder %s53, 1
      %p265 = por %p263, %p264
      %p267 = scmp.ne.s32.totalorder %s252, %s266
      %p268 = scmp.eq.s32.totalorder %s53, 0
      %p269 = por %p267, %p268
      %s270 = ssub.s32 %s47, %s54
      %p271 = scmp.eq.s32.totalorder %s270, 0
      %s273 = sadd.s32 %s272, 1
      %s274 = scalar_select %p271, %s272, %s273
      %p277 = pneg %p271
      %p278 = scmp.eq.s32.totalorder %s47, 1
      %p279 = por %p277, %p278
      %p280 = scmp.ne.s32.totalorder %s272, %s275
      %p281 = scmp.eq.s32.totalorder %s47, 0
      %p282 = por %p280, %p281
      %p283 = scmp.ne.s32.totalorder %s272, %s275
      %p284 = scmp.eq.s32.totalorder %s52, 1
      %p285 = por %p283, %p284
      %p286 = scmp.ne.s32.totalorder %s275, %s276
      %p287 = scmp.eq.s32.totalorder %s52, 0
      %p288 = por %p286, %p287
      %p289 = scmp.ne.s32.totalorder %s275, %s276
      %p290 = scmp.eq.s32.totalorder %s53, 1
      %p291 = por %p289, %p290
      %p293 = scmp.ne.s32.totalorder %s276, %s292
      %p294 = scmp.eq.s32.totalorder %s53, 0
      %p295 = por %p293, %p294
      %s296 = ssub.s32 %s47, %s54
      %p297 = scmp.eq.s32.totalorder %s296, 0
      %s299 = sadd.s32 %s298, 1
      %s300 = scalar_select %p297, %s298, %s299
      %p303 = pneg %p297
      %p304 = scmp.eq.s32.totalorder %s47, 1
      %p305 = por %p303, %p304
      %p306 = scmp.ne.s32.totalorder %s298, %s301
      %p307 = scmp.eq.s32.totalorder %s47, 0
      %p308 = por %p306, %p307
      %p309 = scmp.ne.s32.totalorder %s298, %s301
      %p310 = scmp.eq.s32.totalorder %s52, 1
      %p311 = por %p309, %p310
      %p312 = scmp.ne.s32.totalorder %s301, %s302
      %p313 = scmp.eq.s32.totalorder %s52, 0
      %p314 = por %p312, %p313
      %p315 = scmp.ne.s32.totalorder %s301, %s302
      %p316 = scmp.eq.s32.totalorder %s53, 1
      %p317 = por %p315, %p316
      %p319 = scmp.ne.s32.totalorder %s302, %s318
      %p320 = scmp.eq.s32.totalorder %s53, 0
      %p321 = por %p319, %p320
      %s322 = ssub.s32 %s47, %s54
      %p323 = scmp.eq.s32.totalorder %s322, 0
      %s325 = sadd.s32 %s324, 1
      %s326 = scalar_select %p323, %s324, %s325
      %p329 = pneg %p323
      %p330 = scmp.eq.s32.totalorder %s47, 1
      %p331 = por %p329, %p330
      %p332 = scmp.ne.s32.totalorder %s324, %s327
      %p333 = scmp.eq.s32.totalorder %s47, 0
      %p334 = por %p332, %p333
      %p335 = scmp.ne.s32.totalorder %s324, %s327
      %p336 = scmp.eq.s32.totalorder %s52, 1
      %p337 = por %p335, %p336
      %p338 = scmp.ne.s32.totalorder %s327, %s328
      %p339 = scmp.eq.s32.totalorder %s52, 0
      %p340 = por %p338, %p339
      %p341 = scmp.ne.s32.totalorder %s327, %s328
      %p342 = scmp.eq.s32.totalorder %s53, 1
      %p343 = por %p341, %p342
      %p345 = scmp.ne.s32.totalorder %s328, %s344
      %p346 = scmp.eq.s32.totalorder %s53, 0
      %p347 = por %p345, %p346
      %s348 = ssub.s32 %s47, %s54
      %p349 = scmp.eq.s32.totalorder %s348, 0
      %s351 = sadd.s32 %s350, 1
      %s352 = scalar_select %p349, %s350, %s351
      %p355 = pneg %p349
      %p356 = scmp.eq.s32.totalorder %s47, 1
      %p357 = por %p355, %p356
      %p358 = scmp.ne.s32.totalorder %s350, %s353
      %p359 = scmp.eq.s32.totalorder %s47, 0
      %p360 = por %p358, %p359
      %p361 = scmp.ne.s32.totalorder %s350, %s353
      %p362 = scmp.eq.s32.totalorder %s52, 1
      %p363 = por %p361, %p362
      %p364 = scmp.ne.s32.totalorder %s353, %s354
      %p365 = scmp.eq.s32.totalorder %s52, 0
      %p366 = por %p364, %p365
      %p367 = scmp.ne.s32.totalorder %s353, %s354
      %p368 = scmp.eq.s32.totalorder %s53, 1
      %p369 = por %p367, %p368
      %p371 = scmp.ne.s32.totalorder %s354, %s370
      %p372 = scmp.eq.s32.totalorder %s53, 0
      %p373 = por %p371, %p372
      %s374 = ssub.s32 %s47, %s54
      %p375 = scmp.eq.s32.totalorder %s374, 0
      %s377 = sadd.s32 %s376, 1
      %s378 = scalar_select %p375, %s376, %s377
      %p381 = pneg %p375
      %p382 = scmp.eq.s32.totalorder %s47, 1
      %p383 = por %p381, %p382
      %p384 = scmp.ne.s32.totalorder %s376, %s379
      %p385 = scmp.eq.s32.totalorder %s47, 0
      %p386 = por %p384, %p385
      %p387 = scmp.ne.s32.totalorder %s376, %s379
      %p388 = scmp.eq.s32.totalorder %s52, 1
      %p389 = por %p387, %p388
      %p390 = scmp.ne.s32.totalorder %s379, %s380
      %p391 = scmp.eq.s32.totalorder %s52, 0
      %p392 = por %p390, %p391
      %p393 = scmp.ne.s32.totalorder %s379, %s380
      %p394 = scmp.eq.s32.totalorder %s53, 1
      %p395 = por %p393, %p394
      %p397 = scmp.ne.s32.totalorder %s380, %s396
      %p398 = scmp.eq.s32.totalorder %s53, 0
      %p399 = por %p397, %p398
      %s400 = ssub.s32 %s47, %s54
      %p401 = scmp.eq.s32.totalorder %s400, 0
      %s403 = sadd.s32 %s402, 1
      %s404 = scalar_select %p401, %s402, %s403
      %p407 = pneg %p401
      %p408 = scmp.eq.s32.totalorder %s47, 1
      %p409 = por %p407, %p408
      %p410 = scmp.ne.s32.totalorder %s402, %s405
      %p411 = scmp.eq.s32.totalorder %s47, 0
      %p412 = por %p410, %p411
      %p413 = scmp.ne.s32.totalorder %s402, %s405
      %p414 = scmp.eq.s32.totalorder %s52, 1
      %p415 = por %p413, %p414
      %p416 = scmp.ne.s32.totalorder %s405, %s406
      %p417 = scmp.eq.s32.totalorder %s52, 0
      %p418 = por %p416, %p417
      %p419 = scmp.ne.s32.totalorder %s405, %s406
      %p420 = scmp.eq.s32.totalorder %s53, 1
      %p421 = por %p419, %p420
      %p423 = scmp.ne.s32.totalorder %s406, %s422
      %p424 = scmp.eq.s32.totalorder %s53, 0
      %p425 = por %p423, %p424
      %s426 = ssub.s32 %s47, %s54
      %p427 = scmp.eq.s32.totalorder %s426, 0
      %s429 = sadd.s32 %s428, 1
      %s430 = scalar_select %p427, %s428, %s429
      %p433 = pneg %p427
      %p434 = scmp.eq.s32.totalorder %s47, 1
      %p435 = por %p433, %p434
      %p436 = scmp.ne.s32.totalorder %s428, %s431
      %p437 = scmp.eq.s32.totalorder %s47, 0
      %p438 = por %p436, %p437
      %p439 = scmp.ne.s32.totalorder %s428, %s431
      %p440 = scmp.eq.s32.totalorder %s52, 1
      %p441 = por %p439, %p440
      %p442 = scmp.ne.s32.totalorder %s431, %s432
      %p443 = scmp.eq.s32.totalorder %s52, 0
      %p444 = por %p442, %p443
      %p445 = scmp.ne.s32.totalorder %s431, %s432
      %p446 = scmp.eq.s32.totalorder %s53, 1
      %p447 = por %p445, %p446
      %p449 = scmp.ne.s32.totalorder %s432, %s448
      %p450 = scmp.eq.s32.totalorder %s53, 0
      %p451 = por %p449, %p450
      %s452 = ssub.s32 %s47, %s54
      %p453 = scmp.eq.s32.totalorder %s452, 0
      %s455 = sadd.s32 %s454, 1
      %s456 = scalar_select %p453, %s454, %s455
      %p459 = pneg %p453
      %p460 = scmp.eq.s32.totalorder %s47, 1
      %p461 = por %p459, %p460
      %p462 = scmp.ne.s32.totalorder %s454, %s457
      %p463 = scmp.eq.s32.totalorder %s47, 0
      %p464 = por %p462, %p463
      %p465 = scmp.ne.s32.totalorder %s454, %s457
      %p466 = scmp.eq.s32.totalorder %s52, 1
      %p467 = por %p465, %p466
      %p468 = scmp.ne.s32.totalorder %s457, %s458
      %p469 = scmp.eq.s32.totalorder %s52, 0
      %p470 = por %p468, %p469
      %p471 = scmp.ne.s32.totalorder %s457, %s458
      %p472 = scmp.eq.s32.totalorder %s53, 1
      %p473 = por %p471, %p472
      %p475 = scmp.ne.s32.totalorder %s458, %s474
      %p476 = scmp.eq.s32.totalorder %s53, 0
      %p477 = por %p475, %p476
      %p478 = scmp.le.s32.totalorder 1, %s47
      %p479 = scmp.lt.s32.totalorder %s47, 3
      %p480 = pnand %p478, %p479
      %p481 = pneg %p480
      // Predicated region
      $region9: #{tpu_custom_call.1} parent=5 // pred_check
        _
      $region10: #{tpu_custom_call.1} parent=5 // pred_check_branch
        %483 = sbr.rel (%p480) target = $region12
      $region11: #{tpu_custom_call.1} parent=5 // pred_region
        %s484 = ssub.s32 %s47, 1
        // Predicated region
        $region13: #{tpu_custom_call.1} parent=11 // pred_check
          %p485 = pneg %p94
        $region14: #{tpu_custom_call.1} parent=11 // pred_check_branch
          %487 = sbr.rel (%p485) target = $region16
        $region15: #{tpu_custom_call.1} parent=11 // pred_region
          %s489 = ssub.s32 288, 288
          %490 = vsyncadd [#allocation6], %s489
          %s491 = sshll.u32 [#allocation5], 4
          %s492 = int_to_ptr.vmem [resolvable:$true] %s491
          %497 = dma.hbm_to_vmem [thread:$0]  %s1, 288, %s492, [#allocation6], 32, 32, 2
        $region16: #{tpu_custom_call.1} parent=11 // pred_fallthru
          _
        // Predicated region
        $region17: #{tpu_custom_call.1} parent=11 // pred_check
          %p498 = pneg %p115
        $region18: #{tpu_custom_call.1} parent=11 // pred_check_branch
          %500 = sbr.rel (%p498) target = $region20
        $region19: #{tpu_custom_call.1} parent=11 // pred_region
          %s502 = ssub.s32 128, 128
          %503 = vsyncadd [#allocation6], %s502
          %s505 = sshll.u32 [#allocation7], 4
          %s506 = int_to_ptr.vmem [resolvable:$true] %s505
          %508 = dma.hbm_to_vmem [thread:$0]  %s2, 128, %s506, [#allocation6]
        $region20: #{tpu_custom_call.1} parent=11 // pred_fallthru
          _
        // Predicated region
        $region21: #{tpu_custom_call.1} parent=11 // pred_check
          %p509 = pneg %p136
        $region22: #{tpu_custom_call.1} parent=11 // pred_check_branch
          %511 = sbr.rel (%p509) target = $region24
        $region23: #{tpu_custom_call.1} parent=11 // pred_region
          %s513 = ssub.s32 128, 128
          %514 = vsyncadd [#allocation9], %s513
          %s516 = sshll.u32 [#allocation8], 4
          %s517 = int_to_ptr.vmem [resolvable:$true] %s516
          %519 = dma.hbm_to_vmem [thread:$0]  %s3, 128, %s517, [#allocation9]
        $region24: #{tpu_custom_call.1} parent=11 // pred_fallthru
          _
        // Predicated region
        $region25: #{tpu_custom_call.1} parent=11 // pred_check
          %p520 = pneg %p157
        $region26: #{tpu_custom_call.1} parent=11 // pred_check_branch
          %522 = sbr.rel (%p520) target = $region28
        $region27: #{tpu_custom_call.1} parent=11 // pred_region
          %s524 = ssub.s32 64, 64
          %525 = vsyncadd [#allocation9], %s524
          %s527 = sshll.u32 [#allocation10], 4
          %s528 = int_to_ptr.vmem [resolvable:$true] %s527
          %530 = dma.hbm_to_vmem [thread:$0]  %s4, 64, %s528, [#allocation9]
        $region28: #{tpu_custom_call.1} parent=11 // pred_fallthru
          _
        // Predicated region
        $region29: #{tpu_custom_call.1} parent=11 // pred_check
          %p531 = pneg %p178
        $region30: #{tpu_custom_call.1} parent=11 // pred_check_branch
          %533 = sbr.rel (%p531) target = $region32
        $region31: #{tpu_custom_call.1} parent=11 // pred_region
          %s535 = ssub.s32 64, 64
          %536 = vsyncadd [#allocation12], %s535
          %s538 = sshll.u32 [#allocation11], 4
          %s539 = int_to_ptr.vmem [resolvable:$true] %s538
          %541 = dma.hbm_to_vmem [thread:$0]  %s5, 64, %s539, [#allocation12]
        $region32: #{tpu_custom_call.1} parent=11 // pred_fallthru
          _
        // Predicated region
        $region33: #{tpu_custom_call.1} parent=11 // pred_check
          %p542 = pneg %p199
        $region34: #{tpu_custom_call.1} parent=11 // pred_check_branch
          %544 = sbr.rel (%p542) target = $region36
        $region35: #{tpu_custom_call.1} parent=11 // pred_region
          %s546 = ssub.s32 1152, 1152
          %547 = vsyncadd [#allocation12], %s546
          %s548 = sshll.u32 [#allocation13], 4
          %s549 = int_to_ptr.vmem [resolvable:$true] %s548
          %554 = dma.hbm_to_vmem [thread:$0]  %s6, 1152, %s549, [#allocation12], 128, 128, 8
        $region36: #{tpu_custom_call.1} parent=11 // pred_fallthru
          _
        // Predicated region
        $region37: #{tpu_custom_call.1} parent=11 // pred_check
          %p555 = pneg %p220
        $region38: #{tpu_custom_call.1} parent=11 // pred_check_branch
          %557 = sbr.rel (%p555) target = $region40
        $region39: #{tpu_custom_call.1} parent=11 // pred_region
          %s559 = ssub.s32 128, 128
          %560 = vsyncadd [#allocation15], %s559
          %s562 = sshll.u32 [#allocation14], 4
          %s563 = int_to_ptr.vmem [resolvable:$true] %s562
          %565 = dma.hbm_to_vmem [thread:$0]  %s7, 128, %s563, [#allocation15]
        $region40: #{tpu_custom_call.1} parent=11 // pred_fallthru
          _
        // Predicated region
        $region41: #{tpu_custom_call.1} parent=11 // pred_check
          %p566 = pneg %p241
        $region42: #{tpu_custom_call.1} parent=11 // pred_check_branch
          %568 = sbr.rel (%p566) target = $region44
        $region43: #{tpu_custom_call.1} parent=11 // pred_region
          %s570 = ssub.s32 576, 576
          %571 = vsyncadd [#allocation15], %s570
          %s572 = sshll.u32 [#allocation16], 4
          %s573 = int_to_ptr.vmem [resolvable:$true] %s572
          %578 = dma.hbm_to_vmem [thread:$0]  %s8, 576, %s573, [#allocation15], 64, 64, 4
        $region44: #{tpu_custom_call.1} parent=11 // pred_fallthru
          _
        // Predicated region
        $region45: #{tpu_custom_call.1} parent=11 // pred_check
          %p579 = pneg %p262
        $region46: #{tpu_custom_call.1} parent=11 // pred_check_branch
          %581 = sbr.rel (%p579) target = $region48
        $region47: #{tpu_custom_call.1} parent=11 // pred_region
          %s583 = ssub.s32 64, 64
          %584 = vsyncadd [#allocation18], %s583
          %s586 = sshll.u32 [#allocation17], 4
          %s587 = int_to_ptr.vmem [resolvable:$true] %s586
          %589 = dma.hbm_to_vmem [thread:$0]  %s9, 64, %s587, [#allocation18]
        $region48: #{tpu_custom_call.1} parent=11 // pred_fallthru
          _
      $region12: #{tpu_custom_call.1} parent=5 // pred_fallthru
        _
      %p590 = scmp.lt.s32.totalorder %s47, 2
      // Predicated region
      $region49: #{tpu_custom_call.1} parent=5 // pred_check
        %p591 = pneg %p590
      $region50: #{tpu_custom_call.1} parent=5 // pred_check_branch
        %593 = sbr.rel (%p591) target = $region52
      $region51: #{tpu_custom_call.1} parent=5 // pred_region
        // Predicated region
        $region53: #{tpu_custom_call.1} parent=51 // pred_check
          %p594 = pneg %p67
        $region54: #{tpu_custom_call.1} parent=51 // pred_check_branch
          %596 = sbr.rel (%p594) target = $region56
        $region55: #{tpu_custom_call.1} parent=51 // pred_region
          %s597 = sand.u32 %s57, 1
          %s598 = scalar_lea.sflag [#allocation3], %s597
          %s599 = sand.u32 %s57, 1
          %s600 = smul.addr %s599, 8
          %s601 = scalar_lea.vmem [#allocation2], %s600
          %s603 = ssub.s32 128, 128
          %604 = vsyncadd %s598, %s603
          %s605 = smul.addr %s47, 2
          %s606 = smul.addr %s605, 64
          %s607 = scalar_lea.hbm %s0, %s606
          %s609 = sshll.u32 %s601, 4
          %s610 = int_to_ptr.vmem [resolvable:$true] %s609
          %612 = dma.hbm_to_vmem [thread:$0]  %s607, 128, %s610, %s598
        $region56: #{tpu_custom_call.1} parent=51 // pred_fallthru
          _
      $region52: #{tpu_custom_call.1} parent=5 // pred_fallthru
        _
      %p613 = scmp.le.s32.totalorder 1, %s47
      %p614 = scmp.lt.s32.totalorder %s47, 3
      %p615 = pnand %p613, %p614
      %p616 = pneg %p615
      // Predicated region
      $region57: #{tpu_custom_call.1} parent=5 // pred_check
        _
      $region58: #{tpu_custom_call.1} parent=5 // pred_check_branch
        %618 = sbr.rel (%p615) target = $region60
      $region59: #{tpu_custom_call.1} parent=5 // pred_region
        %s619 = ssub.s32 %s47, 1
        %s620 = sand.u32 %s60, 1
        %s621 = scalar_lea.sflag [#allocation3], %s620
        %s622 = sand.u32 %s60, 1
        %s623 = smul.addr %s622, 8
        %s624 = scalar_lea.vmem [#allocation2], %s623
        // Predicated region
        $region61: #{tpu_custom_call.1} parent=59 // pred_check
          %p625 = pneg %p73
        $region62: #{tpu_custom_call.1} parent=59 // pred_check_branch
          %627 = sbr.rel (%p625) target = $region64
        $region63: #{tpu_custom_call.1} parent=59 // pred_region
          %628 = dma.done %s621, 128
        $region64: #{tpu_custom_call.1} parent=59 // pred_fallthru
          _
        // Predicated region
        $region65: #{tpu_custom_call.1} parent=59 // pred_check
          %p629 = pneg %p94
        $region66: #{tpu_custom_call.1} parent=59 // pred_check_branch
          %631 = sbr.rel (%p629) target = $region68
        $region67: #{tpu_custom_call.1} parent=59 // pred_region
          %632 = dma.done [#allocation6], 288
        $region68: #{tpu_custom_call.1} parent=59 // pred_fallthru
          _
        // Predicated region
        $region69: #{tpu_custom_call.1} parent=59 // pred_check
          %p633 = pneg %p115
        $region70: #{tpu_custom_call.1} parent=59 // pred_check_branch
          %635 = sbr.rel (%p633) target = $region72
        $region71: #{tpu_custom_call.1} parent=59 // pred_region
          %636 = dma.done [#allocation6], 128
        $region72: #{tpu_custom_call.1} parent=59 // pred_fallthru
          _
        // Predicated region
        $region73: #{tpu_custom_call.1} parent=59 // pred_check
          %p637 = pneg %p136
        $region74: #{tpu_custom_call.1} parent=59 // pred_check_branch
          %639 = sbr.rel (%p637) target = $region76
        $region75: #{tpu_custom_call.1} parent=59 // pred_region
          %640 = dma.done [#allocation9], 128
        $region76: #{tpu_custom_call.1} parent=59 // pred_fallthru
          _
        // Predicated region
        $region77: #{tpu_custom_call.1} parent=59 // pred_check
          %p641 = pneg %p157
        $region78: #{tpu_custom_call.1} parent=59 // pred_check_branch
          %643 = sbr.rel (%p641) target = $region80
        $region79: #{tpu_custom_call.1} parent=59 // pred_region
          %644 = dma.done [#allocation9], 64
        $region80: #{tpu_custom_call.1} parent=59 // pred_fallthru
          _
        // Predicated region
        $region81: #{tpu_custom_call.1} parent=59 // pred_check
          %p645 = pneg %p178
        $region82: #{tpu_custom_call.1} parent=59 // pred_check_branch
          %647 = sbr.rel (%p645) target = $region84
        $region83: #{tpu_custom_call.1} parent=59 // pred_region
          %648 = dma.done [#allocation12], 64
        $region84: #{tpu_custom_call.1} parent=59 // pred_fallthru
          _
        // Predicated region
        $region85: #{tpu_custom_call.1} parent=59 // pred_check
          %p649 = pneg %p199
        $region86: #{tpu_custom_call.1} parent=59 // pred_check_branch
          %651 = sbr.rel (%p649) target = $region88
        $region87: #{tpu_custom_call.1} parent=59 // pred_region
          %652 = dma.done [#allocation12], 1152
        $region88: #{tpu_custom_call.1} parent=59 // pred_fallthru
          _
        // Predicated region
        $region89: #{tpu_custom_call.1} parent=59 // pred_check
          %p653 = pneg %p220
        $region90: #{tpu_custom_call.1} parent=59 // pred_check_branch
          %655 = sbr.rel (%p653) target = $region92
        $region91: #{tpu_custom_call.1} parent=59 // pred_region
          %656 = dma.done [#allocation15], 128
        $region92: #{tpu_custom_call.1} parent=59 // pred_fallthru
          _
        // Predicated region
        $region93: #{tpu_custom_call.1} parent=59 // pred_check
          %p657 = pneg %p241
        $region94: #{tpu_custom_call.1} parent=59 // pred_check_branch
          %659 = sbr.rel (%p657) target = $region96
        $region95: #{tpu_custom_call.1} parent=59 // pred_region
          %660 = dma.done [#allocation15], 576
        $region96: #{tpu_custom_call.1} parent=59 // pred_fallthru
          _
        // Predicated region
        $region97: #{tpu_custom_call.1} parent=59 // pred_check
          %p661 = pneg %p262
        $region98: #{tpu_custom_call.1} parent=59 // pred_check_branch
          %663 = sbr.rel (%p661) target = $region100
        $region99: #{tpu_custom_call.1} parent=59 // pred_region
          %664 = dma.done [#allocation18], 64
        $region100: #{tpu_custom_call.1} parent=59 // pred_fallthru
          _
        %s665 = sand.u32 %s60, 1
        %s666 = scalar_lea.sflag [#allocation3], %s665
        %s667 = sand.u32 %s60, 1
        %s668 = smul.addr %s667, 8
        %s669 = scalar_lea.vmem [#allocation2], %s668
        %p670 = pneg %p73
        %p671 = pneg %p70
        %p672 = pneg %p94
        %p673 = pneg %p91
        %p674 = pneg %p115
        %p675 = pneg %p112
        %p676 = pneg %p136
        %p677 = pneg %p133
        %p678 = pneg %p157
        %p679 = pneg %p154
        %p680 = pneg %p178
        %p681 = pneg %p175
        %p682 = pneg %p199
        %p683 = pneg %p196
        %p684 = pneg %p220
        %p685 = pneg %p217
        %p686 = pneg %p241
        %p687 = pneg %p238
        %p688 = pneg %p262
        %p689 = pneg %p259
        %p690 = pneg %p288
        %p691 = pneg %p285
        %s692 = sand.u32 %s275, 1
        %s693 = scalar_lea.sflag [#allocation4], %s692
        %s694 = sand.u32 %s275, 1
        %s695 = smul.addr %s694, 4
        %s696 = scalar_lea.vmem [#allocation19], %s695
        %p697 = pneg %p314
        %p698 = pneg %p311
        %s699 = sand.u32 %s52, 1
        %s700 = scalar_lea.sflag [#allocation21], %s699
        %s701 = sand.u32 %s301, 1
        %s702 = smul.addr %s701, 4
        %s703 = scalar_lea.vmem [#allocation20], %s702
        %p704 = pneg %p340
        %p705 = pneg %p337
        %s706 = sand.u32 %s52, 1
        %s707 = scalar_lea.sflag [#allocation21], %s706
        %s708 = sand.u32 %s327, 1
        %s709 = smul.addr %s708, 4
        %s710 = scalar_lea.vmem [#allocation22], %s709
        %p711 = pneg %p366
        %p712 = pneg %p363
        %s713 = sand.u32 %s52, 1
        %s714 = scalar_lea.sflag [#allocation24], %s713
        %s715 = sand.u32 %s353, 1
        %s716 = smul.addr %s715, 4
        %s717 = scalar_lea.vmem [#allocation23], %s716
        %p718 = pneg %p392
        %p719 = pneg %p389
        %s720 = sand.u32 %s52, 1
        %s721 = scalar_lea.sflag [#allocation24], %s720
        %s722 = sand.u32 %s379, 1
        %s723 = smul.addr %s722, 8
        %s724 = scalar_lea.vmem [#allocation25], %s723
        %p725 = pneg %p418
        %p726 = pneg %p415
        %s727 = sand.u32 %s52, 1
        %s728 = scalar_lea.sflag [#allocation27], %s727
        %s729 = sand.u32 %s405, 1
        %s730 = smul.addr %s729, 8
        %s731 = scalar_lea.vmem [#allocation26], %s730
        %p732 = pneg %p444
        %p733 = pneg %p441
        %s734 = sand.u32 %s52, 1
        %s735 = scalar_lea.sflag [#allocation27], %s734
        %s736 = sand.u32 %s431, 1
        %s737 = smul.addr %s736, 4
        %s738 = scalar_lea.vmem [#allocation28], %s737
        %p739 = pneg %p470
        %p740 = pneg %p467
        %s741 = sand.u32 %s457, 1
        %s742 = scalar_lea.sflag [#allocation30], %s741
        %s743 = sand.u32 %s457, 1
        %s744 = smul.addr %s743, 4
        %s745 = scalar_lea.vmem [#allocation29], %s744
        %v746 = vld [vmem:[%s624] sm:$0xff]
        %v747 = vld [vmem:[#allocation7] sm:$0xff]
        %v748 = vld [vmem:[#allocation8] sm:$0xff]
        %750 = vset.pattern.permute.xlu0 0
        %751 = vperm.xlu0 %750, %v748
        %v752 = vpop.permute.xlu0 %751
        %v755 = vcombine.high %v746, %v746
        %vm756 = vcmask 31744
        %v758 = vsel %vm756, %v747, 0
        %vm760 = vcmask 1043456
        %v761 = vsel %vm760, %v746, 0
        %v763 = vsel %vm760, %v755, 0
        %765 = vmatprep.subr.mxu0 %v763
        %766 = vmatpush1.msra.mxu0 %v761
        %767 = vmatprep.subr.mxu0 0.0
        %768 = vmatpush1.msra.mxu0 0.0
        %769 = vmatprep.subr.mxu0 0.0
        %770 = vmatpush1.msra.mxu0 0.0
        %771 = vmatprep.subr.mxu0 0.0
        %772 = vmatpush1.msra.mxu0 0.0
        %773 = vmatprep.subr.mxu0 0.0
        %774 = vmatpush1.msra.mxu0 0.0
        %775 = vmatprep.subr.mxu0 0.0
        %776 = vmatpush1.msra.mxu0 0.0
        %777 = vmatprep.subr.mxu0 0.0
        %778 = vmatpush1.msra.mxu0 0.0
        %779 = vmatprep.subr.mxu0 0.0
        %780 = vmatpush1.msra.mxu0 0.0
        %781 = vmatprep.subr.mxu0 0.0
        %782 = vmatpush1.msra.mxu0 0.0
        %783 = vmatprep.subr.mxu0 0.0
        %784 = vmatpush1.msra.mxu0 0.0
        %785 = vmatprep.subr.mxu0 0.0
        %786 = vmatpush1.msra.mxu0 0.0
        %787 = vmatprep.subr.mxu0 0.0
        %788 = vmatpush1.msra.mxu0 0.0
        %789 = vmatprep.subr.mxu0 0.0
        %790 = vmatpush1.msra.mxu0 0.0
        %791 = vmatprep.subr.mxu0 0.0
        %792 = vmatpush1.msra.mxu0 0.0
        %793 = vmatprep.subr.mxu0 0.0
        %794 = vmatpush1.msra.mxu0 0.0
        %795 = vmatprep.subr.mxu0 0.0
        %796 = vmatpush1.msra.mxu0 0.0
        %797 = vmatprep.subr.mxu0 0.0
        %798 = vmatpush1.msra.mxu0 0.0
        %799 = vmatprep.subr.mxu0 0.0
        %800 = vmatpush1.msra.mxu0 0.0
        %801 = vmatprep.subr.mxu0 0.0
        %802 = vmatpush1.msra.mxu0 0.0
        %803 = vmatprep.subr.mxu0 0.0
        %804 = vmatpush1.msra.mxu0 0.0
        %805 = vmatprep.subr.mxu0 0.0
        %806 = vmatpush1.msra.mxu0 0.0
        %807 = vmatprep.subr.mxu0 0.0
        %808 = vmatpush1.msra.mxu0 0.0
        %809 = vmatprep.subr.mxu0 0.0
        %810 = vmatpush1.msra.mxu0 0.0
        %811 = vmatprep.subr.mxu0 0.0
        %812 = vmatpush1.msra.mxu0 0.0
        %813 = vmatprep.subr.mxu0 0.0
        %814 = vmatpush1.msra.mxu0 0.0
        %815 = vmatprep.subr.mxu0 0.0
        %816 = vmatpush1.msra.mxu0 0.0
        %817 = vmatprep.subr.mxu0 0.0
        %818 = vmatpush1.msra.mxu0 0.0
        %819 = vmatprep.subr.mxu0 0.0
        %820 = vmatpush1.msra.mxu0 0.0
        %821 = vmatprep.subr.mxu0 0.0
        %822 = vmatpush1.msra.mxu0 0.0
        %823 = vmatprep.subr.mxu0 0.0
        %824 = vmatpush1.msra.mxu0 0.0
        %825 = vmatprep.subr.mxu0 0.0
        %826 = vmatpush1.msra.mxu0 0.0
        %827 = vmatprep.subr.mxu0 0.0
        %828 = vmatpush1.msra.mxu0 0.0
        %829 = vmatprep.mubr.f32.mxu0 0.0
        %830 = vmatmul.mubr.f32.gmra.mrb[0].mxu0 %v758
        %v831 = vpop.f32.mrb[0].mxu0
        %v832 = vadd.f32 %v752, %v831
        %v833 = vpop.f32.mrb[0].mxu0
        %v834 = vadd.f32 %v752, %v833
        %835 = vdwg.mxu0
        %v836 = vld [vmem:[#allocation10] sm:$0xf]
        %v837 = vld [vmem:[#allocation11] sm:$0xf]
        %839 = vset.pattern.permute.xlu0 0
        %840 = vperm.xlu0 %839, %v837
        %v841 = vpop.permute.xlu0 %840
        %v844 = vsel %vm756, %v836, 0
        %846 = vmatprep.subr.mxu0 %v763
        %847 = vmatpush1.msra.mxu0 %v761
        %848 = vmatprep.subr.mxu0 0.0
        %849 = vmatpush1.msra.mxu0 0.0
        %850 = vmatprep.subr.mxu0 0.0
        %851 = vmatpush1.msra.mxu0 0.0
        %852 = vmatprep.subr.mxu0 0.0
        %853 = vmatpush1.msra.mxu0 0.0
        %854 = vmatprep.subr.mxu0 0.0
        %855 = vmatpush1.msra.mxu0 0.0
        %856 = vmatprep.subr.mxu0 0.0
        %857 = vmatpush1.msra.mxu0 0.0
        %858 = vmatprep.subr.mxu0 0.0
        %859 = vmatpush1.msra.mxu0 0.0
        %860 = vmatprep.subr.mxu0 0.0
        %861 = vmatpush1.msra.mxu0 0.0
        %862 = vmatprep.subr.mxu0 0.0
        %863 = vmatpush1.msra.mxu0 0.0
        %864 = vmatprep.subr.mxu0 0.0
        %865 = vmatpush1.msra.mxu0 0.0
        %866 = vmatprep.subr.mxu0 0.0
        %867 = vmatpush1.msra.mxu0 0.0
        %868 = vmatprep.subr.mxu0 0.0
        %869 = vmatpush1.msra.mxu0 0.0
        %870 = vmatprep.subr.mxu0 0.0
        %871 = vmatpush1.msra.mxu0 0.0
        %872 = vmatprep.subr.mxu0 0.0
        %873 = vmatpush1.msra.mxu0 0.0
        %874 = vmatprep.subr.mxu0 0.0
        %875 = vmatpush1.msra.mxu0 0.0
        %876 = vmatprep.subr.mxu0 0.0
        %877 = vmatpush1.msra.mxu0 0.0
        %878 = vmatprep.subr.mxu0 0.0
        %879 = vmatpush1.msra.mxu0 0.0
        %880 = vmatprep.subr.mxu0 0.0
        %881 = vmatpush1.msra.mxu0 0.0
        %882 = vmatprep.subr.mxu0 0.0
        %883 = vmatpush1.msra.mxu0 0.0
        %884 = vmatprep.subr.mxu0 0.0
        %885 = vmatpush1.msra.mxu0 0.0
        %886 = vmatprep.subr.mxu0 0.0
        %887 = vmatpush1.msra.mxu0 0.0
        %888 = vmatprep.subr.mxu0 0.0
        %889 = vmatpush1.msra.mxu0 0.0
        %890 = vmatprep.subr.mxu0 0.0
        %891 = vmatpush1.msra.mxu0 0.0
        %892 = vmatprep.subr.mxu0 0.0
        %893 = vmatpush1.msra.mxu0 0.0
        %894 = vmatprep.subr.mxu0 0.0
        %895 = vmatpush1.msra.mxu0 0.0
        %896 = vmatprep.subr.mxu0 0.0
        %897 = vmatpush1.msra.mxu0 0.0
        %898 = vmatprep.subr.mxu0 0.0
        %899 = vmatpush1.msra.mxu0 0.0
        %900 = vmatprep.subr.mxu0 0.0
        %901 = vmatpush1.msra.mxu0 0.0
        %902 = vmatprep.subr.mxu0 0.0
        %903 = vmatpush1.msra.mxu0 0.0
        %904 = vmatprep.subr.mxu0 0.0
        %905 = vmatpush1.msra.mxu0 0.0
        %906 = vmatprep.subr.mxu0 0.0
        %907 = vmatpush1.msra.mxu0 0.0
        %908 = vmatprep.subr.mxu0 0.0
        %909 = vmatpush1.msra.mxu0 0.0
        %910 = vmatprep.mubr.f32.mxu0 0.0
        %911 = vmatmul.mubr.f32.gmra.mrb[0].mxu0 %v844
        %v912 = vpop.f32.mrb[0].mxu0
        %v913 = vadd.f32 %v841, %v912
        %v914 = vpop.f32.mrb[0].mxu0
        %v915 = vadd.f32 %v841, %v914
        %916 = vdwg.mxu0
        %918 = vrot.lane.b32.xlu0 %v746, 17
        %v919 = vpop.permute.xlu0 %918
        %920 = vrot.lane.b32.xlu0 %v755, 17
        %v921 = vpop.permute.xlu0 %920
        %v922 = vlaneseq
        %v923 = vand.u32 %v922, 127
        %vm924 = vcmp.lt.s32.totalorder %v923, 17
        %v925 = vsel %vm924, %v919, %v921
        %v926 = vsel %vm924, %v921, %v919
        %v927 = vld [vmem:[#allocation5] sm:$0x3]
        %v929 = vlaneseq
        %v930 = vshrl.u32 %v929, 7
        %v931 = vsub.s32 0, %v930
        %v932 = vrot.slane %v927, %v931
        %v933 = vlaneseq
        %v934 = vshrl.u32 %v933, 7
        %v935 = vsub.s32 1, %v934
        %v936 = vrot.slane %v927, %v935
        %v939 = vmul.f32 %v926, %v932
        %v940 = vmul.f32 %v925, %v936
        %v941 = vld [vmem:[#allocation13] sm:$0xff]
        %v942 = vld [vmem:[#allocation16] sm:$0xf]
        %943 = vrot.lane.b32.xlu0 %v746, 16
        %v944 = vpop.permute.xlu0 %943
        %945 = vrot.lane.b32.xlu0 %v755, 16
        %v946 = vpop.permute.xlu0 %945
        %vm947 = vcmp.lt.s32.totalorder %v923, 16
        %v948 = vsel %vm947, %v944, %v946
        %v949 = vsel %vm947, %v946, %v944
        %s950 = scalar_lea.vmem [#allocation5], 2
        %v951 = vld [vmem:[%s950] sm:$0x3]
        %v953 = vlaneseq
        %v954 = vshrl.u32 %v953, 7
        %v955 = vsub.s32 0, %v954
        %v956 = vrot.slane %v951, %v955
        %v957 = vlaneseq
        %v958 = vshrl.u32 %v957, 7
        %v959 = vsub.s32 1, %v958
        %v960 = vrot.slane %v951, %v959
        %v963 = vmul.f32 %v949, %v956
        %v964 = vmul.f32 %v948, %v960
        %s965 = scalar_lea.vmem [#allocation13], 8
        %v966 = vld [vmem:[%s965] sm:$0xff]
        %v968 = vsel %vm756, %v966, 0
        %v971 = vsel %vm760, %v963, 0
        %v974 = vsel %vm760, %v964, 0
        %976 = vmatprep.subr.mxu0 %v974
        %977 = vmatpush1.msra.mxu0 %v971
        %978 = vmatprep.subr.mxu0 0.0
        %979 = vmatpush1.msra.mxu0 0.0
        %980 = vmatprep.subr.mxu0 0.0
        %981 = vmatpush1.msra.mxu0 0.0
        %982 = vmatprep.subr.mxu0 0.0
        %983 = vmatpush1.msra.mxu0 0.0
        %984 = vmatprep.subr.mxu0 0.0
        %985 = vmatpush1.msra.mxu0 0.0
        %986 = vmatprep.subr.mxu0 0.0
        %987 = vmatpush1.msra.mxu0 0.0
        %988 = vmatprep.subr.mxu0 0.0
        %989 = vmatpush1.msra.mxu0 0.0
        %990 = vmatprep.subr.mxu0 0.0
        %991 = vmatpush1.msra.mxu0 0.0
        %992 = vmatprep.subr.mxu0 0.0
        %993 = vmatpush1.msra.mxu0 0.0
        %994 = vmatprep.subr.mxu0 0.0
        %995 = vmatpush1.msra.mxu0 0.0
        %996 = vmatprep.subr.mxu0 0.0
        %997 = vmatpush1.msra.mxu0 0.0
        %998 = vmatprep.subr.mxu0 0.0
        %999 = vmatpush1.msra.mxu0 0.0
        %1000 = vmatprep.subr.mxu0 0.0
        %1001 = vmatpush1.msra.mxu0 0.0
        %1002 = vmatprep.subr.mxu0 0.0
        %1003 = vmatpush1.msra.mxu0 0.0
        %1004 = vmatprep.subr.mxu0 0.0
        %1005 = vmatpush1.msra.mxu0 0.0
        %1006 = vmatprep.subr.mxu0 0.0
        %1007 = vmatpush1.msra.mxu0 0.0
        %1008 = vmatprep.subr.mxu0 0.0
        %1009 = vmatpush1.msra.mxu0 0.0
        %1010 = vmatprep.subr.mxu0 0.0
        %1011 = vmatpush1.msra.mxu0 0.0
        %1012 = vmatprep.subr.mxu0 0.0
        %1013 = vmatpush1.msra.mxu0 0.0
        %1014 = vmatprep.subr.mxu0 0.0
        %1015 = vmatpush1.msra.mxu0 0.0
        %1016 = vmatprep.subr.mxu0 0.0
        %1017 = vmatpush1.msra.mxu0 0.0
        %1018 = vmatprep.subr.mxu0 0.0
        %1019 = vmatpush1.msra.mxu0 0.0
        %1020 = vmatprep.subr.mxu0 0.0
        %1021 = vmatpush1.msra.mxu0 0.0
        %1022 = vmatprep.subr.mxu0 0.0
        %1023 = vmatpush1.msra.mxu0 0.0
        %1024 = vmatprep.subr.mxu0 0.0
        %1025 = vmatpush1.msra.mxu0 0.0
        %1026 = vmatprep.subr.mxu0 0.0
        %1027 = vmatpush1.msra.mxu0 0.0
        %1028 = vmatprep.subr.mxu0 0.0
        %1029 = vmatpush1.msra.mxu0 0.0
        %1030 = vmatprep.subr.mxu0 0.0
        %1031 = vmatpush1.msra.mxu0 0.0
        %1032 = vmatprep.subr.mxu0 0.0
        %1033 = vmatpush1.msra.mxu0 0.0
        %1034 = vmatprep.subr.mxu0 0.0
        %1035 = vmatpush1.msra.mxu0 0.0
        %1036 = vmatprep.subr.mxu0 0.0
        %1037 = vmatpush1.msra.mxu0 0.0
        %1038 = vmatprep.subr.mxu0 0.0
        %1039 = vmatpush1.msra.mxu0 0.0
        %1040 = vmatprep.mubr.f32.mxu0 0.0
        %1041 = vmatmul.mubr.f32.gmra.mrb[0].mxu0 %v968
        %v1042 = vpop.f32.mrb[0].mxu0
        %v1043 = vadd.f32 0.0, %v1042
        %v1044 = vpop.f32.mrb[0].mxu0
        %v1045 = vadd.f32 0.0, %v1044
        %1046 = vdwg.mxu0
        %v1048 = vsel %vm756, %v941, 0
        %v1051 = vsel %vm760, %v939, 0
        %v1054 = vsel %vm760, %v940, 0
        %1056 = vmatprep.subr.mxu0 %v1054
        %1057 = vmatpush1.msra.mxu0 %v1051
        %1058 = vmatprep.subr.mxu0 0.0
        %1059 = vmatpush1.msra.mxu0 0.0
        %1060 = vmatprep.subr.mxu0 0.0
        %1061 = vmatpush1.msra.mxu0 0.0
        %1062 = vmatprep.subr.mxu0 0.0
        %1063 = vmatpush1.msra.mxu0 0.0
        %1064 = vmatprep.subr.mxu0 0.0
        %1065 = vmatpush1.msra.mxu0 0.0
        %1066 = vmatprep.subr.mxu0 0.0
        %1067 = vmatpush1.msra.mxu0 0.0
        %1068 = vmatprep.subr.mxu0 0.0
        %1069 = vmatpush1.msra.mxu0 0.0
        %1070 = vmatprep.subr.mxu0 0.0
        %1071 = vmatpush1.msra.mxu0 0.0
        %1072 = vmatprep.subr.mxu0 0.0
        %1073 = vmatpush1.msra.mxu0 0.0
        %1074 = vmatprep.subr.mxu0 0.0
        %1075 = vmatpush1.msra.mxu0 0.0
        %1076 = vmatprep.subr.mxu0 0.0
        %1077 = vmatpush1.msra.mxu0 0.0
        %1078 = vmatprep.subr.mxu0 0.0
        %1079 = vmatpush1.msra.mxu0 0.0
        %1080 = vmatprep.subr.mxu0 0.0
        %1081 = vmatpush1.msra.mxu0 0.0
        %1082 = vmatprep.subr.mxu0 0.0
        %1083 = vmatpush1.msra.mxu0 0.0
        %1084 = vmatprep.subr.mxu0 0.0
        %1085 = vmatpush1.msra.mxu0 0.0
        %1086 = vmatprep.subr.mxu0 0.0
        %1087 = vmatpush1.msra.mxu0 0.0
        %1088 = vmatprep.subr.mxu0 0.0
        %1089 = vmatpush1.msra.mxu0 0.0
        %1090 = vmatprep.subr.mxu0 0.0
        %1091 = vmatpush1.msra.mxu0 0.0
        %1092 = vmatprep.subr.mxu0 0.0
        %1093 = vmatpush1.msra.mxu0 0.0
        %1094 = vmatprep.subr.mxu0 0.0
        %1095 = vmatpush1.msra.mxu0 0.0
        %1096 = vmatprep.subr.mxu0 0.0
        %1097 = vmatpush1.msra.mxu0 0.0
        %1098 = vmatprep.subr.mxu0 0.0
        %1099 = vmatpush1.msra.mxu0 0.0
        %1100 = vmatprep.subr.mxu0 0.0
        %1101 = vmatpush1.msra.mxu0 0.0
        %1102 = vmatprep.subr.mxu0 0.0
        %1103 = vmatpush1.msra.mxu0 0.0
        %1104 = vmatprep.subr.mxu0 0.0
        %1105 = vmatpush1.msra.mxu0 0.0
        %1106 = vmatprep.subr.mxu0 0.0
        %1107 = vmatpush1.msra.mxu0 0.0
        %1108 = vmatprep.subr.mxu0 0.0
        %1109 = vmatpush1.msra.mxu0 0.0
        %1110 = vmatprep.subr.mxu0 0.0
        %1111 = vmatpush1.msra.mxu0 0.0
        %1112 = vmatprep.subr.mxu0 0.0
        %1113 = vmatpush1.msra.mxu0 0.0
        %1114 = vmatprep.subr.mxu0 0.0
        %1115 = vmatpush1.msra.mxu0 0.0
        %1116 = vmatprep.subr.mxu0 0.0
        %1117 = vmatpush1.msra.mxu0 0.0
        %1118 = vmatprep.subr.mxu0 0.0
        %1119 = vmatpush1.msra.mxu0 0.0
        %1120 = vmatprep.mubr.f32.mxu0 0.0
        %1121 = vmatmul.mubr.f32.gmra.mrb[0].mxu0 %v1048
        %v1122 = vpop.f32.mrb[0].mxu0
        %v1123 = vadd.f32 %v1043, %v1122
        %v1124 = vpop.f32.mrb[0].mxu0
        %v1125 = vadd.f32 %v1045, %v1124
        %1126 = vdwg.mxu0
        %s1127 = scalar_lea.vmem [#allocation16], 4
        %v1128 = vld [vmem:[%s1127] sm:$0xf]
        %v1130 = vsel %vm756, %v1128, 0
        %1132 = vmatprep.subr.mxu0 %v974
        %1133 = vmatpush1.msra.mxu0 %v971
        %1134 = vmatprep.subr.mxu0 0.0
        %1135 = vmatpush1.msra.mxu0 0.0
        %1136 = vmatprep.subr.mxu0 0.0
        %1137 = vmatpush1.msra.mxu0 0.0
        %1138 = vmatprep.subr.mxu0 0.0
        %1139 = vmatpush1.msra.mxu0 0.0
        %1140 = vmatprep.subr.mxu0 0.0
        %1141 = vmatpush1.msra.mxu0 0.0
        %1142 = vmatprep.subr.mxu0 0.0
        %1143 = vmatpush1.msra.mxu0 0.0
        %1144 = vmatprep.subr.mxu0 0.0
        %1145 = vmatpush1.msra.mxu0 0.0
        %1146 = vmatprep.subr.mxu0 0.0
        %1147 = vmatpush1.msra.mxu0 0.0
        %1148 = vmatprep.subr.mxu0 0.0
        %1149 = vmatpush1.msra.mxu0 0.0
        %1150 = vmatprep.subr.mxu0 0.0
        %1151 = vmatpush1.msra.mxu0 0.0
        %1152 = vmatprep.subr.mxu0 0.0
        %1153 = vmatpush1.msra.mxu0 0.0
        %1154 = vmatprep.subr.mxu0 0.0
        %1155 = vmatpush1.msra.mxu0 0.0
        %1156 = vmatprep.subr.mxu0 0.0
        %1157 = vmatpush1.msra.mxu0 0.0
        %1158 = vmatprep.subr.mxu0 0.0
        %1159 = vmatpush1.msra.mxu0 0.0
        %1160 = vmatprep.subr.mxu0 0.0
        %1161 = vmatpush1.msra.mxu0 0.0
        %1162 = vmatprep.subr.mxu0 0.0
        %1163 = vmatpush1.msra.mxu0 0.0
        %1164 = vmatprep.subr.mxu0 0.0
        %1165 = vmatpush1.msra.mxu0 0.0
        %1166 = vmatprep.subr.mxu0 0.0
        %1167 = vmatpush1.msra.mxu0 0.0
        %1168 = vmatprep.subr.mxu0 0.0
        %1169 = vmatpush1.msra.mxu0 0.0
        %1170 = vmatprep.subr.mxu0 0.0
        %1171 = vmatpush1.msra.mxu0 0.0
        %1172 = vmatprep.subr.mxu0 0.0
        %1173 = vmatpush1.msra.mxu0 0.0
        %1174 = vmatprep.subr.mxu0 0.0
        %1175 = vmatpush1.msra.mxu0 0.0
        %1176 = vmatprep.subr.mxu0 0.0
        %1177 = vmatpush1.msra.mxu0 0.0
        %1178 = vmatprep.subr.mxu0 0.0
        %1179 = vmatpush1.msra.mxu0 0.0
        %1180 = vmatprep.subr.mxu0 0.0
        %1181 = vmatpush1.msra.mxu0 0.0
        %1182 = vmatprep.subr.mxu0 0.0
        %1183 = vmatpush1.msra.mxu0 0.0
        %1184 = vmatprep.subr.mxu0 0.0
        %1185 = vmatpush1.msra.mxu0 0.0
        %1186 = vmatprep.subr.mxu0 0.0
        %1187 = vmatpush1.msra.mxu0 0.0
        %1188 = vmatprep.subr.mxu0 0.0
        %1189 = vmatpush1.msra.mxu0 0.0
        %1190 = vmatprep.subr.mxu0 0.0
        %1191 = vmatpush1.msra.mxu0 0.0
        %1192 = vmatprep.subr.mxu0 0.0
        %1193 = vmatpush1.msra.mxu0 0.0
        %1194 = vmatprep.subr.mxu0 0.0
        %1195 = vmatpush1.msra.mxu0 0.0
        %1196 = vmatprep.mubr.f32.mxu0 0.0
        %1197 = vmatmul.mubr.f32.gmra.mrb[0].mxu0 %v1130
        %v1198 = vpop.f32.mrb[0].mxu0
        %v1199 = vadd.f32 0.0, %v1198
        %v1200 = vpop.f32.mrb[0].mxu0
        %v1201 = vadd.f32 0.0, %v1200
        %1202 = vdwg.mxu0
        %v1204 = vsel %vm756, %v942, 0
        %1206 = vmatprep.subr.mxu0 %v1054
        %1207 = vmatpush1.msra.mxu0 %v1051
        %1208 = vmatprep.subr.mxu0 0.0
        %1209 = vmatpush1.msra.mxu0 0.0
        %1210 = vmatprep.subr.mxu0 0.0
        %1211 = vmatpush1.msra.mxu0 0.0
        %1212 = vmatprep.subr.mxu0 0.0
        %1213 = vmatpush1.msra.mxu0 0.0
        %1214 = vmatprep.subr.mxu0 0.0
        %1215 = vmatpush1.msra.mxu0 0.0
        %1216 = vmatprep.subr.mxu0 0.0
        %1217 = vmatpush1.msra.mxu0 0.0
        %1218 = vmatprep.subr.mxu0 0.0
        %1219 = vmatpush1.msra.mxu0 0.0
        %1220 = vmatprep.subr.mxu0 0.0
        %1221 = vmatpush1.msra.mxu0 0.0
        %1222 = vmatprep.subr.mxu0 0.0
        %1223 = vmatpush1.msra.mxu0 0.0
        %1224 = vmatprep.subr.mxu0 0.0
        %1225 = vmatpush1.msra.mxu0 0.0
        %1226 = vmatprep.subr.mxu0 0.0
        %1227 = vmatpush1.msra.mxu0 0.0
        %1228 = vmatprep.subr.mxu0 0.0
        %1229 = vmatpush1.msra.mxu0 0.0
        %1230 = vmatprep.subr.mxu0 0.0
        %1231 = vmatpush1.msra.mxu0 0.0
        %1232 = vmatprep.subr.mxu0 0.0
        %1233 = vmatpush1.msra.mxu0 0.0
        %1234 = vmatprep.subr.mxu0 0.0
        %1235 = vmatpush1.msra.mxu0 0.0
        %1236 = vmatprep.subr.mxu0 0.0
        %1237 = vmatpush1.msra.mxu0 0.0
        %1238 = vmatprep.subr.mxu0 0.0
        %1239 = vmatpush1.msra.mxu0 0.0
        %1240 = vmatprep.subr.mxu0 0.0
        %1241 = vmatpush1.msra.mxu0 0.0
        %1242 = vmatprep.subr.mxu0 0.0
        %1243 = vmatpush1.msra.mxu0 0.0
        %1244 = vmatprep.subr.mxu0 0.0
        %1245 = vmatpush1.msra.mxu0 0.0
        %1246 = vmatprep.subr.mxu0 0.0
        %1247 = vmatpush1.msra.mxu0 0.0
        %1248 = vmatprep.subr.mxu0 0.0
        %1249 = vmatpush1.msra.mxu0 0.0
        %1250 = vmatprep.subr.mxu0 0.0
        %1251 = vmatpush1.msra.mxu0 0.0
        %1252 = vmatprep.subr.mxu0 0.0
        %1253 = vmatpush1.msra.mxu0 0.0
        %1254 = vmatprep.subr.mxu0 0.0
        %1255 = vmatpush1.msra.mxu0 0.0
        %1256 = vmatprep.subr.mxu0 0.0
        %1257 = vmatpush1.msra.mxu0 0.0
        %1258 = vmatprep.subr.mxu0 0.0
        %1259 = vmatpush1.msra.mxu0 0.0
        %1260 = vmatprep.subr.mxu0 0.0
        %1261 = vmatpush1.msra.mxu0 0.0
        %1262 = vmatprep.subr.mxu0 0.0
        %1263 = vmatpush1.msra.mxu0 0.0
        %1264 = vmatprep.subr.mxu0 0.0
        %1265 = vmatpush1.msra.mxu0 0.0
        %1266 = vmatprep.subr.mxu0 0.0
        %1267 = vmatpush1.msra.mxu0 0.0
        %1268 = vmatprep.subr.mxu0 0.0
        %1269 = vmatpush1.msra.mxu0 0.0
        %1270 = vmatprep.mubr.f32.mxu0 0.0
        %1271 = vmatmul.mubr.f32.gmra.mrb[0].mxu0 %v1204
        %v1272 = vpop.f32.mrb[0].mxu0
        %v1273 = vadd.f32 %v1199, %v1272
        %v1274 = vpop.f32.mrb[0].mxu0
        %v1275 = vadd.f32 %v1201, %v1274
        %1276 = vdwg.mxu0
        %1277 = vrot.lane.b32.xlu0 %v746, 15
        %v1278 = vpop.permute.xlu0 %1277
        %1279 = vrot.lane.b32.xlu0 %v755, 15
        %v1280 = vpop.permute.xlu0 %1279
        %vm1281 = vcmp.lt.s32.totalorder %v923, 15
        %v1282 = vsel %vm1281, %v1278, %v1280
        %v1283 = vsel %vm1281, %v1280, %v1278
        %s1284 = scalar_lea.vmem [#allocation5], 4
        %v1285 = vld [vmem:[%s1284] sm:$0x3]
        %v1287 = vlaneseq
        %v1288 = vshrl.u32 %v1287, 7
        %v1289 = vsub.s32 0, %v1288
        %v1290 = vrot.slane %v1285, %v1289
        %v1291 = vlaneseq
        %v1292 = vshrl.u32 %v1291, 7
        %v1293 = vsub.s32 1, %v1292
        %v1294 = vrot.slane %v1285, %v1293
        %v1297 = vmul.f32 %v1283, %v1290
        %v1298 = vmul.f32 %v1282, %v1294
        %s1299 = scalar_lea.vmem [#allocation13], 16
        %v1300 = vld [vmem:[%s1299] sm:$0xff]
        %v1302 = vsel %vm756, %v1300, 0
        %v1305 = vsel %vm760, %v1297, 0
        %v1308 = vsel %vm760, %v1298, 0
        %1310 = vmatprep.subr.mxu0 %v1308
        %1311 = vmatpush1.msra.mxu0 %v1305
        %1312 = vmatprep.subr.mxu0 0.0
        %1313 = vmatpush1.msra.mxu0 0.0
        %1314 = vmatprep.subr.mxu0 0.0
        %1315 = vmatpush1.msra.mxu0 0.0
        %1316 = vmatprep.subr.mxu0 0.0
        %1317 = vmatpush1.msra.mxu0 0.0
        %1318 = vmatprep.subr.mxu0 0.0
        %1319 = vmatpush1.msra.mxu0 0.0
        %1320 = vmatprep.subr.mxu0 0.0
        %1321 = vmatpush1.msra.mxu0 0.0
        %1322 = vmatprep.subr.mxu0 0.0
        %1323 = vmatpush1.msra.mxu0 0.0
        %1324 = vmatprep.subr.mxu0 0.0
        %1325 = vmatpush1.msra.mxu0 0.0
        %1326 = vmatprep.subr.mxu0 0.0
        %1327 = vmatpush1.msra.mxu0 0.0
        %1328 = vmatprep.subr.mxu0 0.0
        %1329 = vmatpush1.msra.mxu0 0.0
        %1330 = vmatprep.subr.mxu0 0.0
        %1331 = vmatpush1.msra.mxu0 0.0
        %1332 = vmatprep.subr.mxu0 0.0
        %1333 = vmatpush1.msra.mxu0 0.0
        %1334 = vmatprep.subr.mxu0 0.0
        %1335 = vmatpush1.msra.mxu0 0.0
        %1336 = vmatprep.subr.mxu0 0.0
        %1337 = vmatpush1.msra.mxu0 0.0
        %1338 = vmatprep.subr.mxu0 0.0
        %1339 = vmatpush1.msra.mxu0 0.0
        %1340 = vmatprep.subr.mxu0 0.0
        %1341 = vmatpush1.msra.mxu0 0.0
        %1342 = vmatprep.subr.mxu0 0.0
        %1343 = vmatpush1.msra.mxu0 0.0
        %1344 = vmatprep.subr.mxu0 0.0
        %1345 = vmatpush1.msra.mxu0 0.0
        %1346 = vmatprep.subr.mxu0 0.0
        %1347 = vmatpush1.msra.mxu0 0.0
        %1348 = vmatprep.subr.mxu0 0.0
        %1349 = vmatpush1.msra.mxu0 0.0
        %1350 = vmatprep.subr.mxu0 0.0
        %1351 = vmatpush1.msra.mxu0 0.0
        %1352 = vmatprep.subr.mxu0 0.0
        %1353 = vmatpush1.msra.mxu0 0.0
        %1354 = vmatprep.subr.mxu0 0.0
        %1355 = vmatpush1.msra.mxu0 0.0
        %1356 = vmatprep.subr.mxu0 0.0
        %1357 = vmatpush1.msra.mxu0 0.0
        %1358 = vmatprep.subr.mxu0 0.0
        %1359 = vmatpush1.msra.mxu0 0.0
        %1360 = vmatprep.subr.mxu0 0.0
        %1361 = vmatpush1.msra.mxu0 0.0
        %1362 = vmatprep.subr.mxu0 0.0
        %1363 = vmatpush1.msra.mxu0 0.0
        %1364 = vmatprep.subr.mxu0 0.0
        %1365 = vmatpush1.msra.mxu0 0.0
        %1366 = vmatprep.subr.mxu0 0.0
        %1367 = vmatpush1.msra.mxu0 0.0
        %1368 = vmatprep.subr.mxu0 0.0
        %1369 = vmatpush1.msra.mxu0 0.0
        %1370 = vmatprep.subr.mxu0 0.0
        %1371 = vmatpush1.msra.mxu0 0.0
        %1372 = vmatprep.subr.mxu0 0.0
        %1373 = vmatpush1.msra.mxu0 0.0
        %1374 = vmatprep.mubr.f32.mxu0 0.0
        %1375 = vmatmul.mubr.f32.gmra.mrb[0].mxu0 %v1302
        %v1376 = vpop.f32.mrb[0].mxu0
        %v1377 = vadd.f32 0.0, %v1376
        %v1378 = vpop.f32.mrb[0].mxu0
        %v1379 = vadd.f32 0.0, %v1378
        %1380 = vdwg.mxu0
        %v1381 = vadd.f32 %v1123, %v1377
        %v1382 = vadd.f32 %v1125, %v1379
        %s1383 = scalar_lea.vmem [#allocation16], 8
        %v1384 = vld [vmem:[%s1383] sm:$0xf]
        %v1386 = vsel %vm756, %v1384, 0
        %1388 = vmatprep.subr.mxu0 %v1308
        %1389 = vmatpush1.msra.mxu0 %v1305
        %1390 = vmatprep.subr.mxu0 0.0
        %1391 = vmatpush1.msra.mxu0 0.0
        %1392 = vmatprep.subr.mxu0 0.0
        %1393 = vmatpush1.msra.mxu0 0.0
        %1394 = vmatprep.subr.mxu0 0.0
        %1395 = vmatpush1.msra.mxu0 0.0
        %1396 = vmatprep.subr.mxu0 0.0
        %1397 = vmatpush1.msra.mxu0 0.0
        %1398 = vmatprep.subr.mxu0 0.0
        %1399 = vmatpush1.msra.mxu0 0.0
        %1400 = vmatprep.subr.mxu0 0.0
        %1401 = vmatpush1.msra.mxu0 0.0
        %1402 = vmatprep.subr.mxu0 0.0
        %1403 = vmatpush1.msra.mxu0 0.0
        %1404 = vmatprep.subr.mxu0 0.0
        %1405 = vmatpush1.msra.mxu0 0.0
        %1406 = vmatprep.subr.mxu0 0.0
        %1407 = vmatpush1.msra.mxu0 0.0
        %1408 = vmatprep.subr.mxu0 0.0
        %1409 = vmatpush1.msra.mxu0 0.0
        %1410 = vmatprep.subr.mxu0 0.0
        %1411 = vmatpush1.msra.mxu0 0.0
        %1412 = vmatprep.subr.mxu0 0.0
        %1413 = vmatpush1.msra.mxu0 0.0
        %1414 = vmatprep.subr.mxu0 0.0
        %1415 = vmatpush1.msra.mxu0 0.0
        %1416 = vmatprep.subr.mxu0 0.0
        %1417 = vmatpush1.msra.mxu0 0.0
        %1418 = vmatprep.subr.mxu0 0.0
        %1419 = vmatpush1.msra.mxu0 0.0
        %1420 = vmatprep.subr.mxu0 0.0
        %1421 = vmatpush1.msra.mxu0 0.0
        %1422 = vmatprep.subr.mxu0 0.0
        %1423 = vmatpush1.msra.mxu0 0.0
        %1424 = vmatprep.subr.mxu0 0.0
        %1425 = vmatpush1.msra.mxu0 0.0
        %1426 = vmatprep.subr.mxu0 0.0
        %1427 = vmatpush1.msra.mxu0 0.0
        %1428 = vmatprep.subr.mxu0 0.0
        %1429 = vmatpush1.msra.mxu0 0.0
        %1430 = vmatprep.subr.mxu0 0.0
        %1431 = vmatpush1.msra.mxu0 0.0
        %1432 = vmatprep.subr.mxu0 0.0
        %1433 = vmatpush1.msra.mxu0 0.0
        %1434 = vmatprep.subr.mxu0 0.0
        %1435 = vmatpush1.msra.mxu0 0.0
        %1436 = vmatprep.subr.mxu0 0.0
        %1437 = vmatpush1.msra.mxu0 0.0
        %1438 = vmatprep.subr.mxu0 0.0
        %1439 = vmatpush1.msra.mxu0 0.0
        %1440 = vmatprep.subr.mxu0 0.0
        %1441 = vmatpush1.msra.mxu0 0.0
        %1442 = vmatprep.subr.mxu0 0.0
        %1443 = vmatpush1.msra.mxu0 0.0
        %1444 = vmatprep.subr.mxu0 0.0
        %1445 = vmatpush1.msra.mxu0 0.0
        %1446 = vmatprep.subr.mxu0 0.0
        %1447 = vmatpush1.msra.mxu0 0.0
        %1448 = vmatprep.subr.mxu0 0.0
        %1449 = vmatpush1.msra.mxu0 0.0
        %1450 = vmatprep.subr.mxu0 0.0
        %1451 = vmatpush1.msra.mxu0 0.0
        %1452 = vmatprep.mubr.f32.mxu0 0.0
        %1453 = vmatmul.mubr.f32.gmra.mrb[0].mxu0 %v1386
        %v1454 = vpop.f32.mrb[0].mxu0
        %v1455 = vadd.f32 0.0, %v1454
        %v1456 = vpop.f32.mrb[0].mxu0
        %v1457 = vadd.f32 0.0, %v1456
        %1458 = vdwg.mxu0
        %v1459 = vadd.f32 %v1273, %v1455
        %v1460 = vadd.f32 %v1275, %v1457
        %1461 = vrot.lane.b32.xlu0 %v746, 1
        %v1462 = vpop.permute.xlu0 %1461
        %1463 = vrot.lane.b32.xlu0 %v755, 1
        %v1464 = vpop.permute.xlu0 %1463
        %vm1465 = vcmp.lt.s32.totalorder %v923, 1
        %v1466 = vsel %vm1465, %v1462, %v1464
        %v1467 = vsel %vm1465, %v1464, %v1462
        %s1468 = scalar_lea.vmem [#allocation5], 6
        %v1469 = vld [vmem:[%s1468] sm:$0x3]
        %v1471 = vlaneseq
        %v1472 = vshrl.u32 %v1471, 7
        %v1473 = vsub.s32 0, %v1472
        %v1474 = vrot.slane %v1469, %v1473
        %v1475 = vlaneseq
        %v1476 = vshrl.u32 %v1475, 7
        %v1477 = vsub.s32 1, %v1476
        %v1478 = vrot.slane %v1469, %v1477
        %v1481 = vmul.f32 %v1467, %v1474
        %v1482 = vmul.f32 %v1466, %v1478
        %s1483 = scalar_lea.vmem [#allocation13], 24
        %v1484 = vld [vmem:[%s1483] sm:$0xff]
        %v1486 = vsel %vm756, %v1484, 0
        %v1489 = vsel %vm760, %v1481, 0
        %v1492 = vsel %vm760, %v1482, 0
        %1494 = vmatprep.subr.mxu0 %v1492
        %1495 = vmatpush1.msra.mxu0 %v1489
        %1496 = vmatprep.subr.mxu0 0.0
        %1497 = vmatpush1.msra.mxu0 0.0
        %1498 = vmatprep.subr.mxu0 0.0
        %1499 = vmatpush1.msra.mxu0 0.0
        %1500 = vmatprep.subr.mxu0 0.0
        %1501 = vmatpush1.msra.mxu0 0.0
        %1502 = vmatprep.subr.mxu0 0.0
        %1503 = vmatpush1.msra.mxu0 0.0
        %1504 = vmatprep.subr.mxu0 0.0
        %1505 = vmatpush1.msra.mxu0 0.0
        %1506 = vmatprep.subr.mxu0 0.0
        %1507 = vmatpush1.msra.mxu0 0.0
        %1508 = vmatprep.subr.mxu0 0.0
        %1509 = vmatpush1.msra.mxu0 0.0
        %1510 = vmatprep.subr.mxu0 0.0
        %1511 = vmatpush1.msra.mxu0 0.0
        %1512 = vmatprep.subr.mxu0 0.0
        %1513 = vmatpush1.msra.mxu0 0.0
        %1514 = vmatprep.subr.mxu0 0.0
        %1515 = vmatpush1.msra.mxu0 0.0
        %1516 = vmatprep.subr.mxu0 0.0
        %1517 = vmatpush1.msra.mxu0 0.0
        %1518 = vmatprep.subr.mxu0 0.0
        %1519 = vmatpush1.msra.mxu0 0.0
        %1520 = vmatprep.subr.mxu0 0.0
        %1521 = vmatpush1.msra.mxu0 0.0
        %1522 = vmatprep.subr.mxu0 0.0
        %1523 = vmatpush1.msra.mxu0 0.0
        %1524 = vmatprep.subr.mxu0 0.0
        %1525 = vmatpush1.msra.mxu0 0.0
        %1526 = vmatprep.subr.mxu0 0.0
        %1527 = vmatpush1.msra.mxu0 0.0
        %1528 = vmatprep.subr.mxu0 0.0
        %1529 = vmatpush1.msra.mxu0 0.0
        %1530 = vmatprep.subr.mxu0 0.0
        %1531 = vmatpush1.msra.mxu0 0.0
        %1532 = vmatprep.subr.mxu0 0.0
        %1533 = vmatpush1.msra.mxu0 0.0
        %1534 = vmatprep.subr.mxu0 0.0
        %1535 = vmatpush1.msra.mxu0 0.0
        %1536 = vmatprep.subr.mxu0 0.0
        %1537 = vmatpush1.msra.mxu0 0.0
        %1538 = vmatprep.subr.mxu0 0.0
        %1539 = vmatpush1.msra.mxu0 0.0
        %1540 = vmatprep.subr.mxu0 0.0
        %1541 = vmatpush1.msra.mxu0 0.0
        %1542 = vmatprep.subr.mxu0 0.0
        %1543 = vmatpush1.msra.mxu0 0.0
        %1544 = vmatprep.subr.mxu0 0.0
        %1545 = vmatpush1.msra.mxu0 0.0
        %1546 = vmatprep.subr.mxu0 0.0
        %1547 = vmatpush1.msra.mxu0 0.0
        %1548 = vmatprep.subr.mxu0 0.0
        %1549 = vmatpush1.msra.mxu0 0.0
        %1550 = vmatprep.subr.mxu0 0.0
        %1551 = vmatpush1.msra.mxu0 0.0
        %1552 = vmatprep.subr.mxu0 0.0
        %1553 = vmatpush1.msra.mxu0 0.0
        %1554 = vmatprep.subr.mxu0 0.0
        %1555 = vmatpush1.msra.mxu0 0.0
        %1556 = vmatprep.subr.mxu0 0.0
        %1557 = vmatpush1.msra.mxu0 0.0
        %1558 = vmatprep.mubr.f32.mxu0 0.0
        %1559 = vmatmul.mubr.f32.gmra.mrb[0].mxu0 %v1486
        %v1560 = vpop.f32.mrb[0].mxu0
        %v1561 = vadd.f32 0.0, %v1560
        %v1562 = vpop.f32.mrb[0].mxu0
        %v1563 = vadd.f32 0.0, %v1562
        %1564 = vdwg.mxu0
        %v1565 = vadd.f32 %v1381, %v1561
        %v1566 = vadd.f32 %v1382, %v1563
        %s1567 = scalar_lea.vmem [#allocation16], 12
        %v1568 = vld [vmem:[%s1567] sm:$0xf]
        %v1570 = vsel %vm756, %v1568, 0
        %1572 = vmatprep.subr.mxu0 %v1492
        %1573 = vmatpush1.msra.mxu0 %v1489
        %1574 = vmatprep.subr.mxu0 0.0
        %1575 = vmatpush1.msra.mxu0 0.0
        %1576 = vmatprep.subr.mxu0 0.0
        %1577 = vmatpush1.msra.mxu0 0.0
        %1578 = vmatprep.subr.mxu0 0.0
        %1579 = vmatpush1.msra.mxu0 0.0
        %1580 = vmatprep.subr.mxu0 0.0
        %1581 = vmatpush1.msra.mxu0 0.0
        %1582 = vmatprep.subr.mxu0 0.0
        %1583 = vmatpush1.msra.mxu0 0.0
        %1584 = vmatprep.subr.mxu0 0.0
        %1585 = vmatpush1.msra.mxu0 0.0
        %1586 = vmatprep.subr.mxu0 0.0
        %1587 = vmatpush1.msra.mxu0 0.0
        %1588 = vmatprep.subr.mxu0 0.0
        %1589 = vmatpush1.msra.mxu0 0.0
        %1590 = vmatprep.subr.mxu0 0.0
        %1591 = vmatpush1.msra.mxu0 0.0
        %1592 = vmatprep.subr.mxu0 0.0
        %1593 = vmatpush1.msra.mxu0 0.0
        %1594 = vmatprep.subr.mxu0 0.0
        %1595 = vmatpush1.msra.mxu0 0.0
        %1596 = vmatprep.subr.mxu0 0.0
        %1597 = vmatpush1.msra.mxu0 0.0
        %1598 = vmatprep.subr.mxu0 0.0
        %1599 = vmatpush1.msra.mxu0 0.0
        %1600 = vmatprep.subr.mxu0 0.0
        %1601 = vmatpush1.msra.mxu0 0.0
        %1602 = vmatprep.subr.mxu0 0.0
        %1603 = vmatpush1.msra.mxu0 0.0
        %1604 = vmatprep.subr.mxu0 0.0
        %1605 = vmatpush1.msra.mxu0 0.0
        %1606 = vmatprep.subr.mxu0 0.0
        %1607 = vmatpush1.msra.mxu0 0.0
        %1608 = vmatprep.subr.mxu0 0.0
        %1609 = vmatpush1.msra.mxu0 0.0
        %1610 = vmatprep.subr.mxu0 0.0
        %1611 = vmatpush1.msra.mxu0 0.0
        %1612 = vmatprep.subr.mxu0 0.0
        %1613 = vmatpush1.msra.mxu0 0.0
        %1614 = vmatprep.subr.mxu0 0.0
        %1615 = vmatpush1.msra.mxu0 0.0
        %1616 = vmatprep.subr.mxu0 0.0
        %1617 = vmatpush1.msra.mxu0 0.0
        %1618 = vmatprep.subr.mxu0 0.0
        %1619 = vmatpush1.msra.mxu0 0.0
        %1620 = vmatprep.subr.mxu0 0.0
        %1621 = vmatpush1.msra.mxu0 0.0
        %1622 = vmatprep.subr.mxu0 0.0
        %1623 = vmatpush1.msra.mxu0 0.0
        %1624 = vmatprep.subr.mxu0 0.0
        %1625 = vmatpush1.msra.mxu0 0.0
        %1626 = vmatprep.subr.mxu0 0.0
        %1627 = vmatpush1.msra.mxu0 0.0
        %1628 = vmatprep.subr.mxu0 0.0
        %1629 = vmatpush1.msra.mxu0 0.0
        %1630 = vmatprep.subr.mxu0 0.0
        %1631 = vmatpush1.msra.mxu0 0.0
        %1632 = vmatprep.subr.mxu0 0.0
        %1633 = vmatpush1.msra.mxu0 0.0
        %1634 = vmatprep.subr.mxu0 0.0
        %1635 = vmatpush1.msra.mxu0 0.0
        %1636 = vmatprep.mubr.f32.mxu0 0.0
        %1637 = vmatmul.mubr.f32.gmra.mrb[0].mxu0 %v1570
        %v1638 = vpop.f32.mrb[0].mxu0
        %v1639 = vadd.f32 0.0, %v1638
        %v1640 = vpop.f32.mrb[0].mxu0
        %v1641 = vadd.f32 0.0, %v1640
        %1642 = vdwg.mxu0
        %v1643 = vadd.f32 %v1459, %v1639
        %v1644 = vadd.f32 %v1460, %v1641
        %s1645 = scalar_lea.vmem [#allocation13], 32
        %v1646 = vld [vmem:[%s1645] sm:$0xff]
        %v1648 = vsel %vm756, %v1646, 0
        %1650 = vmatprep.subr.mxu0 %v763
        %1651 = vmatpush1.msra.mxu0 %v761
        %1652 = vmatprep.subr.mxu0 0.0
        %1653 = vmatpush1.msra.mxu0 0.0
        %1654 = vmatprep.subr.mxu0 0.0
        %1655 = vmatpush1.msra.mxu0 0.0
        %1656 = vmatprep.subr.mxu0 0.0
        %1657 = vmatpush1.msra.mxu0 0.0
        %1658 = vmatprep.subr.mxu0 0.0
        %1659 = vmatpush1.msra.mxu0 0.0
        %1660 = vmatprep.subr.mxu0 0.0
        %1661 = vmatpush1.msra.mxu0 0.0
        %1662 = vmatprep.subr.mxu0 0.0
        %1663 = vmatpush1.msra.mxu0 0.0
        %1664 = vmatprep.subr.mxu0 0.0
        %1665 = vmatpush1.msra.mxu0 0.0
        %1666 = vmatprep.subr.mxu0 0.0
        %1667 = vmatpush1.msra.mxu0 0.0
        %1668 = vmatprep.subr.mxu0 0.0
        %1669 = vmatpush1.msra.mxu0 0.0
        %1670 = vmatprep.subr.mxu0 0.0
        %1671 = vmatpush1.msra.mxu0 0.0
        %1672 = vmatprep.subr.mxu0 0.0
        %1673 = vmatpush1.msra.mxu0 0.0
        %1674 = vmatprep.subr.mxu0 0.0
        %1675 = vmatpush1.msra.mxu0 0.0
        %1676 = vmatprep.subr.mxu0 0.0
        %1677 = vmatpush1.msra.mxu0 0.0
        %1678 = vmatprep.subr.mxu0 0.0
        %1679 = vmatpush1.msra.mxu0 0.0
        %1680 = vmatprep.subr.mxu0 0.0
        %1681 = vmatpush1.msra.mxu0 0.0
        %1682 = vmatprep.subr.mxu0 0.0
        %1683 = vmatpush1.msra.mxu0 0.0
        %1684 = vmatprep.subr.mxu0 0.0
        %1685 = vmatpush1.msra.mxu0 0.0
        %1686 = vmatprep.subr.mxu0 0.0
        %1687 = vmatpush1.msra.mxu0 0.0
        %1688 = vmatprep.subr.mxu0 0.0
        %1689 = vmatpush1.msra.mxu0 0.0
        %1690 = vmatprep.subr.mxu0 0.0
        %1691 = vmatpush1.msra.mxu0 0.0
        %1692 = vmatprep.subr.mxu0 0.0
        %1693 = vmatpush1.msra.mxu0 0.0
        %1694 = vmatprep.subr.mxu0 0.0
        %1695 = vmatpush1.msra.mxu0 0.0
        %1696 = vmatprep.subr.mxu0 0.0
        %1697 = vmatpush1.msra.mxu0 0.0
        %1698 = vmatprep.subr.mxu0 0.0
        %1699 = vmatpush1.msra.mxu0 0.0
        %1700 = vmatprep.subr.mxu0 0.0
        %1701 = vmatpush1.msra.mxu0 0.0
        %1702 = vmatprep.subr.mxu0 0.0
        %1703 = vmatpush1.msra.mxu0 0.0
        %1704 = vmatprep.subr.mxu0 0.0
        %1705 = vmatpush1.msra.mxu0 0.0
        %1706 = vmatprep.subr.mxu0 0.0
        %1707 = vmatpush1.msra.mxu0 0.0
        %1708 = vmatprep.subr.mxu0 0.0
        %1709 = vmatpush1.msra.mxu0 0.0
        %1710 = vmatprep.subr.mxu0 0.0
        %1711 = vmatpush1.msra.mxu0 0.0
        %1712 = vmatprep.subr.mxu0 0.0
        %1713 = vmatpush1.msra.mxu0 0.0
        %1714 = vmatprep.mubr.f32.mxu0 0.0
        %1715 = vmatmul.mubr.f32.gmra.mrb[0].mxu0 %v1648
        %v1716 = vpop.f32.mrb[0].mxu0
        %v1717 = vadd.f32 0.0, %v1716
        %v1718 = vpop.f32.mrb[0].mxu0
        %v1719 = vadd.f32 0.0, %v1718
        %1720 = vdwg.mxu0
        %v1721 = vadd.f32 %v1565, %v1717
        %v1722 = vadd.f32 %v1566, %v1719
        %s1723 = scalar_lea.vmem [#allocation16], 16
        %v1724 = vld [vmem:[%s1723] sm:$0xf]
        %v1726 = vsel %vm756, %v1724, 0
        %1728 = vmatprep.subr.mxu0 %v763
        %1729 = vmatpush1.msra.mxu0 %v761
        %1730 = vmatprep.subr.mxu0 0.0
        %1731 = vmatpush1.msra.mxu0 0.0
        %1732 = vmatprep.subr.mxu0 0.0
        %1733 = vmatpush1.msra.mxu0 0.0
        %1734 = vmatprep.subr.mxu0 0.0
        %1735 = vmatpush1.msra.mxu0 0.0
        %1736 = vmatprep.subr.mxu0 0.0
        %1737 = vmatpush1.msra.mxu0 0.0
        %1738 = vmatprep.subr.mxu0 0.0
        %1739 = vmatpush1.msra.mxu0 0.0
        %1740 = vmatprep.subr.mxu0 0.0
        %1741 = vmatpush1.msra.mxu0 0.0
        %1742 = vmatprep.subr.mxu0 0.0
        %1743 = vmatpush1.msra.mxu0 0.0
        %1744 = vmatprep.subr.mxu0 0.0
        %1745 = vmatpush1.msra.mxu0 0.0
        %1746 = vmatprep.subr.mxu0 0.0
        %1747 = vmatpush1.msra.mxu0 0.0
        %1748 = vmatprep.subr.mxu0 0.0
        %1749 = vmatpush1.msra.mxu0 0.0
        %1750 = vmatprep.subr.mxu0 0.0
        %1751 = vmatpush1.msra.mxu0 0.0
        %1752 = vmatprep.subr.mxu0 0.0
        %1753 = vmatpush1.msra.mxu0 0.0
        %1754 = vmatprep.subr.mxu0 0.0
        %1755 = vmatpush1.msra.mxu0 0.0
        %1756 = vmatprep.subr.mxu0 0.0
        %1757 = vmatpush1.msra.mxu0 0.0
        %1758 = vmatprep.subr.mxu0 0.0
        %1759 = vmatpush1.msra.mxu0 0.0
        %1760 = vmatprep.subr.mxu0 0.0
        %1761 = vmatpush1.msra.mxu0 0.0
        %1762 = vmatprep.subr.mxu0 0.0
        %1763 = vmatpush1.msra.mxu0 0.0
        %1764 = vmatprep.subr.mxu0 0.0
        %1765 = vmatpush1.msra.mxu0 0.0
        %1766 = vmatprep.subr.mxu0 0.0
        %1767 = vmatpush1.msra.mxu0 0.0
        %1768 = vmatprep.subr.mxu0 0.0
        %1769 = vmatpush1.msra.mxu0 0.0
        %1770 = vmatprep.subr.mxu0 0.0
        %1771 = vmatpush1.msra.mxu0 0.0
        %1772 = vmatprep.subr.mxu0 0.0
        %1773 = vmatpush1.msra.mxu0 0.0
        %1774 = vmatprep.subr.mxu0 0.0
        %1775 = vmatpush1.msra.mxu0 0.0
        %1776 = vmatprep.subr.mxu0 0.0
        %1777 = vmatpush1.msra.mxu0 0.0
        %1778 = vmatprep.subr.mxu0 0.0
        %1779 = vmatpush1.msra.mxu0 0.0
        %1780 = vmatprep.subr.mxu0 0.0
        %1781 = vmatpush1.msra.mxu0 0.0
        %1782 = vmatprep.subr.mxu0 0.0
        %1783 = vmatpush1.msra.mxu0 0.0
        %1784 = vmatprep.subr.mxu0 0.0
        %1785 = vmatpush1.msra.mxu0 0.0
        %1786 = vmatprep.subr.mxu0 0.0
        %1787 = vmatpush1.msra.mxu0 0.0
        %1788 = vmatprep.subr.mxu0 0.0
        %1789 = vmatpush1.msra.mxu0 0.0
        %1790 = vmatprep.subr.mxu0 0.0
        %1791 = vmatpush1.msra.mxu0 0.0
        %1792 = vmatprep.mubr.f32.mxu0 0.0
        %1793 = vmatmul.mubr.f32.gmra.mrb[0].mxu0 %v1726
        %v1794 = vpop.f32.mrb[0].mxu0
        %v1795 = vadd.f32 0.0, %v1794
        %v1796 = vpop.f32.mrb[0].mxu0
        %v1797 = vadd.f32 0.0, %v1796
        %1798 = vdwg.mxu0
        %v1799 = vadd.f32 %v1643, %v1795
        %v1800 = vadd.f32 %v1644, %v1797
        %1801 = vrot.lane.b32.xlu0 %v746, 127
        %v1802 = vpop.permute.xlu0 %1801
        %1803 = vrot.lane.b32.xlu0 %v755, 127
        %v1804 = vpop.permute.xlu0 %1803
        %vm1805 = vcmp.lt.s32.totalorder %v923, 127
        %v1806 = vsel %vm1805, %v1802, %v1804
        %v1807 = vsel %vm1805, %v1804, %v1802
        %s1808 = scalar_lea.vmem [#allocation5], 10
        %v1809 = vld [vmem:[%s1808] sm:$0x3]
        %v1811 = vlaneseq
        %v1812 = vshrl.u32 %v1811, 7
        %v1813 = vsub.s32 0, %v1812
        %v1814 = vrot.slane %v1809, %v1813
        %v1815 = vlaneseq
        %v1816 = vshrl.u32 %v1815, 7
        %v1817 = vsub.s32 1, %v1816
        %v1818 = vrot.slane %v1809, %v1817
        %v1821 = vmul.f32 %v1806, %v1814
        %v1822 = vmul.f32 %v1807, %v1818
        %s1823 = scalar_lea.vmem [#allocation13], 40
        %v1824 = vld [vmem:[%s1823] sm:$0xff]
        %v1826 = vsel %vm756, %v1824, 0
        %v1829 = vsel %vm760, %v1821, 0
        %v1832 = vsel %vm760, %v1822, 0
        %1834 = vmatprep.subr.mxu0 %v1832
        %1835 = vmatpush1.msra.mxu0 %v1829
        %1836 = vmatprep.subr.mxu0 0.0
        %1837 = vmatpush1.msra.mxu0 0.0
        %1838 = vmatprep.subr.mxu0 0.0
        %1839 = vmatpush1.msra.mxu0 0.0
        %1840 = vmatprep.subr.mxu0 0.0
        %1841 = vmatpush1.msra.mxu0 0.0
        %1842 = vmatprep.subr.mxu0 0.0
        %1843 = vmatpush1.msra.mxu0 0.0
        %1844 = vmatprep.subr.mxu0 0.0
        %1845 = vmatpush1.msra.mxu0 0.0
        %1846 = vmatprep.subr.mxu0 0.0
        %1847 = vmatpush1.msra.mxu0 0.0
        %1848 = vmatprep.subr.mxu0 0.0
        %1849 = vmatpush1.msra.mxu0 0.0
        %1850 = vmatprep.subr.mxu0 0.0
        %1851 = vmatpush1.msra.mxu0 0.0
        %1852 = vmatprep.subr.mxu0 0.0
        %1853 = vmatpush1.msra.mxu0 0.0
        %1854 = vmatprep.subr.mxu0 0.0
        %1855 = vmatpush1.msra.mxu0 0.0
        %1856 = vmatprep.subr.mxu0 0.0
        %1857 = vmatpush1.msra.mxu0 0.0
        %1858 = vmatprep.subr.mxu0 0.0
        %1859 = vmatpush1.msra.mxu0 0.0
        %1860 = vmatprep.subr.mxu0 0.0
        %1861 = vmatpush1.msra.mxu0 0.0
        %1862 = vmatprep.subr.mxu0 0.0
        %1863 = vmatpush1.msra.mxu0 0.0
        %1864 = vmatprep.subr.mxu0 0.0
        %1865 = vmatpush1.msra.mxu0 0.0
        %1866 = vmatprep.subr.mxu0 0.0
        %1867 = vmatpush1.msra.mxu0 0.0
        %1868 = vmatprep.subr.mxu0 0.0
        %1869 = vmatpush1.msra.mxu0 0.0
        %1870 = vmatprep.subr.mxu0 0.0
        %1871 = vmatpush1.msra.mxu0 0.0
        %1872 = vmatprep.subr.mxu0 0.0
        %1873 = vmatpush1.msra.mxu0 0.0
        %1874 = vmatprep.subr.mxu0 0.0
        %1875 = vmatpush1.msra.mxu0 0.0
        %1876 = vmatprep.subr.mxu0 0.0
        %1877 = vmatpush1.msra.mxu0 0.0
        %1878 = vmatprep.subr.mxu0 0.0
        %1879 = vmatpush1.msra.mxu0 0.0
        %1880 = vmatprep.subr.mxu0 0.0
        %1881 = vmatpush1.msra.mxu0 0.0
        %1882 = vmatprep.subr.mxu0 0.0
        %1883 = vmatpush1.msra.mxu0 0.0
        %1884 = vmatprep.subr.mxu0 0.0
        %1885 = vmatpush1.msra.mxu0 0.0
        %1886 = vmatprep.subr.mxu0 0.0
        %1887 = vmatpush1.msra.mxu0 0.0
        %1888 = vmatprep.subr.mxu0 0.0
        %1889 = vmatpush1.msra.mxu0 0.0
        %1890 = vmatprep.subr.mxu0 0.0
        %1891 = vmatpush1.msra.mxu0 0.0
        %1892 = vmatprep.subr.mxu0 0.0
        %1893 = vmatpush1.msra.mxu0 0.0
        %1894 = vmatprep.subr.mxu0 0.0
        %1895 = vmatpush1.msra.mxu0 0.0
        %1896 = vmatprep.subr.mxu0 0.0
        %1897 = vmatpush1.msra.mxu0 0.0
        %1898 = vmatprep.mubr.f32.mxu0 0.0
        %1899 = vmatmul.mubr.f32.gmra.mrb[0].mxu0 %v1826
        %v1900 = vpop.f32.mrb[0].mxu0
        %v1901 = vadd.f32 0.0, %v1900
        %v1902 = vpop.f32.mrb[0].mxu0
        %v1903 = vadd.f32 0.0, %v1902
        %1904 = vdwg.mxu0
        %v1905 = vadd.f32 %v1721, %v1901
        %v1906 = vadd.f32 %v1722, %v1903
        %s1907 = scalar_lea.vmem [#allocation16], 20
        %v1908 = vld [vmem:[%s1907] sm:$0xf]
        %v1910 = vsel %vm756, %v1908, 0
        %1912 = vmatprep.subr.mxu0 %v1832
        %1913 = vmatpush1.msra.mxu0 %v1829
        %1914 = vmatprep.subr.mxu0 0.0
        %1915 = vmatpush1.msra.mxu0 0.0
        %1916 = vmatprep.subr.mxu0 0.0
        %1917 = vmatpush1.msra.mxu0 0.0
        %1918 = vmatprep.subr.mxu0 0.0
        %1919 = vmatpush1.msra.mxu0 0.0
        %1920 = vmatprep.subr.mxu0 0.0
        %1921 = vmatpush1.msra.mxu0 0.0
        %1922 = vmatprep.subr.mxu0 0.0
        %1923 = vmatpush1.msra.mxu0 0.0
        %1924 = vmatprep.subr.mxu0 0.0
        %1925 = vmatpush1.msra.mxu0 0.0
        %1926 = vmatprep.subr.mxu0 0.0
        %1927 = vmatpush1.msra.mxu0 0.0
        %1928 = vmatprep.subr.mxu0 0.0
        %1929 = vmatpush1.msra.mxu0 0.0
        %1930 = vmatprep.subr.mxu0 0.0
        %1931 = vmatpush1.msra.mxu0 0.0
        %1932 = vmatprep.subr.mxu0 0.0
        %1933 = vmatpush1.msra.mxu0 0.0
        %1934 = vmatprep.subr.mxu0 0.0
        %1935 = vmatpush1.msra.mxu0 0.0
        %1936 = vmatprep.subr.mxu0 0.0
        %1937 = vmatpush1.msra.mxu0 0.0
        %1938 = vmatprep.subr.mxu0 0.0
        %1939 = vmatpush1.msra.mxu0 0.0
        %1940 = vmatprep.subr.mxu0 0.0
        %1941 = vmatpush1.msra.mxu0 0.0
        %1942 = vmatprep.subr.mxu0 0.0
        %1943 = vmatpush1.msra.mxu0 0.0
        %1944 = vmatprep.subr.mxu0 0.0
        %1945 = vmatpush1.msra.mxu0 0.0
        %1946 = vmatprep.subr.mxu0 0.0
        %1947 = vmatpush1.msra.mxu0 0.0
        %1948 = vmatprep.subr.mxu0 0.0
        %1949 = vmatpush1.msra.mxu0 0.0
        %1950 = vmatprep.subr.mxu0 0.0
        %1951 = vmatpush1.msra.mxu0 0.0
        %1952 = vmatprep.subr.mxu0 0.0
        %1953 = vmatpush1.msra.mxu0 0.0
        %1954 = vmatprep.subr.mxu0 0.0
        %1955 = vmatpush1.msra.mxu0 0.0
        %1956 = vmatprep.subr.mxu0 0.0
        %1957 = vmatpush1.msra.mxu0 0.0
        %1958 = vmatprep.subr.mxu0 0.0
        %1959 = vmatpush1.msra.mxu0 0.0
        %1960 = vmatprep.subr.mxu0 0.0
        %1961 = vmatpush1.msra.mxu0 0.0
        %1962 = vmatprep.subr.mxu0 0.0
        %1963 = vmatpush1.msra.mxu0 0.0
        %1964 = vmatprep.subr.mxu0 0.0
        %1965 = vmatpush1.msra.mxu0 0.0
        %1966 = vmatprep.subr.mxu0 0.0
        %1967 = vmatpush1.msra.mxu0 0.0
        %1968 = vmatprep.subr.mxu0 0.0
        %1969 = vmatpush1.msra.mxu0 0.0
        %1970 = vmatprep.subr.mxu0 0.0
        %1971 = vmatpush1.msra.mxu0 0.0
        %1972 = vmatprep.subr.mxu0 0.0
        %1973 = vmatpush1.msra.mxu0 0.0
        %1974 = vmatprep.subr.mxu0 0.0
        %1975 = vmatpush1.msra.mxu0 0.0
        %1976 = vmatprep.mubr.f32.mxu0 0.0
        %1977 = vmatmul.mubr.f32.gmra.mrb[0].mxu0 %v1910
        %v1978 = vpop.f32.mrb[0].mxu0
        %v1979 = vadd.f32 0.0, %v1978
        %v1980 = vpop.f32.mrb[0].mxu0
        %v1981 = vadd.f32 0.0, %v1980
        %1982 = vdwg.mxu0
        %v1983 = vadd.f32 %v1799, %v1979
        %v1984 = vadd.f32 %v1800, %v1981
        %1985 = vrot.lane.b32.xlu0 %v746, 113
        %v1986 = vpop.permute.xlu0 %1985
        %1987 = vrot.lane.b32.xlu0 %v755, 113
        %v1988 = vpop.permute.xlu0 %1987
        %vm1989 = vcmp.lt.s32.totalorder %v923, 113
        %v1990 = vsel %vm1989, %v1986, %v1988
        %v1991 = vsel %vm1989, %v1988, %v1986
        %s1992 = scalar_lea.vmem [#allocation5], 12
        %v1993 = vld [vmem:[%s1992] sm:$0x3]
        %v1995 = vlaneseq
        %v1996 = vshrl.u32 %v1995, 7
        %v1997 = vsub.s32 0, %v1996
        %v1998 = vrot.slane %v1993, %v1997
        %v1999 = vlaneseq
        %v2000 = vshrl.u32 %v1999, 7
        %v2001 = vsub.s32 1, %v2000
        %v2002 = vrot.slane %v1993, %v2001
        %v2005 = vmul.f32 %v1990, %v1998
        %v2006 = vmul.f32 %v1991, %v2002
        %s2007 = scalar_lea.vmem [#allocation13], 48
        %v2008 = vld [vmem:[%s2007] sm:$0xff]
        %v2010 = vsel %vm756, %v2008, 0
        %v2013 = vsel %vm760, %v2005, 0
        %v2016 = vsel %vm760, %v2006, 0
        %2018 = vmatprep.subr.mxu0 %v2016
        %2019 = vmatpush1.msra.mxu0 %v2013
        %2020 = vmatprep.subr.mxu0 0.0
        %2021 = vmatpush1.msra.mxu0 0.0
        %2022 = vmatprep.subr.mxu0 0.0
        %2023 = vmatpush1.msra.mxu0 0.0
        %2024 = vmatprep.subr.mxu0 0.0
        %2025 = vmatpush1.msra.mxu0 0.0
        %2026 = vmatprep.subr.mxu0 0.0
        %2027 = vmatpush1.msra.mxu0 0.0
        %2028 = vmatprep.subr.mxu0 0.0
        %2029 = vmatpush1.msra.mxu0 0.0
        %2030 = vmatprep.subr.mxu0 0.0
        %2031 = vmatpush1.msra.mxu0 0.0
        %2032 = vmatprep.subr.mxu0 0.0
        %2033 = vmatpush1.msra.mxu0 0.0
        %2034 = vmatprep.subr.mxu0 0.0
        %2035 = vmatpush1.msra.mxu0 0.0
        %2036 = vmatprep.subr.mxu0 0.0
        %2037 = vmatpush1.msra.mxu0 0.0
        %2038 = vmatprep.subr.mxu0 0.0
        %2039 = vmatpush1.msra.mxu0 0.0
        %2040 = vmatprep.subr.mxu0 0.0
        %2041 = vmatpush1.msra.mxu0 0.0
        %2042 = vmatprep.subr.mxu0 0.0
        %2043 = vmatpush1.msra.mxu0 0.0
        %2044 = vmatprep.subr.mxu0 0.0
        %2045 = vmatpush1.msra.mxu0 0.0
        %2046 = vmatprep.subr.mxu0 0.0
        %2047 = vmatpush1.msra.mxu0 0.0
        %2048 = vmatprep.subr.mxu0 0.0
        %2049 = vmatpush1.msra.mxu0 0.0
        %2050 = vmatprep.subr.mxu0 0.0
        %2051 = vmatpush1.msra.mxu0 0.0
        %2052 = vmatprep.subr.mxu0 0.0
        %2053 = vmatpush1.msra.mxu0 0.0
        %2054 = vmatprep.subr.mxu0 0.0
        %2055 = vmatpush1.msra.mxu0 0.0
        %2056 = vmatprep.subr.mxu0 0.0
        %2057 = vmatpush1.msra.mxu0 0.0
        %2058 = vmatprep.subr.mxu0 0.0
        %2059 = vmatpush1.msra.mxu0 0.0
        %2060 = vmatprep.subr.mxu0 0.0
        %2061 = vmatpush1.msra.mxu0 0.0
        %2062 = vmatprep.subr.mxu0 0.0
        %2063 = vmatpush1.msra.mxu0 0.0
        %2064 = vmatprep.subr.mxu0 0.0
        %2065 = vmatpush1.msra.mxu0 0.0
        %2066 = vmatprep.subr.mxu0 0.0
        %2067 = vmatpush1.msra.mxu0 0.0
        %2068 = vmatprep.subr.mxu0 0.0
        %2069 = vmatpush1.msra.mxu0 0.0
        %2070 = vmatprep.subr.mxu0 0.0
        %2071 = vmatpush1.msra.mxu0 0.0
        %2072 = vmatprep.subr.mxu0 0.0
        %2073 = vmatpush1.msra.mxu0 0.0
        %2074 = vmatprep.subr.mxu0 0.0
        %2075 = vmatpush1.msra.mxu0 0.0
        %2076 = vmatprep.subr.mxu0 0.0
        %2077 = vmatpush1.msra.mxu0 0.0
        %2078 = vmatprep.subr.mxu0 0.0
        %2079 = vmatpush1.msra.mxu0 0.0
        %2080 = vmatprep.subr.mxu0 0.0
        %2081 = vmatpush1.msra.mxu0 0.0
        %2082 = vmatprep.mubr.f32.mxu0 0.0
        %2083 = vmatmul.mubr.f32.gmra.mrb[0].mxu0 %v2010
        %v2084 = vpop.f32.mrb[0].mxu0
        %v2085 = vadd.f32 0.0, %v2084
        %v2086 = vpop.f32.mrb[0].mxu0
        %v2087 = vadd.f32 0.0, %v2086
        %2088 = vdwg.mxu0
        %v2089 = vadd.f32 %v1905, %v2085
        %v2090 = vadd.f32 %v1906, %v2087
        %s2091 = scalar_lea.vmem [#allocation16], 24
        %v2092 = vld [vmem:[%s2091] sm:$0xf]
        %v2094 = vsel %vm756, %v2092, 0
        %2096 = vmatprep.subr.mxu0 %v2016
        %2097 = vmatpush1.msra.mxu0 %v2013
        %2098 = vmatprep.subr.mxu0 0.0
        %2099 = vmatpush1.msra.mxu0 0.0
        %2100 = vmatprep.subr.mxu0 0.0
        %2101 = vmatpush1.msra.mxu0 0.0
        %2102 = vmatprep.subr.mxu0 0.0
        %2103 = vmatpush1.msra.mxu0 0.0
        %2104 = vmatprep.subr.mxu0 0.0
        %2105 = vmatpush1.msra.mxu0 0.0
        %2106 = vmatprep.subr.mxu0 0.0
        %2107 = vmatpush1.msra.mxu0 0.0
        %2108 = vmatprep.subr.mxu0 0.0
        %2109 = vmatpush1.msra.mxu0 0.0
        %2110 = vmatprep.subr.mxu0 0.0
        %2111 = vmatpush1.msra.mxu0 0.0
        %2112 = vmatprep.subr.mxu0 0.0
        %2113 = vmatpush1.msra.mxu0 0.0
        %2114 = vmatprep.subr.mxu0 0.0
        %2115 = vmatpush1.msra.mxu0 0.0
        %2116 = vmatprep.subr.mxu0 0.0
        %2117 = vmatpush1.msra.mxu0 0.0
        %2118 = vmatprep.subr.mxu0 0.0
        %2119 = vmatpush1.msra.mxu0 0.0
        %2120 = vmatprep.subr.mxu0 0.0
        %2121 = vmatpush1.msra.mxu0 0.0
        %2122 = vmatprep.subr.mxu0 0.0
        %2123 = vmatpush1.msra.mxu0 0.0
        %2124 = vmatprep.subr.mxu0 0.0
        %2125 = vmatpush1.msra.mxu0 0.0
        %2126 = vmatprep.subr.mxu0 0.0
        %2127 = vmatpush1.msra.mxu0 0.0
        %2128 = vmatprep.subr.mxu0 0.0
        %2129 = vmatpush1.msra.mxu0 0.0
        %2130 = vmatprep.subr.mxu0 0.0
        %2131 = vmatpush1.msra.mxu0 0.0
        %2132 = vmatprep.subr.mxu0 0.0
        %2133 = vmatpush1.msra.mxu0 0.0
        %2134 = vmatprep.subr.mxu0 0.0
        %2135 = vmatpush1.msra.mxu0 0.0
        %2136 = vmatprep.subr.mxu0 0.0
        %2137 = vmatpush1.msra.mxu0 0.0
        %2138 = vmatprep.subr.mxu0 0.0
        %2139 = vmatpush1.msra.mxu0 0.0
        %2140 = vmatprep.subr.mxu0 0.0
        %2141 = vmatpush1.msra.mxu0 0.0
        %2142 = vmatprep.subr.mxu0 0.0
        %2143 = vmatpush1.msra.mxu0 0.0
        %2144 = vmatprep.subr.mxu0 0.0
        %2145 = vmatpush1.msra.mxu0 0.0
        %2146 = vmatprep.subr.mxu0 0.0
        %2147 = vmatpush1.msra.mxu0 0.0
        %2148 = vmatprep.subr.mxu0 0.0
        %2149 = vmatpush1.msra.mxu0 0.0
        %2150 = vmatprep.subr.mxu0 0.0
        %2151 = vmatpush1.msra.mxu0 0.0
        %2152 = vmatprep.subr.mxu0 0.0
        %2153 = vmatpush1.msra.mxu0 0.0
        %2154 = vmatprep.subr.mxu0 0.0
        %2155 = vmatpush1.msra.mxu0 0.0
        %2156 = vmatprep.subr.mxu0 0.0
        %2157 = vmatpush1.msra.mxu0 0.0
        %2158 = vmatprep.subr.mxu0 0.0
        %2159 = vmatpush1.msra.mxu0 0.0
        %2160 = vmatprep.mubr.f32.mxu0 0.0
        %2161 = vmatmul.mubr.f32.gmra.mrb[0].mxu0 %v2094
        %v2162 = vpop.f32.mrb[0].mxu0
        %v2163 = vadd.f32 0.0, %v2162
        %v2164 = vpop.f32.mrb[0].mxu0
        %v2165 = vadd.f32 0.0, %v2164
        %2166 = vdwg.mxu0
        %v2167 = vadd.f32 %v1983, %v2163
        %v2168 = vadd.f32 %v1984, %v2165
        %2169 = vrot.lane.b32.xlu0 %v746, 112
        %v2170 = vpop.permute.xlu0 %2169
        %2171 = vrot.lane.b32.xlu0 %v755, 112
        %v2172 = vpop.permute.xlu0 %2171
        %vm2173 = vcmp.lt.s32.totalorder %v923, 112
        %v2174 = vsel %vm2173, %v2170, %v2172
        %v2175 = vsel %vm2173, %v2172, %v2170
        %s2176 = scalar_lea.vmem [#allocation5], 14
        %v2177 = vld [vmem:[%s2176] sm:$0x3]
        %v2179 = vlaneseq
        %v2180 = vshrl.u32 %v2179, 7
        %v2181 = vsub.s32 0, %v2180
        %v2182 = vrot.slane %v2177, %v2181
        %v2183 = vlaneseq
        %v2184 = vshrl.u32 %v2183, 7
        %v2185 = vsub.s32 1, %v2184
        %v2186 = vrot.slane %v2177, %v2185
        %v2189 = vmul.f32 %v2174, %v2182
        %v2190 = vmul.f32 %v2175, %v2186
        %s2191 = scalar_lea.vmem [#allocation13], 56
        %v2192 = vld [vmem:[%s2191] sm:$0xff]
        %v2194 = vsel %vm756, %v2192, 0
        %v2197 = vsel %vm760, %v2189, 0
        %v2200 = vsel %vm760, %v2190, 0
        %2202 = vmatprep.subr.mxu0 %v2200
        %2203 = vmatpush1.msra.mxu0 %v2197
        %2204 = vmatprep.subr.mxu0 0.0
        %2205 = vmatpush1.msra.mxu0 0.0
        %2206 = vmatprep.subr.mxu0 0.0
        %2207 = vmatpush1.msra.mxu0 0.0
        %2208 = vmatprep.subr.mxu0 0.0
        %2209 = vmatpush1.msra.mxu0 0.0
        %2210 = vmatprep.subr.mxu0 0.0
        %2211 = vmatpush1.msra.mxu0 0.0
        %2212 = vmatprep.subr.mxu0 0.0
        %2213 = vmatpush1.msra.mxu0 0.0
        %2214 = vmatprep.subr.mxu0 0.0
        %2215 = vmatpush1.msra.mxu0 0.0
        %2216 = vmatprep.subr.mxu0 0.0
        %2217 = vmatpush1.msra.mxu0 0.0
        %2218 = vmatprep.subr.mxu0 0.0
        %2219 = vmatpush1.msra.mxu0 0.0
        %2220 = vmatprep.subr.mxu0 0.0
        %2221 = vmatpush1.msra.mxu0 0.0
        %2222 = vmatprep.subr.mxu0 0.0
        %2223 = vmatpush1.msra.mxu0 0.0
        %2224 = vmatprep.subr.mxu0 0.0
        %2225 = vmatpush1.msra.mxu0 0.0
        %2226 = vmatprep.subr.mxu0 0.0
        %2227 = vmatpush1.msra.mxu0 0.0
        %2228 = vmatprep.subr.mxu0 0.0
        %2229 = vmatpush1.msra.mxu0 0.0
        %2230 = vmatprep.subr.mxu0 0.0
        %2231 = vmatpush1.msra.mxu0 0.0
        %2232 = vmatprep.subr.mxu0 0.0
        %2233 = vmatpush1.msra.mxu0 0.0
        %2234 = vmatprep.subr.mxu0 0.0
        %2235 = vmatpush1.msra.mxu0 0.0
        %2236 = vmatprep.subr.mxu0 0.0
        %2237 = vmatpush1.msra.mxu0 0.0
        %2238 = vmatprep.subr.mxu0 0.0
        %2239 = vmatpush1.msra.mxu0 0.0
        %2240 = vmatprep.subr.mxu0 0.0
        %2241 = vmatpush1.msra.mxu0 0.0
        %2242 = vmatprep.subr.mxu0 0.0
        %2243 = vmatpush1.msra.mxu0 0.0
        %2244 = vmatprep.subr.mxu0 0.0
        %2245 = vmatpush1.msra.mxu0 0.0
        %2246 = vmatprep.subr.mxu0 0.0
        %2247 = vmatpush1.msra.mxu0 0.0
        %2248 = vmatprep.subr.mxu0 0.0
        %2249 = vmatpush1.msra.mxu0 0.0
        %2250 = vmatprep.subr.mxu0 0.0
        %2251 = vmatpush1.msra.mxu0 0.0
        %2252 = vmatprep.subr.mxu0 0.0
        %2253 = vmatpush1.msra.mxu0 0.0
        %2254 = vmatprep.subr.mxu0 0.0
        %2255 = vmatpush1.msra.mxu0 0.0
        %2256 = vmatprep.subr.mxu0 0.0
        %2257 = vmatpush1.msra.mxu0 0.0
        %2258 = vmatprep.subr.mxu0 0.0
        %2259 = vmatpush1.msra.mxu0 0.0
        %2260 = vmatprep.subr.mxu0 0.0
        %2261 = vmatpush1.msra.mxu0 0.0
        %2262 = vmatprep.subr.mxu0 0.0
        %2263 = vmatpush1.msra.mxu0 0.0
        %2264 = vmatprep.subr.mxu0 0.0
        %2265 = vmatpush1.msra.mxu0 0.0
        %2266 = vmatprep.mubr.f32.mxu0 0.0
        %2267 = vmatmul.mubr.f32.gmra.mrb[0].mxu0 %v2194
        %v2268 = vpop.f32.mrb[0].mxu0
        %v2269 = vadd.f32 0.0, %v2268
        %v2270 = vpop.f32.mrb[0].mxu0
        %v2271 = vadd.f32 0.0, %v2270
        %2272 = vdwg.mxu0
        %v2273 = vadd.f32 %v2089, %v2269
        %v2274 = vadd.f32 %v2090, %v2271
        %s2275 = scalar_lea.vmem [#allocation16], 28
        %v2276 = vld [vmem:[%s2275] sm:$0xf]
        %v2278 = vsel %vm756, %v2276, 0
        %2280 = vmatprep.subr.mxu0 %v2200
        %2281 = vmatpush1.msra.mxu0 %v2197
        %2282 = vmatprep.subr.mxu0 0.0
        %2283 = vmatpush1.msra.mxu0 0.0
        %2284 = vmatprep.subr.mxu0 0.0
        %2285 = vmatpush1.msra.mxu0 0.0
        %2286 = vmatprep.subr.mxu0 0.0
        %2287 = vmatpush1.msra.mxu0 0.0
        %2288 = vmatprep.subr.mxu0 0.0
        %2289 = vmatpush1.msra.mxu0 0.0
        %2290 = vmatprep.subr.mxu0 0.0
        %2291 = vmatpush1.msra.mxu0 0.0
        %2292 = vmatprep.subr.mxu0 0.0
        %2293 = vmatpush1.msra.mxu0 0.0
        %2294 = vmatprep.subr.mxu0 0.0
        %2295 = vmatpush1.msra.mxu0 0.0
        %2296 = vmatprep.subr.mxu0 0.0
        %2297 = vmatpush1.msra.mxu0 0.0
        %2298 = vmatprep.subr.mxu0 0.0
        %2299 = vmatpush1.msra.mxu0 0.0
        %2300 = vmatprep.subr.mxu0 0.0
        %2301 = vmatpush1.msra.mxu0 0.0
        %2302 = vmatprep.subr.mxu0 0.0
        %2303 = vmatpush1.msra.mxu0 0.0
        %2304 = vmatprep.subr.mxu0 0.0
        %2305 = vmatpush1.msra.mxu0 0.0
        %2306 = vmatprep.subr.mxu0 0.0
        %2307 = vmatpush1.msra.mxu0 0.0
        %2308 = vmatprep.subr.mxu0 0.0
        %2309 = vmatpush1.msra.mxu0 0.0
        %2310 = vmatprep.subr.mxu0 0.0
        %2311 = vmatpush1.msra.mxu0 0.0
        %2312 = vmatprep.subr.mxu0 0.0
        %2313 = vmatpush1.msra.mxu0 0.0
        %2314 = vmatprep.subr.mxu0 0.0
        %2315 = vmatpush1.msra.mxu0 0.0
        %2316 = vmatprep.subr.mxu0 0.0
        %2317 = vmatpush1.msra.mxu0 0.0
        %2318 = vmatprep.subr.mxu0 0.0
        %2319 = vmatpush1.msra.mxu0 0.0
        %2320 = vmatprep.subr.mxu0 0.0
        %2321 = vmatpush1.msra.mxu0 0.0
        %2322 = vmatprep.subr.mxu0 0.0
        %2323 = vmatpush1.msra.mxu0 0.0
        %2324 = vmatprep.subr.mxu0 0.0
        %2325 = vmatpush1.msra.mxu0 0.0
        %2326 = vmatprep.subr.mxu0 0.0
        %2327 = vmatpush1.msra.mxu0 0.0
        %2328 = vmatprep.subr.mxu0 0.0
        %2329 = vmatpush1.msra.mxu0 0.0
        %2330 = vmatprep.subr.mxu0 0.0
        %2331 = vmatpush1.msra.mxu0 0.0
        %2332 = vmatprep.subr.mxu0 0.0
        %2333 = vmatpush1.msra.mxu0 0.0
        %2334 = vmatprep.subr.mxu0 0.0
        %2335 = vmatpush1.msra.mxu0 0.0
        %2336 = vmatprep.subr.mxu0 0.0
        %2337 = vmatpush1.msra.mxu0 0.0
        %2338 = vmatprep.subr.mxu0 0.0
        %2339 = vmatpush1.msra.mxu0 0.0
        %2340 = vmatprep.subr.mxu0 0.0
        %2341 = vmatpush1.msra.mxu0 0.0
        %2342 = vmatprep.subr.mxu0 0.0
        %2343 = vmatpush1.msra.mxu0 0.0
        %2344 = vmatprep.mubr.f32.mxu0 0.0
        %2345 = vmatmul.mubr.f32.gmra.mrb[0].mxu0 %v2278
        %v2346 = vpop.f32.mrb[0].mxu0
        %v2347 = vadd.f32 0.0, %v2346
        %v2348 = vpop.f32.mrb[0].mxu0
        %v2349 = vadd.f32 0.0, %v2348
        %2350 = vdwg.mxu0
        %v2351 = vadd.f32 %v2167, %v2347
        %v2352 = vadd.f32 %v2168, %v2349
        %2353 = vrot.lane.b32.xlu0 %v746, 111
        %v2354 = vpop.permute.xlu0 %2353
        %2355 = vrot.lane.b32.xlu0 %v755, 111
        %v2356 = vpop.permute.xlu0 %2355
        %vm2357 = vcmp.lt.s32.totalorder %v923, 111
        %v2358 = vsel %vm2357, %v2354, %v2356
        %v2359 = vsel %vm2357, %v2356, %v2354
        %s2360 = scalar_lea.vmem [#allocation5], 16
        %v2361 = vld [vmem:[%s2360] sm:$0x3]
        %v2363 = vlaneseq
        %v2364 = vshrl.u32 %v2363, 7
        %v2365 = vsub.s32 0, %v2364
        %v2366 = vrot.slane %v2361, %v2365
        %v2367 = vlaneseq
        %v2368 = vshrl.u32 %v2367, 7
        %v2369 = vsub.s32 1, %v2368
        %v2370 = vrot.slane %v2361, %v2369
        %v2373 = vmul.f32 %v2358, %v2366
        %v2374 = vmul.f32 %v2359, %v2370
        %s2375 = scalar_lea.vmem [#allocation13], 64
        %v2376 = vld [vmem:[%s2375] sm:$0xff]
        %v2378 = vsel %vm756, %v2376, 0
        %v2381 = vsel %vm760, %v2373, 0
        %v2384 = vsel %vm760, %v2374, 0
        %2386 = vmatprep.subr.mxu0 %v2384
        %2387 = vmatpush1.msra.mxu0 %v2381
        %2388 = vmatprep.subr.mxu0 0.0
        %2389 = vmatpush1.msra.mxu0 0.0
        %2390 = vmatprep.subr.mxu0 0.0
        %2391 = vmatpush1.msra.mxu0 0.0
        %2392 = vmatprep.subr.mxu0 0.0
        %2393 = vmatpush1.msra.mxu0 0.0
        %2394 = vmatprep.subr.mxu0 0.0
        %2395 = vmatpush1.msra.mxu0 0.0
        %2396 = vmatprep.subr.mxu0 0.0
        %2397 = vmatpush1.msra.mxu0 0.0
        %2398 = vmatprep.subr.mxu0 0.0
        %2399 = vmatpush1.msra.mxu0 0.0
        %2400 = vmatprep.subr.mxu0 0.0
        %2401 = vmatpush1.msra.mxu0 0.0
        %2402 = vmatprep.subr.mxu0 0.0
        %2403 = vmatpush1.msra.mxu0 0.0
        %2404 = vmatprep.subr.mxu0 0.0
        %2405 = vmatpush1.msra.mxu0 0.0
        %2406 = vmatprep.subr.mxu0 0.0
        %2407 = vmatpush1.msra.mxu0 0.0
        %2408 = vmatprep.subr.mxu0 0.0
        %2409 = vmatpush1.msra.mxu0 0.0
        %2410 = vmatprep.subr.mxu0 0.0
        %2411 = vmatpush1.msra.mxu0 0.0
        %2412 = vmatprep.subr.mxu0 0.0
        %2413 = vmatpush1.msra.mxu0 0.0
        %2414 = vmatprep.subr.mxu0 0.0
        %2415 = vmatpush1.msra.mxu0 0.0
        %2416 = vmatprep.subr.mxu0 0.0
        %2417 = vmatpush1.msra.mxu0 0.0
        %2418 = vmatprep.subr.mxu0 0.0
        %2419 = vmatpush1.msra.mxu0 0.0
        %2420 = vmatprep.subr.mxu0 0.0
        %2421 = vmatpush1.msra.mxu0 0.0
        %2422 = vmatprep.subr.mxu0 0.0
        %2423 = vmatpush1.msra.mxu0 0.0
        %2424 = vmatprep.subr.mxu0 0.0
        %2425 = vmatpush1.msra.mxu0 0.0
        %2426 = vmatprep.subr.mxu0 0.0
        %2427 = vmatpush1.msra.mxu0 0.0
        %2428 = vmatprep.subr.mxu0 0.0
        %2429 = vmatpush1.msra.mxu0 0.0
        %2430 = vmatprep.subr.mxu0 0.0
        %2431 = vmatpush1.msra.mxu0 0.0
        %2432 = vmatprep.subr.mxu0 0.0
        %2433 = vmatpush1.msra.mxu0 0.0
        %2434 = vmatprep.subr.mxu0 0.0
        %2435 = vmatpush1.msra.mxu0 0.0
        %2436 = vmatprep.subr.mxu0 0.0
        %2437 = vmatpush1.msra.mxu0 0.0
        %2438 = vmatprep.subr.mxu0 0.0
        %2439 = vmatpush1.msra.mxu0 0.0
        %2440 = vmatprep.subr.mxu0 0.0
        %2441 = vmatpush1.msra.mxu0 0.0
        %2442 = vmatprep.subr.mxu0 0.0
        %2443 = vmatpush1.msra.mxu0 0.0
        %2444 = vmatprep.subr.mxu0 0.0
        %2445 = vmatpush1.msra.mxu0 0.0
        %2446 = vmatprep.subr.mxu0 0.0
        %2447 = vmatpush1.msra.mxu0 0.0
        %2448 = vmatprep.subr.mxu0 0.0
        %2449 = vmatpush1.msra.mxu0 0.0
        %2450 = vmatprep.mubr.f32.mxu0 0.0
        %2451 = vmatmul.mubr.f32.gmra.mrb[0].mxu0 %v2378
        %v2452 = vpop.f32.mrb[0].mxu0
        %v2453 = vadd.f32 0.0, %v2452
        %v2454 = vpop.f32.mrb[0].mxu0
        %v2455 = vadd.f32 0.0, %v2454
        %2456 = vdwg.mxu0
        %v2457 = vadd.f32 %v2273, %v2453
        %v2458 = vadd.f32 %v2274, %v2455
        %s2459 = scalar_lea.vmem [#allocation16], 32
        %v2460 = vld [vmem:[%s2459] sm:$0xf]
        %v2462 = vsel %vm756, %v2460, 0
        %2464 = vmatprep.subr.mxu0 %v2384
        %2465 = vmatpush1.msra.mxu0 %v2381
        %2466 = vmatprep.subr.mxu0 0.0
        %2467 = vmatpush1.msra.mxu0 0.0
        %2468 = vmatprep.subr.mxu0 0.0
        %2469 = vmatpush1.msra.mxu0 0.0
        %2470 = vmatprep.subr.mxu0 0.0
        %2471 = vmatpush1.msra.mxu0 0.0
        %2472 = vmatprep.subr.mxu0 0.0
        %2473 = vmatpush1.msra.mxu0 0.0
        %2474 = vmatprep.subr.mxu0 0.0
        %2475 = vmatpush1.msra.mxu0 0.0
        %2476 = vmatprep.subr.mxu0 0.0
        %2477 = vmatpush1.msra.mxu0 0.0
        %2478 = vmatprep.subr.mxu0 0.0
        %2479 = vmatpush1.msra.mxu0 0.0
        %2480 = vmatprep.subr.mxu0 0.0
        %2481 = vmatpush1.msra.mxu0 0.0
        %2482 = vmatprep.subr.mxu0 0.0
        %2483 = vmatpush1.msra.mxu0 0.0
        %2484 = vmatprep.subr.mxu0 0.0
        %2485 = vmatpush1.msra.mxu0 0.0
        %2486 = vmatprep.subr.mxu0 0.0
        %2487 = vmatpush1.msra.mxu0 0.0
        %2488 = vmatprep.subr.mxu0 0.0
        %2489 = vmatpush1.msra.mxu0 0.0
        %2490 = vmatprep.subr.mxu0 0.0
        %2491 = vmatpush1.msra.mxu0 0.0
        %2492 = vmatprep.subr.mxu0 0.0
        %2493 = vmatpush1.msra.mxu0 0.0
        %2494 = vmatprep.subr.mxu0 0.0
        %2495 = vmatpush1.msra.mxu0 0.0
        %2496 = vmatprep.subr.mxu0 0.0
        %2497 = vmatpush1.msra.mxu0 0.0
        %2498 = vmatprep.subr.mxu0 0.0
        %2499 = vmatpush1.msra.mxu0 0.0
        %2500 = vmatprep.subr.mxu0 0.0
        %2501 = vmatpush1.msra.mxu0 0.0
        %2502 = vmatprep.subr.mxu0 0.0
        %2503 = vmatpush1.msra.mxu0 0.0
        %2504 = vmatprep.subr.mxu0 0.0
        %2505 = vmatpush1.msra.mxu0 0.0
        %2506 = vmatprep.subr.mxu0 0.0
        %2507 = vmatpush1.msra.mxu0 0.0
        %2508 = vmatprep.subr.mxu0 0.0
        %2509 = vmatpush1.msra.mxu0 0.0
        %2510 = vmatprep.subr.mxu0 0.0
        %2511 = vmatpush1.msra.mxu0 0.0
        %2512 = vmatprep.subr.mxu0 0.0
        %2513 = vmatpush1.msra.mxu0 0.0
        %2514 = vmatprep.subr.mxu0 0.0
        %2515 = vmatpush1.msra.mxu0 0.0
        %2516 = vmatprep.subr.mxu0 0.0
        %2517 = vmatpush1.msra.mxu0 0.0
        %2518 = vmatprep.subr.mxu0 0.0
        %2519 = vmatpush1.msra.mxu0 0.0
        %2520 = vmatprep.subr.mxu0 0.0
        %2521 = vmatpush1.msra.mxu0 0.0
        %2522 = vmatprep.subr.mxu0 0.0
        %2523 = vmatpush1.msra.mxu0 0.0
        %2524 = vmatprep.subr.mxu0 0.0
        %2525 = vmatpush1.msra.mxu0 0.0
        %2526 = vmatprep.subr.mxu0 0.0
        %2527 = vmatpush1.msra.mxu0 0.0
        %2528 = vmatprep.mubr.f32.mxu0 0.0
        %2529 = vmatmul.mubr.f32.gmra.mrb[0].mxu0 %v2462
        %v2530 = vpop.f32.mrb[0].mxu0
        %v2531 = vadd.f32 0.0, %v2530
        %v2532 = vpop.f32.mrb[0].mxu0
        %v2533 = vadd.f32 0.0, %v2532
        %2534 = vdwg.mxu0
        %v2535 = vadd.f32 %v2351, %v2531
        %v2536 = vadd.f32 %v2352, %v2533
        %v2537 = vld [vmem:[#allocation14] sm:$0xff]
        %2539 = vset.pattern.permute.xlu0 0
        %2540 = vperm.xlu0 %2539, %v2537
        %v2541 = vpop.permute.xlu0 %2540
        %v2543 = vadd.f32 %v2457, %v2541
        %v2544 = vadd.f32 %v2458, %v2541
        %v2545 = vld [vmem:[#allocation17] sm:$0xf]
        %2547 = vset.pattern.permute.xlu0 0
        %2548 = vperm.xlu0 %2547, %v2545
        %v2549 = vpop.permute.xlu0 %2548
        %v2551 = vadd.f32 %v2535, %v2549
        %v2552 = vadd.f32 %v2536, %v2549
        %v2555 = vcombine.low %v913, %v915
        %2557 = vst [vmem:[%s724] sm:$0xff] %v2555
        %v2560 = vcombine.low %v2551, %v2552
        %2562 = vst [vmem:[%s731] sm:$0xff] %v2560
        %v2563 = vsel %vm760, %v913, 0.0
        %v2564 = vsel %vm760, %v915, 0.0
        %v2565 = vadd.f32 %v2563, %v2564
        %2566 = vadd.xlane.f32.xlu0 %v2565
        %v2567 = vpop.xlane.xlu0 %2566
        %vm2568 = vcmask 3072
        %2569 = vst.msk [vmem:[%s738] sm:$0xf] %vm2568, %v2567
        %v2570 = vsel %vm760, %v2551, 0.0
        %v2571 = vsel %vm760, %v2552, 0.0
        %v2572 = vadd.f32 %v2570, %v2571
        %2573 = vadd.xlane.f32.xlu0 %v2572
        %v2574 = vpop.xlane.xlu0 %2573
        %2575 = vst.msk [vmem:[%s745] sm:$0xf] %vm2568, %v2574
        %v2578 = vrot.slane %v832, 2
        %v2579 = vrot.slane %v834, 2
        %v2582 = vrot.slane %v832, 4
        %v2583 = vrot.slane %v834, 4
        %2586 = vmatprep.subr.mxu0 %v2583
        %2587 = vmatpush1.xpose.msra.mxu0 %v2582
        %2588 = vmatprep.subr.mxu0 0.0
        %2589 = vmatpush1.xpose.msra.mxu0 0.0
        %2590 = vmatprep.subr.mxu0 0.0
        %2591 = vmatpush1.xpose.msra.mxu0 0.0
        %2592 = vmatprep.subr.mxu0 0.0
        %2593 = vmatpush1.xpose.msra.mxu0 0.0
        %2594 = vmatprep.subr.mxu0 0.0
        %2595 = vmatpush1.xpose.msra.mxu0 0.0
        %2596 = vmatprep.subr.mxu0 0.0
        %2597 = vmatpush1.xpose.msra.mxu0 0.0
        %2598 = vmatprep.subr.mxu0 0.0
        %2599 = vmatpush1.xpose.msra.mxu0 0.0
        %2600 = vmatprep.subr.mxu0 0.0
        %2601 = vmatpush1.xpose.msra.mxu0 0.0
        %2602 = vmatprep.subr.mxu0 0.0
        %2603 = vmatpush1.xpose.msra.mxu0 0.0
        %2604 = vmatprep.subr.mxu0 0.0
        %2605 = vmatpush1.xpose.msra.mxu0 0.0
        %2606 = vmatprep.subr.mxu0 0.0
        %2607 = vmatpush1.xpose.msra.mxu0 0.0
        %2608 = vmatprep.subr.mxu0 0.0
        %2609 = vmatpush1.xpose.msra.mxu0 0.0
        %2610 = vmatprep.subr.mxu0 0.0
        %2611 = vmatpush1.xpose.msra.mxu0 0.0
        %2612 = vmatprep.subr.mxu0 0.0
        %2613 = vmatpush1.xpose.msra.mxu0 0.0
        %2614 = vmatprep.subr.mxu0 0.0
        %2615 = vmatpush1.xpose.msra.mxu0 0.0
        %2616 = vmatprep.subr.mxu0 0.0
        %2617 = vmatpush1.xpose.msra.mxu0 0.0
        %2618 = vmatprep.subr.mxu0 0.0
        %2619 = vmatpush1.xpose.msra.mxu0 0.0
        %2620 = vmatprep.subr.mxu0 0.0
        %2621 = vmatpush1.xpose.msra.mxu0 0.0
        %2622 = vmatprep.subr.mxu0 0.0
        %2623 = vmatpush1.xpose.msra.mxu0 0.0
        %2624 = vmatprep.subr.mxu0 0.0
        %2625 = vmatpush1.xpose.msra.mxu0 0.0
        %2626 = vmatprep.subr.mxu0 0.0
        %2627 = vmatpush1.xpose.msra.mxu0 0.0
        %2628 = vmatprep.subr.mxu0 0.0
        %2629 = vmatpush1.xpose.msra.mxu0 0.0
        %2630 = vmatprep.subr.mxu0 0.0
        %2631 = vmatpush1.xpose.msra.mxu0 0.0
        %2632 = vmatprep.subr.mxu0 0.0
        %2633 = vmatpush1.xpose.msra.mxu0 0.0
        %2634 = vmatprep.subr.mxu0 0.0
        %2635 = vmatpush1.xpose.msra.mxu0 0.0
        %2636 = vmatprep.subr.mxu0 0.0
        %2637 = vmatpush1.xpose.msra.mxu0 0.0
        %2638 = vmatprep.subr.mxu0 0.0
        %2639 = vmatpush1.xpose.msra.mxu0 0.0
        %2640 = vmatprep.subr.mxu0 0.0
        %2641 = vmatpush1.xpose.msra.mxu0 0.0
        %2642 = vmatprep.subr.mxu0 0.0
        %2643 = vmatpush1.xpose.msra.mxu0 0.0
        %2644 = vmatprep.subr.mxu0 0.0
        %2645 = vmatpush1.xpose.msra.mxu0 0.0
        %2646 = vmatprep.subr.mxu0 0.0
        %2647 = vmatpush1.xpose.msra.mxu0 0.0
        %2648 = vmatprep.subr.mxu0 0.0
        %2649 = vmatpush1.xpose.msra.mxu0 0.0
        %2650 = vmatprep.mubr.f32.mxu0 %v2579
        %2651 = vmatmul.mubr.f32.gmra.mrb[0].mxu0 %v2578
        %v2652 = vpop.f32.mrb[0].mxu0
        %v2653 = vadd.f32 0.0, %v2652
        %v2654 = vpop.f32.mrb[0].mxu0
        %2655 = vdwg.mxu0
        %v2656 = vcombine.low %v832, %v834
        %v2658 = vunpack.c.l.s4 1983009808
        %v2659 = vunpack.c.0.s8 %v2658
        %v2660 = vlaneseq
        %v2661 = vshrl.u32 %v2660, 7
        %v2662 = vsub.s32 %v2659, %v2661
        %v2663 = vrot.slane %v2656, %v2662
        %2665 = vst [vmem:[%s696] sm:$0xf] %v2663
        %v2666 = vrot.slane %v832, 6
        %v2667 = vrot.slane %v834, 6
        %vm2668 = vcmask 15360
        %v2670 = vsel %vm2668, %v2653, 0
        %vm2672 = vcmask 1041408
        %v2673 = vsel %vm2672, %v2666, 0
        %v2675 = vsel %vm2672, %v2667, 0
        %2677 = vmatprep.subr.mxu0 %v2675
        %2678 = vmatpush1.msra.mxu0 %v2673
        %2679 = vmatprep.subr.mxu0 0.0
        %2680 = vmatpush1.msra.mxu0 0.0
        %2681 = vmatprep.subr.mxu0 0.0
        %2682 = vmatpush1.msra.mxu0 0.0
        %2683 = vmatprep.subr.mxu0 0.0
        %2684 = vmatpush1.msra.mxu0 0.0
        %2685 = vmatprep.subr.mxu0 0.0
        %2686 = vmatpush1.msra.mxu0 0.0
        %2687 = vmatprep.subr.mxu0 0.0
        %2688 = vmatpush1.msra.mxu0 0.0
        %2689 = vmatprep.subr.mxu0 0.0
        %2690 = vmatpush1.msra.mxu0 0.0
        %2691 = vmatprep.subr.mxu0 0.0
        %2692 = vmatpush1.msra.mxu0 0.0
        %2693 = vmatprep.subr.mxu0 0.0
        %2694 = vmatpush1.msra.mxu0 0.0
        %2695 = vmatprep.subr.mxu0 0.0
        %2696 = vmatpush1.msra.mxu0 0.0
        %2697 = vmatprep.subr.mxu0 0.0
        %2698 = vmatpush1.msra.mxu0 0.0
        %2699 = vmatprep.subr.mxu0 0.0
        %2700 = vmatpush1.msra.mxu0 0.0
        %2701 = vmatprep.subr.mxu0 0.0
        %2702 = vmatpush1.msra.mxu0 0.0
        %2703 = vmatprep.subr.mxu0 0.0
        %2704 = vmatpush1.msra.mxu0 0.0
        %2705 = vmatprep.subr.mxu0 0.0
        %2706 = vmatpush1.msra.mxu0 0.0
        %2707 = vmatprep.subr.mxu0 0.0
        %2708 = vmatpush1.msra.mxu0 0.0
        %2709 = vmatprep.subr.mxu0 0.0
        %2710 = vmatpush1.msra.mxu0 0.0
        %2711 = vmatprep.subr.mxu0 0.0
        %2712 = vmatpush1.msra.mxu0 0.0
        %2713 = vmatprep.subr.mxu0 0.0
        %2714 = vmatpush1.msra.mxu0 0.0
        %2715 = vmatprep.subr.mxu0 0.0
        %2716 = vmatpush1.msra.mxu0 0.0
        %2717 = vmatprep.subr.mxu0 0.0
        %2718 = vmatpush1.msra.mxu0 0.0
        %2719 = vmatprep.subr.mxu0 0.0
        %2720 = vmatpush1.msra.mxu0 0.0
        %2721 = vmatprep.subr.mxu0 0.0
        %2722 = vmatpush1.msra.mxu0 0.0
        %2723 = vmatprep.subr.mxu0 0.0
        %2724 = vmatpush1.msra.mxu0 0.0
        %2725 = vmatprep.subr.mxu0 0.0
        %2726 = vmatpush1.msra.mxu0 0.0
        %2727 = vmatprep.subr.mxu0 0.0
        %2728 = vmatpush1.msra.mxu0 0.0
        %2729 = vmatprep.subr.mxu0 0.0
        %2730 = vmatpush1.msra.mxu0 0.0
        %2731 = vmatprep.subr.mxu0 0.0
        %2732 = vmatpush1.msra.mxu0 0.0
        %2733 = vmatprep.subr.mxu0 0.0
        %2734 = vmatpush1.msra.mxu0 0.0
        %2735 = vmatprep.subr.mxu0 0.0
        %2736 = vmatpush1.msra.mxu0 0.0
        %2737 = vmatprep.subr.mxu0 0.0
        %2738 = vmatpush1.msra.mxu0 0.0
        %2739 = vmatprep.subr.mxu0 0.0
        %2740 = vmatpush1.msra.mxu0 0.0
        %2741 = vmatprep.mubr.f32.mxu0 0.0
        %2742 = vmatmul.mubr.f32.gmra.mrb[0].mxu0 %v2670
        %v2743 = vpop.f32.mrb[0].mxu0
        %v2744 = vadd.f32 0.0, %v2743
        %v2745 = vpop.f32.mrb[0].mxu0
        %v2746 = vadd.f32 0.0, %v2745
        %2747 = vdwg.mxu0
        %v2750 = vcombine.low %v2744, %v2746
        %v2752 = vunpack.c.l.s4 1983009808
        %v2753 = vunpack.c.0.s8 %v2752
        %v2754 = vlaneseq
        %v2755 = vshrl.u32 %v2754, 7
        %v2756 = vsub.s32 %v2753, %v2755
        %v2757 = vrot.slane %v2750, %v2756
        %2759 = vst [vmem:[%s703] sm:$0xf] %v2757
        %v2762 = vrot.slane %v2543, 2
        %v2763 = vrot.slane %v2544, 2
        %v2766 = vrot.slane %v2543, 4
        %v2767 = vrot.slane %v2544, 4
        %2770 = vmatprep.subr.mxu0 %v2767
        %2771 = vmatpush1.xpose.msra.mxu0 %v2766
        %2772 = vmatprep.subr.mxu0 0.0
        %2773 = vmatpush1.xpose.msra.mxu0 0.0
        %2774 = vmatprep.subr.mxu0 0.0
        %2775 = vmatpush1.xpose.msra.mxu0 0.0
        %2776 = vmatprep.subr.mxu0 0.0
        %2777 = vmatpush1.xpose.msra.mxu0 0.0
        %2778 = vmatprep.subr.mxu0 0.0
        %2779 = vmatpush1.xpose.msra.mxu0 0.0
        %2780 = vmatprep.subr.mxu0 0.0
        %2781 = vmatpush1.xpose.msra.mxu0 0.0
        %2782 = vmatprep.subr.mxu0 0.0
        %2783 = vmatpush1.xpose.msra.mxu0 0.0
        %2784 = vmatprep.subr.mxu0 0.0
        %2785 = vmatpush1.xpose.msra.mxu0 0.0
        %2786 = vmatprep.subr.mxu0 0.0
        %2787 = vmatpush1.xpose.msra.mxu0 0.0
        %2788 = vmatprep.subr.mxu0 0.0
        %2789 = vmatpush1.xpose.msra.mxu0 0.0
        %2790 = vmatprep.subr.mxu0 0.0
        %2791 = vmatpush1.xpose.msra.mxu0 0.0
        %2792 = vmatprep.subr.mxu0 0.0
        %2793 = vmatpush1.xpose.msra.mxu0 0.0
        %2794 = vmatprep.subr.mxu0 0.0
        %2795 = vmatpush1.xpose.msra.mxu0 0.0
        %2796 = vmatprep.subr.mxu0 0.0
        %2797 = vmatpush1.xpose.msra.mxu0 0.0
        %2798 = vmatprep.subr.mxu0 0.0
        %2799 = vmatpush1.xpose.msra.mxu0 0.0
        %2800 = vmatprep.subr.mxu0 0.0
        %2801 = vmatpush1.xpose.msra.mxu0 0.0
        %2802 = vmatprep.subr.mxu0 0.0
        %2803 = vmatpush1.xpose.msra.mxu0 0.0
        %2804 = vmatprep.subr.mxu0 0.0
        %2805 = vmatpush1.xpose.msra.mxu0 0.0
        %2806 = vmatprep.subr.mxu0 0.0
        %2807 = vmatpush1.xpose.msra.mxu0 0.0
        %2808 = vmatprep.subr.mxu0 0.0
        %2809 = vmatpush1.xpose.msra.mxu0 0.0
        %2810 = vmatprep.subr.mxu0 0.0
        %2811 = vmatpush1.xpose.msra.mxu0 0.0
        %2812 = vmatprep.subr.mxu0 0.0
        %2813 = vmatpush1.xpose.msra.mxu0 0.0
        %2814 = vmatprep.subr.mxu0 0.0
        %2815 = vmatpush1.xpose.msra.mxu0 0.0
        %2816 = vmatprep.subr.mxu0 0.0
        %2817 = vmatpush1.xpose.msra.mxu0 0.0
        %2818 = vmatprep.subr.mxu0 0.0
        %2819 = vmatpush1.xpose.msra.mxu0 0.0
        %2820 = vmatprep.subr.mxu0 0.0
        %2821 = vmatpush1.xpose.msra.mxu0 0.0
        %2822 = vmatprep.subr.mxu0 0.0
        %2823 = vmatpush1.xpose.msra.mxu0 0.0
        %2824 = vmatprep.subr.mxu0 0.0
        %2825 = vmatpush1.xpose.msra.mxu0 0.0
        %2826 = vmatprep.subr.mxu0 0.0
        %2827 = vmatpush1.xpose.msra.mxu0 0.0
        %2828 = vmatprep.subr.mxu0 0.0
        %2829 = vmatpush1.xpose.msra.mxu0 0.0
        %2830 = vmatprep.subr.mxu0 0.0
        %2831 = vmatpush1.xpose.msra.mxu0 0.0
        %2832 = vmatprep.subr.mxu0 0.0
        %2833 = vmatpush1.xpose.msra.mxu0 0.0
        %2834 = vmatprep.mubr.f32.mxu0 %v2763
        %2835 = vmatmul.mubr.f32.gmra.mrb[0].mxu0 %v2762
        %v2836 = vpop.f32.mrb[0].mxu0
        %v2837 = vadd.f32 0.0, %v2836
        %v2838 = vpop.f32.mrb[0].mxu0
        %2839 = vdwg.mxu0
        %v2840 = vcombine.low %v2543, %v2544
        %v2842 = vunpack.c.l.s4 1983009808
        %v2843 = vunpack.c.0.s8 %v2842
        %v2844 = vlaneseq
        %v2845 = vshrl.u32 %v2844, 7
        %v2846 = vsub.s32 %v2843, %v2845
        %v2847 = vrot.slane %v2840, %v2846
        %2849 = vst [vmem:[%s710] sm:$0xf] %v2847
        %v2850 = vrot.slane %v2543, 6
        %v2851 = vrot.slane %v2544, 6
        %v2853 = vsel %vm2668, %v2837, 0
        %v2855 = vsel %vm2672, %v2850, 0
        %v2857 = vsel %vm2672, %v2851, 0
        %2859 = vmatprep.subr.mxu0 %v2857
        %2860 = vmatpush1.msra.mxu0 %v2855
        %2861 = vmatprep.subr.mxu0 0.0
        %2862 = vmatpush1.msra.mxu0 0.0
        %2863 = vmatprep.subr.mxu0 0.0
        %2864 = vmatpush1.msra.mxu0 0.0
        %2865 = vmatprep.subr.mxu0 0.0
        %2866 = vmatpush1.msra.mxu0 0.0
        %2867 = vmatprep.subr.mxu0 0.0
        %2868 = vmatpush1.msra.mxu0 0.0
        %2869 = vmatprep.subr.mxu0 0.0
        %2870 = vmatpush1.msra.mxu0 0.0
        %2871 = vmatprep.subr.mxu0 0.0
        %2872 = vmatpush1.msra.mxu0 0.0
        %2873 = vmatprep.subr.mxu0 0.0
        %2874 = vmatpush1.msra.mxu0 0.0
        %2875 = vmatprep.subr.mxu0 0.0
        %2876 = vmatpush1.msra.mxu0 0.0
        %2877 = vmatprep.subr.mxu0 0.0
        %2878 = vmatpush1.msra.mxu0 0.0
        %2879 = vmatprep.subr.mxu0 0.0
        %2880 = vmatpush1.msra.mxu0 0.0
        %2881 = vmatprep.subr.mxu0 0.0
        %2882 = vmatpush1.msra.mxu0 0.0
        %2883 = vmatprep.subr.mxu0 0.0
        %2884 = vmatpush1.msra.mxu0 0.0
        %2885 = vmatprep.subr.mxu0 0.0
        %2886 = vmatpush1.msra.mxu0 0.0
        %2887 = vmatprep.subr.mxu0 0.0
        %2888 = vmatpush1.msra.mxu0 0.0
        %2889 = vmatprep.subr.mxu0 0.0
        %2890 = vmatpush1.msra.mxu0 0.0
        %2891 = vmatprep.subr.mxu0 0.0
        %2892 = vmatpush1.msra.mxu0 0.0
        %2893 = vmatprep.subr.mxu0 0.0
        %2894 = vmatpush1.msra.mxu0 0.0
        %2895 = vmatprep.subr.mxu0 0.0
        %2896 = vmatpush1.msra.mxu0 0.0
        %2897 = vmatprep.subr.mxu0 0.0
        %2898 = vmatpush1.msra.mxu0 0.0
        %2899 = vmatprep.subr.mxu0 0.0
        %2900 = vmatpush1.msra.mxu0 0.0
        %2901 = vmatprep.subr.mxu0 0.0
        %2902 = vmatpush1.msra.mxu0 0.0
        %2903 = vmatprep.subr.mxu0 0.0
        %2904 = vmatpush1.msra.mxu0 0.0
        %2905 = vmatprep.subr.mxu0 0.0
        %2906 = vmatpush1.msra.mxu0 0.0
        %2907 = vmatprep.subr.mxu0 0.0
        %2908 = vmatpush1.msra.mxu0 0.0
        %2909 = vmatprep.subr.mxu0 0.0
        %2910 = vmatpush1.msra.mxu0 0.0
        %2911 = vmatprep.subr.mxu0 0.0
        %2912 = vmatpush1.msra.mxu0 0.0
        %2913 = vmatprep.subr.mxu0 0.0
        %2914 = vmatpush1.msra.mxu0 0.0
        %2915 = vmatprep.subr.mxu0 0.0
        %2916 = vmatpush1.msra.mxu0 0.0
        %2917 = vmatprep.subr.mxu0 0.0
        %2918 = vmatpush1.msra.mxu0 0.0
        %2919 = vmatprep.subr.mxu0 0.0
        %2920 = vmatpush1.msra.mxu0 0.0
        %2921 = vmatprep.subr.mxu0 0.0
        %2922 = vmatpush1.msra.mxu0 0.0
        %2923 = vmatprep.mubr.f32.mxu0 0.0
        %2924 = vmatmul.mubr.f32.gmra.mrb[0].mxu0 %v2853
        %v2925 = vpop.f32.mrb[0].mxu0
        %v2926 = vadd.f32 0.0, %v2925
        %v2927 = vpop.f32.mrb[0].mxu0
        %v2928 = vadd.f32 0.0, %v2927
        %2929 = vdwg.mxu0
        %v2932 = vcombine.low %v2926, %v2928
        %v2934 = vunpack.c.l.s4 1983009808
        %v2935 = vunpack.c.0.s8 %v2934
        %v2936 = vlaneseq
        %v2937 = vshrl.u32 %v2936, 7
        %v2938 = vsub.s32 %v2935, %v2937
        %v2939 = vrot.slane %v2932, %v2938
        %2941 = vst [vmem:[%s717] sm:$0xf] %v2939
        %s2942 = sand.u32 %s275, 1
        %s2943 = scalar_lea.sflag [#allocation4], %s2942
        %s2944 = sand.u32 %s275, 1
        %s2945 = smul.addr %s2944, 4
        %s2946 = scalar_lea.vmem [#allocation19], %s2945
        %s2947 = sand.u32 %s52, 1
        %s2948 = scalar_lea.sflag [#allocation21], %s2947
        %s2949 = sand.u32 %s301, 1
        %s2950 = smul.addr %s2949, 4
        %s2951 = scalar_lea.vmem [#allocation20], %s2950
        %s2952 = sand.u32 %s52, 1
        %s2953 = scalar_lea.sflag [#allocation21], %s2952
        %s2954 = sand.u32 %s327, 1
        %s2955 = smul.addr %s2954, 4
        %s2956 = scalar_lea.vmem [#allocation22], %s2955
        %s2957 = sand.u32 %s52, 1
        %s2958 = scalar_lea.sflag [#allocation24], %s2957
        %s2959 = sand.u32 %s353, 1
        %s2960 = smul.addr %s2959, 4
        %s2961 = scalar_lea.vmem [#allocation23], %s2960
        %s2962 = sand.u32 %s52, 1
        %s2963 = scalar_lea.sflag [#allocation24], %s2962
        %s2964 = sand.u32 %s379, 1
        %s2965 = smul.addr %s2964, 8
        %s2966 = scalar_lea.vmem [#allocation25], %s2965
        %s2967 = sand.u32 %s52, 1
        %s2968 = scalar_lea.sflag [#allocation27], %s2967
        %s2969 = sand.u32 %s405, 1
        %s2970 = smul.addr %s2969, 8
        %s2971 = scalar_lea.vmem [#allocation26], %s2970
        %s2972 = sand.u32 %s52, 1
        %s2973 = scalar_lea.sflag [#allocation27], %s2972
        %s2974 = sand.u32 %s431, 1
        %s2975 = smul.addr %s2974, 4
        %s2976 = scalar_lea.vmem [#allocation28], %s2975
        %s2977 = sand.u32 %s457, 1
        %s2978 = scalar_lea.sflag [#allocation30], %s2977
        %s2979 = sand.u32 %s457, 1
        %s2980 = smul.addr %s2979, 4
        %s2981 = scalar_lea.vmem [#allocation29], %s2980
        // Predicated region
        $region101: #{tpu_custom_call.1} parent=59 // pred_check
          %p2982 = pneg %p285
        $region102: #{tpu_custom_call.1} parent=59 // pred_check_branch
          %2984 = sbr.rel (%p2982) target = $region104
        $region103: #{tpu_custom_call.1} parent=59 // pred_region
          %s2986 = ssub.s32 64, 64
          %2987 = vsyncadd %s2943, %s2986
          %s2988 = smul.addr %s52, 2
          %s2989 = smul.addr %s2988, 32
          %s2990 = scalar_lea.hbm %s10, %s2989
          %s2992 = sshll.u32 %s2946, 4
          %s2993 = int_to_ptr.vmem [resolvable:$true] %s2992
          %2995 = dma.vmem_to_hbm [thread:$0]  %s2993, 64, %s2990, %s2943
        $region104: #{tpu_custom_call.1} parent=59 // pred_fallthru
          _
        // Predicated region
        $region105: #{tpu_custom_call.1} parent=59 // pred_check
          %p2996 = pneg %p311
        $region106: #{tpu_custom_call.1} parent=59 // pred_check_branch
          %2998 = sbr.rel (%p2996) target = $region108
        $region107: #{tpu_custom_call.1} parent=59 // pred_region
          %s3000 = ssub.s32 64, 64
          %3001 = vsyncadd %s2948, %s3000
          %s3002 = smul.addr %s52, 2
          %s3003 = smul.addr %s3002, 32
          %s3004 = scalar_lea.hbm %s11, %s3003
          %s3006 = sshll.u32 %s2951, 4
          %s3007 = int_to_ptr.vmem [resolvable:$true] %s3006
          %3009 = dma.vmem_to_hbm [thread:$0]  %s3007, 64, %s3004, %s2948
        $region108: #{tpu_custom_call.1} parent=59 // pred_fallthru
          _
        // Predicated region
        $region109: #{tpu_custom_call.1} parent=59 // pred_check
          %p3010 = pneg %p337
        $region110: #{tpu_custom_call.1} parent=59 // pred_check_branch
          %3012 = sbr.rel (%p3010) target = $region112
        $region111: #{tpu_custom_call.1} parent=59 // pred_region
          %s3014 = ssub.s32 64, 64
          %3015 = vsyncadd %s2953, %s3014
          %s3016 = smul.addr %s52, 2
          %s3017 = smul.addr %s3016, 32
          %s3018 = scalar_lea.hbm %s12, %s3017
          %s3020 = sshll.u32 %s2956, 4
          %s3021 = int_to_ptr.vmem [resolvable:$true] %s3020
          %3023 = dma.vmem_to_hbm [thread:$0]  %s3021, 64, %s3018, %s2953
        $region112: #{tpu_custom_call.1} parent=59 // pred_fallthru
          _
        // Predicated region
        $region113: #{tpu_custom_call.1} parent=59 // pred_check
          %p3024 = pneg %p363
        $region114: #{tpu_custom_call.1} parent=59 // pred_check_branch
          %3026 = sbr.rel (%p3024) target = $region116
        $region115: #{tpu_custom_call.1} parent=59 // pred_region
          %s3028 = ssub.s32 64, 64
          %3029 = vsyncadd %s2958, %s3028
          %s3030 = smul.addr %s52, 2
          %s3031 = smul.addr %s3030, 32
          %s3032 = scalar_lea.hbm %s13, %s3031
          %s3034 = sshll.u32 %s2961, 4
          %s3035 = int_to_ptr.vmem [resolvable:$true] %s3034
          %3037 = dma.vmem_to_hbm [thread:$0]  %s3035, 64, %s3032, %s2958
        $region116: #{tpu_custom_call.1} parent=59 // pred_fallthru
          _
        // Predicated region
        $region117: #{tpu_custom_call.1} parent=59 // pred_check
          %p3038 = pneg %p389
        $region118: #{tpu_custom_call.1} parent=59 // pred_check_branch
          %3040 = sbr.rel (%p3038) target = $region120
        $region119: #{tpu_custom_call.1} parent=59 // pred_region
          %s3042 = ssub.s32 128, 128
          %3043 = vsyncadd %s2963, %s3042
          %s3044 = smul.addr %s52, 2
          %s3045 = smul.addr %s3044, 64
          %s3046 = scalar_lea.hbm %s14, %s3045
          %s3048 = sshll.u32 %s2966, 4
          %s3049 = int_to_ptr.vmem [resolvable:$true] %s3048
          %3051 = dma.vmem_to_hbm [thread:$0]  %s3049, 128, %s3046, %s2963
        $region120: #{tpu_custom_call.1} parent=59 // pred_fallthru
          _
        // Predicated region
        $region121: #{tpu_custom_call.1} parent=59 // pred_check
          %p3052 = pneg %p415
        $region122: #{tpu_custom_call.1} parent=59 // pred_check_branch
          %3054 = sbr.rel (%p3052) target = $region124
        $region123: #{tpu_custom_call.1} parent=59 // pred_region
          %s3056 = ssub.s32 128, 128
          %3057 = vsyncadd %s2968, %s3056
          %s3058 = smul.addr %s52, 2
          %s3059 = smul.addr %s3058, 64
          %s3060 = scalar_lea.hbm %s15, %s3059
          %s3062 = sshll.u32 %s2971, 4
          %s3063 = int_to_ptr.vmem [resolvable:$true] %s3062
          %3065 = dma.vmem_to_hbm [thread:$0]  %s3063, 128, %s3060, %s2968
        $region124: #{tpu_custom_call.1} parent=59 // pred_fallthru
          _
        // Predicated region
        $region125: #{tpu_custom_call.1} parent=59 // pred_check
          %p3066 = pneg %p441
        $region126: #{tpu_custom_call.1} parent=59 // pred_check_branch
          %3068 = sbr.rel (%p3066) target = $region128
        $region127: #{tpu_custom_call.1} parent=59 // pred_region
          %s3070 = ssub.s32 64, 64
          %3071 = vsyncadd %s2973, %s3070
          %s3072 = smul.addr %s52, 64
          %s3073 = scalar_lea.hbm %s16, %s3072
          %s3075 = sshll.u32 %s2976, 4
          %s3076 = int_to_ptr.vmem [resolvable:$true] %s3075
          %3078 = dma.vmem_to_hbm [thread:$0]  %s3076, 64, %s3073, %s2973
        $region128: #{tpu_custom_call.1} parent=59 // pred_fallthru
          _
        // Predicated region
        $region129: #{tpu_custom_call.1} parent=59 // pred_check
          %p3079 = pneg %p467
        $region130: #{tpu_custom_call.1} parent=59 // pred_check_branch
          %3081 = sbr.rel (%p3079) target = $region132
        $region131: #{tpu_custom_call.1} parent=59 // pred_region
          %s3083 = ssub.s32 64, 64
          %3084 = vsyncadd %s2978, %s3083
          %s3085 = smul.addr %s52, 64
          %s3086 = scalar_lea.hbm %s17, %s3085
          %s3088 = sshll.u32 %s2981, 4
          %s3089 = int_to_ptr.vmem [resolvable:$true] %s3088
          %3091 = dma.vmem_to_hbm [thread:$0]  %s3089, 64, %s3086, %s2978
        $region132: #{tpu_custom_call.1} parent=59 // pred_fallthru
          _
      $region60: #{tpu_custom_call.1} parent=5 // pred_fallthru
        _
      %p3092 = scmp.le.s32.totalorder 2, %s47
      // Predicated region
      $region133: #{tpu_custom_call.1} parent=5 // pred_check
        %p3093 = pneg %p3092
      $region134: #{tpu_custom_call.1} parent=5 // pred_check_branch
        %3095 = sbr.rel (%p3093) target = $region136
      $region135: #{tpu_custom_call.1} parent=5 // pred_region
        %s3096 = ssub.s32 %s47, 2
        // Predicated region
        $region137: #{tpu_custom_call.1} parent=135 // pred_check
          %p3097 = pneg %p291
        $region138: #{tpu_custom_call.1} parent=135 // pred_check_branch
          %3099 = sbr.rel (%p3097) target = $region140
        $region139: #{tpu_custom_call.1} parent=135 // pred_region
          %s3100 = sand.u32 %s276, 1
          %s3101 = scalar_lea.sflag [#allocation4], %s3100
          %s3102 = sand.u32 %s276, 1
          %s3103 = smul.addr %s3102, 4
          %s3104 = scalar_lea.vmem [#allocation19], %s3103
          %3105 = dma.done %s3101, 64
        $region140: #{tpu_custom_call.1} parent=135 // pred_fallthru
          _
        // Predicated region
        $region141: #{tpu_custom_call.1} parent=135 // pred_check
          %p3106 = pneg %p317
        $region142: #{tpu_custom_call.1} parent=135 // pred_check_branch
          %3108 = sbr.rel (%p3106) target = $region144
        $region143: #{tpu_custom_call.1} parent=135 // pred_region
          %s3109 = sand.u32 %s53, 1
          %s3110 = scalar_lea.sflag [#allocation21], %s3109
          %s3111 = sand.u32 %s302, 1
          %s3112 = smul.addr %s3111, 4
          %s3113 = scalar_lea.vmem [#allocation20], %s3112
          %3114 = dma.done %s3110, 64
        $region144: #{tpu_custom_call.1} parent=135 // pred_fallthru
          _
        // Predicated region
        $region145: #{tpu_custom_call.1} parent=135 // pred_check
          %p3115 = pneg %p343
        $region146: #{tpu_custom_call.1} parent=135 // pred_check_branch
          %3117 = sbr.rel (%p3115) target = $region148
        $region147: #{tpu_custom_call.1} parent=135 // pred_region
          %s3118 = sand.u32 %s53, 1
          %s3119 = scalar_lea.sflag [#allocation21], %s3118
          %s3120 = sand.u32 %s328, 1
          %s3121 = smul.addr %s3120, 4
          %s3122 = scalar_lea.vmem [#allocation22], %s3121
          %3123 = dma.done %s3119, 64
        $region148: #{tpu_custom_call.1} parent=135 // pred_fallthru
          _
        // Predicated region
        $region149: #{tpu_custom_call.1} parent=135 // pred_check
          %p3124 = pneg %p369
        $region150: #{tpu_custom_call.1} parent=135 // pred_check_branch
          %3126 = sbr.rel (%p3124) target = $region152
        $region151: #{tpu_custom_call.1} parent=135 // pred_region
          %s3127 = sand.u32 %s53, 1
          %s3128 = scalar_lea.sflag [#allocation24], %s3127
          %s3129 = sand.u32 %s354, 1
          %s3130 = smul.addr %s3129, 4
          %s3131 = scalar_lea.vmem [#allocation23], %s3130
          %3132 = dma.done %s3128, 64
        $region152: #{tpu_custom_call.1} parent=135 // pred_fallthru
          _
        // Predicated region
        $region153: #{tpu_custom_call.1} parent=135 // pred_check
          %p3133 = pneg %p395
        $region154: #{tpu_custom_call.1} parent=135 // pred_check_branch
          %3135 = sbr.rel (%p3133) target = $region156
        $region155: #{tpu_custom_call.1} parent=135 // pred_region
          %s3136 = sand.u32 %s53, 1
          %s3137 = scalar_lea.sflag [#allocation24], %s3136
          %s3138 = sand.u32 %s380, 1
          %s3139 = smul.addr %s3138, 8
          %s3140 = scalar_lea.vmem [#allocation25], %s3139
          %3141 = dma.done %s3137, 128
        $region156: #{tpu_custom_call.1} parent=135 // pred_fallthru
          _
        // Predicated region
        $region157: #{tpu_custom_call.1} parent=135 // pred_check
          %p3142 = pneg %p421
        $region158: #{tpu_custom_call.1} parent=135 // pred_check_branch
          %3144 = sbr.rel (%p3142) target = $region160
        $region159: #{tpu_custom_call.1} parent=135 // pred_region
          %s3145 = sand.u32 %s53, 1
          %s3146 = scalar_lea.sflag [#allocation27], %s3145
          %s3147 = sand.u32 %s406, 1
          %s3148 = smul.addr %s3147, 8
          %s3149 = scalar_lea.vmem [#allocation26], %s3148
          %3150 = dma.done %s3146, 128
        $region160: #{tpu_custom_call.1} parent=135 // pred_fallthru
          _
        // Predicated region
        $region161: #{tpu_custom_call.1} parent=135 // pred_check
          %p3151 = pneg %p447
        $region162: #{tpu_custom_call.1} parent=135 // pred_check_branch
          %3153 = sbr.rel (%p3151) target = $region164
        $region163: #{tpu_custom_call.1} parent=135 // pred_region
          %s3154 = sand.u32 %s53, 1
          %s3155 = scalar_lea.sflag [#allocation27], %s3154
          %s3156 = sand.u32 %s432, 1
          %s3157 = smul.addr %s3156, 4
          %s3158 = scalar_lea.vmem [#allocation28], %s3157
          %3159 = dma.done %s3155, 64
        $region164: #{tpu_custom_call.1} parent=135 // pred_fallthru
          _
        // Predicated region
        $region165: #{tpu_custom_call.1} parent=135 // pred_check
          %p3160 = pneg %p473
        $region166: #{tpu_custom_call.1} parent=135 // pred_check_branch
          %3162 = sbr.rel (%p3160) target = $region168
        $region167: #{tpu_custom_call.1} parent=135 // pred_region
          %s3163 = sand.u32 %s458, 1
          %s3164 = scalar_lea.sflag [#allocation30], %s3163
          %s3165 = sand.u32 %s458, 1
          %s3166 = smul.addr %s3165, 4
          %s3167 = scalar_lea.vmem [#allocation29], %s3166
          %3168 = dma.done %s3164, 64
        $region168: #{tpu_custom_call.1} parent=135 // pred_fallthru
          _
      $region136: #{tpu_custom_call.1} parent=5 // pred_fallthru
        _
    $region6: #{tpu_custom_call.1} parent=1 // loop_footer
      %s51 = sadd.s32 1, %s47
    $region7: #{tpu_custom_call.1} parent=1 // loop_footer_branch
      %46 = sbr.rel target = $region3
    $region8: #{tpu_custom_call.1} parent=1 // loop_exit
      _
    %3169 = vsyncpa [#allocation3], 1
    %s3170 = scalar_lea.sflag [#allocation3], 1
    %3171 = vsyncpa %s3170, 1
    %3172 = vsyncpa [#allocation6], 1
    %3173 = vsyncpa [#allocation9], 1
    %3174 = vsyncpa [#allocation12], 1
    %3175 = vsyncpa [#allocation15], 1
    %3176 = vsyncpa [#allocation18], 1
    %3177 = vsyncpa [#allocation4], 1
    %s3178 = scalar_lea.sflag [#allocation4], 1
    %3179 = vsyncpa %s3178, 1
    %3180 = vsyncpa [#allocation21], 1
    %s3181 = scalar_lea.sflag [#allocation21], 1
    %3182 = vsyncpa %s3181, 1
    %3183 = vsyncpa [#allocation24], 1
    %s3184 = scalar_lea.sflag [#allocation24], 1
    %3185 = vsyncpa %s3184, 1
    %3186 = vsyncpa [#allocation27], 1
    %s3187 = scalar_lea.sflag [#allocation27], 1
    %3188 = vsyncpa %s3187, 1
    %3189 = vsyncpa [#allocation30], 1
    %s3190 = scalar_lea.sflag [#allocation30], 1
    %3191 = vsyncpa %s3190, 1

</llo_original>
